<compile_context>
chip_gen: v7x
topology: tpu7x:2x2x1
jax: 0.10.0
libtpu: 0.0.40
codegen_flags: <defaults>
</compile_context>

<pallas_src>
import functools

import jax
import jax.numpy as jnp
import numpy as np
from jax.experimental import pallas as pl
from jax.experimental.pallas import tpu as pltpu

EPS = 1e-5  # torch.nn.LayerNorm default


def _layernorm(x, g, b):
    mu = jnp.mean(x, axis=-1, keepdims=True)
    var = jnp.mean((x - mu) ** 2, axis=-1, keepdims=True)
    return (x - mu) * jax.lax.rsqrt(var + EPS) * g + b


# ---------------------------------------------------------------------------
# Fused Pallas kernel: whole forward pass in one call.
# ---------------------------------------------------------------------------
def _fused_kernel(n_layer, n_head, seq_len,
                  x_ref, pos_ref,
                  g1_ref, b1_ref, wq_ref, wk_ref, wv_ref, wo_ref, bo_ref,
                  g2_ref, b2_ref, w1_ref, b1f_ref, w2_ref, b2f_ref,
                  gf_ref, bf_ref, whp_ref,
                  out_ref):
    T = seq_len

    # positional embedding add (pos already sliced to [T, C] on host)
    x = x_ref[...] + pos_ref[...]

    obj_att = None
    for li in range(n_layer):                      # static unrolled layer loop
        # --- pre-LN multi-head attention ---
        h = _layernorm(x, g1_ref[li], b1_ref[li])
        att_proj = None
        for hi in range(n_head):                   # static unrolled head loop
            # per-head weights pre-split on host -> no lane slicing in-kernel;
            # attention scale pre-folded into wq on host.
            qh = jnp.dot(h, wq_ref[li, hi], preferred_element_type=jnp.float32)
            kh = jnp.dot(h, wk_ref[li, hi], preferred_element_type=jnp.float32)
            vh = jnp.dot(h, wv_ref[li, hi], preferred_element_type=jnp.float32)
            # q @ k.T without an explicit transpose: contract dim 1 of both
            aff = jax.lax.dot_general(
                qh, kh, dimension_numbers=(((1,), (1,)), ((), ())),
                preferred_element_type=jnp.float32)                  # [T, T]
            if li == n_layer - 1:                  # only last layer's maps used
                row = aff[1:2, :]                  # obj_affinities = aff[1:2, :]
                obj_att = row if obj_att is None else obj_att + row
            # manual softmax (dropout is identity in eval)
            m = jnp.max(aff, axis=-1, keepdims=True)
            e = jnp.exp(aff - m)
            p = e * pl.reciprocal(jnp.sum(e, axis=-1, keepdims=True), approx=False)
            oh = jnp.dot(p, vh, preferred_element_type=jnp.float32)  # [T, hs]
            # concat(heads) @ Wo  ==  sum_h head_h @ Wo[h-th row block]
            contrib = jnp.dot(oh, wo_ref[li, hi],
                              preferred_element_type=jnp.float32)     # [T, C]
            att_proj = contrib if att_proj is None else att_proj + contrib
        x = x + att_proj + bo_ref[li]              # residual 1 (+ proj bias)

        # --- pre-LN feed-forward ---
        h2 = _layernorm(x, g2_ref[li], b2_ref[li])
        ff = jnp.dot(h2, w1_ref[li], preferred_element_type=jnp.float32) + b1f_ref[li]
        ff = jnp.maximum(ff, 0.0)
        ff = jnp.dot(ff, w2_ref[li], preferred_element_type=jnp.float32) + b2f_ref[li]
        x = x + ff                                 # residual 2

    # --- final LN + dsl head + obj-att sum, packed into one lane-dense slab ---
    xf = _layernorm(x, gf_ref[...], bf_ref[...])
    cls_row = jnp.dot(xf[0:1, :], whp_ref[...],
                      preferred_element_type=jnp.float32)             # [1, OUT_W]
    out_ref[...] = jnp.zeros_like(out_ref)
    out_ref[0:1, :] = cls_row                      # row 0: dsl logits (padded), unmasked vst
    out_ref[1:2, 0:T] = obj_att                    # row 1: summed obj affinities


# ---------------------------------------------------------------------------
# Host-side wrappers
# ---------------------------------------------------------------------------
def pack_params(params):
    """Stack per-layer weights, pre-split Q/K/V/proj per head, fold attn scale."""
    H, hs = params["n_head"], params["head_size"]
    blocks = params["blocks"]
    L = len(blocks)
    C = blocks[0]["wq"].shape[0]
    scale = hs ** (-0.5)

    def split_qkv(w):                      # [C, H*hs] -> [H, C, hs]
        return jnp.transpose(w.reshape(C, H, hs), (1, 0, 2))

    def stack(fn):
        return jnp.stack([fn(b) for b in blocks], axis=0)

    n_dsl = params["wh"].shape[1]
    T_max = params["pos_embd"].shape[0]
    out_w = max(128, -(-max(n_dsl, T_max) // 128) * 128)   # lane-dense output

    return dict(
        n_layer=L, n_head=H, head_size=hs, n_dsl=n_dsl, out_w=out_w,
        pos=params["pos_embd"],
        g1=stack(lambda b: b["g1"]), b1=stack(lambda b: b["b1"]),
        wq=stack(lambda b: split_qkv(b["wq"]) * scale),   # scale folded into Wq
        wk=stack(lambda b: split_qkv(b["wk"])),
        wv=stack(lambda b: split_qkv(b["wv"])),
        wo=stack(lambda b: b["wo"].reshape(H, hs, C)),
        bo=stack(lambda b: b["bo"]),
        g2=stack(lambda b: b["g2"]), b2=stack(lambda b: b["b2"]),
        w1=stack(lambda b: b["w1"]), b1f=stack(lambda b: b["b1f"]),
        w2=stack(lambda b: b["w2"]), b2f=stack(lambda b: b["b2f"]),
        gf=params["gf"], bf=params["bf"],
        whp=jnp.pad(params["wh"], ((0, 0), (0, out_w - n_dsl))),
    )


def pcfg_encoder_forward(x, packed):
    """x: [T, C] float32 -> (dsl_cls [n_dsl], obj_att [T]).  Single pallas_call."""
    T, _ = x.shape
    L, H = packed["n_layer"], packed["n_head"]
    n_dsl, out_w = packed["n_dsl"], packed["out_w"]

    args = (x, packed["pos"][:T],   # pos sliced on host, no in-kernel slice
            packed["g1"], packed["b1"], packed["wq"], packed["wk"], packed["wv"],
            packed["wo"], packed["bo"], packed["g2"], packed["b2"],
            packed["w1"], packed["b1f"], packed["w2"], packed["b2f"],
            packed["gf"], packed["bf"], packed["whp"])

    # TODO(synk): for a real model size, stream weights over a grid=(n_layer,)
    # axis with pl.Buffered(2) BlockSpecs instead of keeping all layers
    # resident in VMEM (v7x budget is 64 MiB); trivially resident here.
    kernel = functools.partial(_fused_kernel, L, H, T)
    vmem = pl.BlockSpec(memory_space=pltpu.MemorySpace.VMEM)
    out = pl.pallas_call(
        kernel,
        out_shape=jax.ShapeDtypeStruct((8, out_w), jnp.float32),
        in_specs=[vmem for _ in args],
        out_specs=vmem,
    )(*args)
    return out[0, :n_dsl], out[1, :T]


# ---------------------------------------------------------------------------
# Deterministic parameter init (mirrors _init_weights: Linear ~N(0, 0.02),
# biases zero, Embedding ~N(0, 0.02), LayerNorm gamma=1 beta=0).
# ---------------------------------------------------------------------------
def init_params(key, n_embd, n_head, n_layer, ff_hd, n_dsl, block_size):
    head_size = n_embd // n_head
    keys = jax.random.split(key, 2 + n_layer)

    def normal(k, shape):
        return (jax.random.normal(k, shape, jnp.float32) * 0.02).astype(jnp.float32)

    blocks = []
    for li in range(n_layer):
        ks = jax.random.split(keys[2 + li], 6)
        blocks.append(dict(
            g1=jnp.ones((1, n_embd), jnp.float32), b1=jnp.zeros((1, n_embd), jnp.float32),
            wq=normal(ks[0], (n_embd, n_embd)),   # heads concatenated along out dim
            wk=normal(ks[1], (n_embd, n_embd)),
            wv=normal(ks[2], (n_embd, n_embd)),
            wo=normal(ks[3], (n_embd, n_embd)),
            bo=jnp.zeros((1, n_embd), jnp.float32),
            g2=jnp.ones((1, n_embd), jnp.float32), b2=jnp.zeros((1, n_embd), jnp.float32),
            w1=normal(ks[4], (n_embd, ff_hd)), b1f=jnp.zeros((1, ff_hd), jnp.float32),
            w2=normal(ks[5], (ff_hd, n_embd)), b2f=jnp.zeros((1, n_embd), jnp.float32),
        ))
    return dict(
        n_head=n_head, head_size=head_size,
        pos_embd=normal(keys[0], (block_size, n_embd)),
        gf=jnp.ones((1, n_embd), jnp.float32), bf=jnp.zeros((1, n_embd), jnp.float32),
        wh=normal(keys[1], (n_embd, n_dsl)),   # dsl_class_head (no bias), right-multiply form
        blocks=blocks,
    )
    # TODO(synk): special_tokens / embedding_model loading are not part of forward(); omitted.


# ---------------------------------------------------------------------------
# Plain-JAX reference (same math, HIGHEST precision) for a sanity check.
# ---------------------------------------------------------------------------
def reference_forward(x, params):
    mm = functools.partial(jnp.matmul, precision=jax.lax.Precision.HIGHEST)

    def ln(v, g, b):
        mu = v.mean(-1, keepdims=True)
        var = ((v - mu) ** 2).mean(-1, keepdims=True)
        return (v - mu) / jnp.sqrt(var + EPS) * g + b

    T = x.shape[0]
    H, hs = params["n_head"], params["head_size"]
    x = x + params["pos_embd"][:T]
    obj = None
    for p in params["blocks"]:
        h = ln(x, p["g1"], p["b1"])
        q, k, v = mm(h, p["wq"]), mm(h, p["wk"]), mm(h, p["wv"])
        outs, objs = [], []
        for hi in range(H):
            sl = slice(hi * hs, (hi + 1) * hs)
            aff = mm(q[:, sl], k[:, sl].T) * hs ** (-0.5)
            objs.append(aff[1:2, :])
            outs.append(mm(jax.nn.softmax(aff, axis=-1), v[:, sl]))
        obj = jnp.concatenate(objs, 0)
        x = x + mm(jnp.concatenate(outs, -1), p["wo"]) + p["bo"]
        h2 = ln(x, p["g2"], p["b2"])
        ff = mm(jnp.maximum(mm(h2, p["w1"]) + p["b1f"], 0.0), p["w2"]) + p["b2f"]
        x = x + ff
    xf = ln(x, params["gf"], params["bf"])
    return mm(xf[0:1, :], params["wh"])[0], obj.sum(0)


if __name__ == "__main__":
    # Small shapes consistent with the module: T=8 tokens, n_embd=32,
    # n_head=4 (head_size=8), n_layer=2, ff_hd=64, |dsl_mapping|=10, block_size=16.
    T, n_embd, n_head, n_layer, ff_hd, n_dsl, block_size = 8, 32, 4, 2, 64, 10, 16

    key = jax.random.PRNGKey(0)
    kx, kp = jax.random.split(key)
    x = jax.random.normal(kx, (T, n_embd), jnp.float32)
    params = init_params(kp, n_embd, n_head, n_layer, ff_hd, n_dsl, block_size)
    packed = pack_params(params)            # one-time host-side repacking

    dsl_cls, obj_att = pcfg_encoder_forward(x, packed)
    jax.block_until_ready((dsl_cls, obj_att))

    ref_cls, ref_att = reference_forward(x, params)
    assert dsl_cls.shape == (n_dsl,) and obj_att.shape == (T,)
    assert np.allclose(np.asarray(dsl_cls), np.asarray(ref_cls), atol=1e-3, rtol=1e-3)
    assert np.allclose(np.asarray(obj_att), np.asarray(ref_att), atol=1e-3, rtol=1e-3)

    print("KERNEL_OK")
</pallas_src>

<mosaic_0001>
module attributes {stable_mosaic.version = 11 : i64} {
  func.func @_fused_kernel(%arg0: memref<8x32xf32, #tpu.memory_space<vmem>>, %arg1: memref<8x32xf32, #tpu.memory_space<vmem>>, %arg2: memref<2x1x32xf32, #tpu.memory_space<vmem>>, %arg3: memref<2x1x32xf32, #tpu.memory_space<vmem>>, %arg4: memref<2x4x32x8xf32, #tpu.memory_space<vmem>>, %arg5: memref<2x4x32x8xf32, #tpu.memory_space<vmem>>, %arg6: memref<2x4x32x8xf32, #tpu.memory_space<vmem>>, %arg7: memref<2x4x8x32xf32, #tpu.memory_space<vmem>>, %arg8: memref<2x1x32xf32, #tpu.memory_space<vmem>>, %arg9: memref<2x1x32xf32, #tpu.memory_space<vmem>>, %arg10: memref<2x1x32xf32, #tpu.memory_space<vmem>>, %arg11: memref<2x32x64xf32, #tpu.memory_space<vmem>>, %arg12: memref<2x1x64xf32, #tpu.memory_space<vmem>>, %arg13: memref<2x64x32xf32, #tpu.memory_space<vmem>>, %arg14: memref<2x1x32xf32, #tpu.memory_space<vmem>>, %arg15: memref<1x32xf32, #tpu.memory_space<vmem>>, %arg16: memref<1x32xf32, #tpu.memory_space<vmem>>, %arg17: memref<32x128xf32, #tpu.memory_space<vmem>>, %arg18: memref<8x128xf32, #tpu.memory_space<vmem>>) attributes {dimension_semantics = [], scalar_prefetch = 0 : i64, scratch_operands = 0 : i64, tpu.core_type = #tpu.core_type<tc>} {
    %c0 = arith.constant 0 : index
    %c0_0 = arith.constant 0 : index
    %0 = vector.load %arg0[%c0, %c0_0] : memref<8x32xf32, #tpu.memory_space<vmem>>, vector<8x32xf32>
    %c0_1 = arith.constant 0 : index
    %c0_2 = arith.constant 0 : index
    %1 = vector.load %arg1[%c0_1, %c0_2] : memref<8x32xf32, #tpu.memory_space<vmem>>, vector<8x32xf32>
    %2 = arith.addf %0, %1 : vector<8x32xf32>
    %c0_3 = arith.constant 0 : index
    %c0_4 = arith.constant 0 : index
    %c0_5 = arith.constant 0 : index
    %3 = vector.load %arg2[%c0_3, %c0_4, %c0_5] : memref<2x1x32xf32, #tpu.memory_space<vmem>>, vector<1x1x32xf32>
    %4 = vector.shape_cast %3 : vector<1x1x32xf32> to vector<1x32xf32>
    %c0_6 = arith.constant 0 : index
    %c0_7 = arith.constant 0 : index
    %c0_8 = arith.constant 0 : index
    %5 = vector.load %arg3[%c0_6, %c0_7, %c0_8] : memref<2x1x32xf32, #tpu.memory_space<vmem>>, vector<1x1x32xf32>
    %6 = vector.shape_cast %5 : vector<1x1x32xf32> to vector<1x32xf32>
    %cst = arith.constant dense<0.000000e+00> : vector<8xf32>
    %7 = vector.multi_reduction <add>, %2, %cst [1] : vector<8x32xf32> to vector<8xf32>
    %8 = vector.shape_cast %7 : vector<8xf32> to vector<8x1xf32>
    %cst_9 = arith.constant 3.200000e+01 : f32
    %9 = vector.broadcast %cst_9 : f32 to vector<8x1xf32>
    %10 = arith.divf %8, %9 : vector<8x1xf32>
    %11 = vector.broadcast %10 : vector<8x1xf32> to vector<8x32xf32>
    %12 = arith.subf %2, %11 : vector<8x32xf32>
    %13 = arith.mulf %12, %12 : vector<8x32xf32>
    %cst_10 = arith.constant dense<0.000000e+00> : vector<8xf32>
    %14 = vector.multi_reduction <add>, %13, %cst_10 [1] : vector<8x32xf32> to vector<8xf32>
    %15 = vector.shape_cast %14 : vector<8xf32> to vector<8x1xf32>
    %cst_11 = arith.constant 3.200000e+01 : f32
    %16 = vector.broadcast %cst_11 : f32 to vector<8x1xf32>
    %17 = arith.divf %15, %16 : vector<8x1xf32>
    %18 = vector.broadcast %10 : vector<8x1xf32> to vector<8x32xf32>
    %19 = arith.subf %2, %18 : vector<8x32xf32>
    %cst_12 = arith.constant 9.99999974E-6 : f32
    %20 = vector.broadcast %cst_12 : f32 to vector<8x1xf32>
    %21 = arith.addf %17, %20 : vector<8x1xf32>
    %22 = math.rsqrt %21 : vector<8x1xf32>
    %23 = vector.broadcast %22 : vector<8x1xf32> to vector<8x32xf32>
    %24 = arith.mulf %19, %23 : vector<8x32xf32>
    %25 = vector.broadcast %4 : vector<1x32xf32> to vector<8x32xf32>
    %26 = arith.mulf %24, %25 : vector<8x32xf32>
    %27 = vector.broadcast %6 : vector<1x32xf32> to vector<8x32xf32>
    %28 = arith.addf %26, %27 : vector<8x32xf32>
    %c0_13 = arith.constant 0 : index
    %c0_14 = arith.constant 0 : index
    %c0_15 = arith.constant 0 : index
    %c0_16 = arith.constant 0 : index
    %29 = vector.load %arg4[%c0_13, %c0_14, %c0_15, %c0_16] : memref<2x4x32x8xf32, #tpu.memory_space<vmem>>, vector<1x1x32x8xf32>
    %30 = vector.shape_cast %29 : vector<1x1x32x8xf32> to vector<32x8xf32>
    %cst_17 = arith.constant dense<0.000000e+00> : vector<8x8xf32>
    %31 = tpu.matmul %28, %30, %cst_17 {dimension_numbers = #tpu.dot_dimension_numbers<[1], [0], [0], [1], [0, 0, 1, 1], [], []>} : vector<8x32xf32>, vector<32x8xf32>, vector<8x8xf32> -> vector<8x8xf32>
    %c0_18 = arith.constant 0 : index
    %c0_19 = arith.constant 0 : index
    %c0_20 = arith.constant 0 : index
    %c0_21 = arith.constant 0 : index
    %32 = vector.load %arg5[%c0_18, %c0_19, %c0_20, %c0_21] : memref<2x4x32x8xf32, #tpu.memory_space<vmem>>, vector<1x1x32x8xf32>
    %33 = vector.shape_cast %32 : vector<1x1x32x8xf32> to vector<32x8xf32>
    %cst_22 = arith.constant dense<0.000000e+00> : vector<8x8xf32>
    %34 = tpu.matmul %28, %33, %cst_22 {dimension_numbers = #tpu.dot_dimension_numbers<[1], [0], [0], [1], [0, 0, 1, 1], [], []>} : vector<8x32xf32>, vector<32x8xf32>, vector<8x8xf32> -> vector<8x8xf32>
    %c0_23 = arith.constant 0 : index
    %c0_24 = arith.constant 0 : index
    %c0_25 = arith.constant 0 : index
    %c0_26 = arith.constant 0 : index
    %35 = vector.load %arg6[%c0_23, %c0_24, %c0_25, %c0_26] : memref<2x4x32x8xf32, #tpu.memory_space<vmem>>, vector<1x1x32x8xf32>
    %36 = vector.shape_cast %35 : vector<1x1x32x8xf32> to vector<32x8xf32>
    %cst_27 = arith.constant dense<0.000000e+00> : vector<8x8xf32>
    %37 = tpu.matmul %28, %36, %cst_27 {dimension_numbers = #tpu.dot_dimension_numbers<[1], [0], [0], [1], [0, 0, 1, 1], [], []>} : vector<8x32xf32>, vector<32x8xf32>, vector<8x8xf32> -> vector<8x8xf32>
    %cst_28 = arith.constant dense<0.000000e+00> : vector<8x8xf32>
    %38 = tpu.matmul %31, %34, %cst_28 {dimension_numbers = #tpu.dot_dimension_numbers<[1], [1], [0], [0], [0, 0, 1, 0], [], []>} : vector<8x8xf32>, vector<8x8xf32>, vector<8x8xf32> -> vector<8x8xf32>
    %cst_29 = arith.constant dense<0xFF800000> : vector<8xf32>
    %39 = vector.multi_reduction <maximumf>, %38, %cst_29 [1] : vector<8x8xf32> to vector<8xf32>
    %40 = vector.shape_cast %39 : vector<8xf32> to vector<8x1xf32>
    %41 = vector.broadcast %40 : vector<8x1xf32> to vector<8x8xf32>
    %42 = arith.subf %38, %41 : vector<8x8xf32>
    %43 = math.exp %42 : vector<8x8xf32>
    %cst_30 = arith.constant dense<0.000000e+00> : vector<8xf32>
    %44 = vector.multi_reduction <add>, %43, %cst_30 [1] : vector<8x8xf32> to vector<8xf32>
    %45 = vector.shape_cast %44 : vector<8xf32> to vector<8x1xf32>
    %46 = tpu.reciprocal %45 : vector<8x1xf32> -> vector<8x1xf32>
    %47 = vector.broadcast %46 : vector<8x1xf32> to vector<8x8xf32>
    %48 = arith.mulf %43, %47 : vector<8x8xf32>
    %cst_31 = arith.constant dense<0.000000e+00> : vector<8x8xf32>
    %49 = tpu.matmul %48, %37, %cst_31 {dimension_numbers = #tpu.dot_dimension_numbers<[1], [0], [0], [1], [0, 0, 1, 1], [], []>} : vector<8x8xf32>, vector<8x8xf32>, vector<8x8xf32> -> vector<8x8xf32>
    %c0_32 = arith.constant 0 : index
    %c0_33 = arith.constant 0 : index
    %c0_34 = arith.constant 0 : index
    %c0_35 = arith.constant 0 : index
    %50 = vector.load %arg7[%c0_32, %c0_33, %c0_34, %c0_35] : memref<2x4x8x32xf32, #tpu.memory_space<vmem>>, vector<1x1x8x32xf32>
    %51 = vector.shape_cast %50 : vector<1x1x8x32xf32> to vector<8x32xf32>
    %cst_36 = arith.constant dense<0.000000e+00> : vector<8x32xf32>
    %52 = tpu.matmul %49, %51, %cst_36 {dimension_numbers = #tpu.dot_dimension_numbers<[1], [0], [0], [1], [0, 0, 1, 1], [], []>} : vector<8x8xf32>, vector<8x32xf32>, vector<8x32xf32> -> vector<8x32xf32>
    %c0_37 = arith.constant 0 : index
    %c1 = arith.constant 1 : index
    %c0_38 = arith.constant 0 : index
    %c0_39 = arith.constant 0 : index
    %53 = vector.load %arg4[%c0_37, %c1, %c0_38, %c0_39] : memref<2x4x32x8xf32, #tpu.memory_space<vmem>>, vector<1x1x32x8xf32>
    %54 = vector.shape_cast %53 : vector<1x1x32x8xf32> to vector<32x8xf32>
    %cst_40 = arith.constant dense<0.000000e+00> : vector<8x8xf32>
    %55 = tpu.matmul %28, %54, %cst_40 {dimension_numbers = #tpu.dot_dimension_numbers<[1], [0], [0], [1], [0, 0, 1, 1], [], []>} : vector<8x32xf32>, vector<32x8xf32>, vector<8x8xf32> -> vector<8x8xf32>
    %c0_41 = arith.constant 0 : index
    %c1_42 = arith.constant 1 : index
    %c0_43 = arith.constant 0 : index
    %c0_44 = arith.constant 0 : index
    %56 = vector.load %arg5[%c0_41, %c1_42, %c0_43, %c0_44] : memref<2x4x32x8xf32, #tpu.memory_space<vmem>>, vector<1x1x32x8xf32>
    %57 = vector.shape_cast %56 : vector<1x1x32x8xf32> to vector<32x8xf32>
    %cst_45 = arith.constant dense<0.000000e+00> : vector<8x8xf32>
    %58 = tpu.matmul %28, %57, %cst_45 {dimension_numbers = #tpu.dot_dimension_numbers<[1], [0], [0], [1], [0, 0, 1, 1], [], []>} : vector<8x32xf32>, vector<32x8xf32>, vector<8x8xf32> -> vector<8x8xf32>
    %c0_46 = arith.constant 0 : index
    %c1_47 = arith.constant 1 : index
    %c0_48 = arith.constant 0 : index
    %c0_49 = arith.constant 0 : index
    %59 = vector.load %arg6[%c0_46, %c1_47, %c0_48, %c0_49] : memref<2x4x32x8xf32, #tpu.memory_space<vmem>>, vector<1x1x32x8xf32>
    %60 = vector.shape_cast %59 : vector<1x1x32x8xf32> to vector<32x8xf32>
    %cst_50 = arith.constant dense<0.000000e+00> : vector<8x8xf32>
    %61 = tpu.matmul %28, %60, %cst_50 {dimension_numbers = #tpu.dot_dimension_numbers<[1], [0], [0], [1], [0, 0, 1, 1], [], []>} : vector<8x32xf32>, vector<32x8xf32>, vector<8x8xf32> -> vector<8x8xf32>
    %cst_51 = arith.constant dense<0.000000e+00> : vector<8x8xf32>
    %62 = tpu.matmul %55, %58, %cst_51 {dimension_numbers = #tpu.dot_dimension_numbers<[1], [1], [0], [0], [0, 0, 1, 0], [], []>} : vector<8x8xf32>, vector<8x8xf32>, vector<8x8xf32> -> vector<8x8xf32>
    %cst_52 = arith.constant dense<0xFF800000> : vector<8xf32>
    %63 = vector.multi_reduction <maximumf>, %62, %cst_52 [1] : vector<8x8xf32> to vector<8xf32>
    %64 = vector.shape_cast %63 : vector<8xf32> to vector<8x1xf32>
    %65 = vector.broadcast %64 : vector<8x1xf32> to vector<8x8xf32>
    %66 = arith.subf %62, %65 : vector<8x8xf32>
    %67 = math.exp %66 : vector<8x8xf32>
    %cst_53 = arith.constant dense<0.000000e+00> : vector<8xf32>
    %68 = vector.multi_reduction <add>, %67, %cst_53 [1] : vector<8x8xf32> to vector<8xf32>
    %69 = vector.shape_cast %68 : vector<8xf32> to vector<8x1xf32>
    %70 = tpu.reciprocal %69 : vector<8x1xf32> -> vector<8x1xf32>
    %71 = vector.broadcast %70 : vector<8x1xf32> to vector<8x8xf32>
    %72 = arith.mulf %67, %71 : vector<8x8xf32>
    %cst_54 = arith.constant dense<0.000000e+00> : vector<8x8xf32>
    %73 = tpu.matmul %72, %61, %cst_54 {dimension_numbers = #tpu.dot_dimension_numbers<[1], [0], [0], [1], [0, 0, 1, 1], [], []>} : vector<8x8xf32>, vector<8x8xf32>, vector<8x8xf32> -> vector<8x8xf32>
    %c0_55 = arith.constant 0 : index
    %c1_56 = arith.constant 1 : index
    %c0_57 = arith.constant 0 : index
    %c0_58 = arith.constant 0 : index
    %74 = vector.load %arg7[%c0_55, %c1_56, %c0_57, %c0_58] : memref<2x4x8x32xf32, #tpu.memory_space<vmem>>, vector<1x1x8x32xf32>
    %75 = vector.shape_cast %74 : vector<1x1x8x32xf32> to vector<8x32xf32>
    %cst_59 = arith.constant dense<0.000000e+00> : vector<8x32xf32>
    %76 = tpu.matmul %73, %75, %cst_59 {dimension_numbers = #tpu.dot_dimension_numbers<[1], [0], [0], [1], [0, 0, 1, 1], [], []>} : vector<8x8xf32>, vector<8x32xf32>, vector<8x32xf32> -> vector<8x32xf32>
    %77 = arith.addf %52, %76 : vector<8x32xf32>
    %c0_60 = arith.constant 0 : index
    %c2 = arith.constant 2 : index
    %c0_61 = arith.constant 0 : index
    %c0_62 = arith.constant 0 : index
    %78 = vector.load %arg4[%c0_60, %c2, %c0_61, %c0_62] : memref<2x4x32x8xf32, #tpu.memory_space<vmem>>, vector<1x1x32x8xf32>
    %79 = vector.shape_cast %78 : vector<1x1x32x8xf32> to vector<32x8xf32>
    %cst_63 = arith.constant dense<0.000000e+00> : vector<8x8xf32>
    %80 = tpu.matmul %28, %79, %cst_63 {dimension_numbers = #tpu.dot_dimension_numbers<[1], [0], [0], [1], [0, 0, 1, 1], [], []>} : vector<8x32xf32>, vector<32x8xf32>, vector<8x8xf32> -> vector<8x8xf32>
    %c0_64 = arith.constant 0 : index
    %c2_65 = arith.constant 2 : index
    %c0_66 = arith.constant 0 : index
    %c0_67 = arith.constant 0 : index
    %81 = vector.load %arg5[%c0_64, %c2_65, %c0_66, %c0_67] : memref<2x4x32x8xf32, #tpu.memory_space<vmem>>, vector<1x1x32x8xf32>
    %82 = vector.shape_cast %81 : vector<1x1x32x8xf32> to vector<32x8xf32>
    %cst_68 = arith.constant dense<0.000000e+00> : vector<8x8xf32>
    %83 = tpu.matmul %28, %82, %cst_68 {dimension_numbers = #tpu.dot_dimension_numbers<[1], [0], [0], [1], [0, 0, 1, 1], [], []>} : vector<8x32xf32>, vector<32x8xf32>, vector<8x8xf32> -> vector<8x8xf32>
    %c0_69 = arith.constant 0 : index
    %c2_70 = arith.constant 2 : index
    %c0_71 = arith.constant 0 : index
    %c0_72 = arith.constant 0 : index
    %84 = vector.load %arg6[%c0_69, %c2_70, %c0_71, %c0_72] : memref<2x4x32x8xf32, #tpu.memory_space<vmem>>, vector<1x1x32x8xf32>
    %85 = vector.shape_cast %84 : vector<1x1x32x8xf32> to vector<32x8xf32>
    %cst_73 = arith.constant dense<0.000000e+00> : vector<8x8xf32>
    %86 = tpu.matmul %28, %85, %cst_73 {dimension_numbers = #tpu.dot_dimension_numbers<[1], [0], [0], [1], [0, 0, 1, 1], [], []>} : vector<8x32xf32>, vector<32x8xf32>, vector<8x8xf32> -> vector<8x8xf32>
    %cst_74 = arith.constant dense<0.000000e+00> : vector<8x8xf32>
    %87 = tpu.matmul %80, %83, %cst_74 {dimension_numbers = #tpu.dot_dimension_numbers<[1], [1], [0], [0], [0, 0, 1, 0], [], []>} : vector<8x8xf32>, vector<8x8xf32>, vector<8x8xf32> -> vector<8x8xf32>
    %cst_75 = arith.constant dense<0xFF800000> : vector<8xf32>
    %88 = vector.multi_reduction <maximumf>, %87, %cst_75 [1] : vector<8x8xf32> to vector<8xf32>
    %89 = vector.shape_cast %88 : vector<8xf32> to vector<8x1xf32>
    %90 = vector.broadcast %89 : vector<8x1xf32> to vector<8x8xf32>
    %91 = arith.subf %87, %90 : vector<8x8xf32>
    %92 = math.exp %91 : vector<8x8xf32>
    %cst_76 = arith.constant dense<0.000000e+00> : vector<8xf32>
    %93 = vector.multi_reduction <add>, %92, %cst_76 [1] : vector<8x8xf32> to vector<8xf32>
    %94 = vector.shape_cast %93 : vector<8xf32> to vector<8x1xf32>
    %95 = tpu.reciprocal %94 : vector<8x1xf32> -> vector<8x1xf32>
    %96 = vector.broadcast %95 : vector<8x1xf32> to vector<8x8xf32>
    %97 = arith.mulf %92, %96 : vector<8x8xf32>
    %cst_77 = arith.constant dense<0.000000e+00> : vector<8x8xf32>
    %98 = tpu.matmul %97, %86, %cst_77 {dimension_numbers = #tpu.dot_dimension_numbers<[1], [0], [0], [1], [0, 0, 1, 1], [], []>} : vector<8x8xf32>, vector<8x8xf32>, vector<8x8xf32> -> vector<8x8xf32>
    %c0_78 = arith.constant 0 : index
    %c2_79 = arith.constant 2 : index
    %c0_80 = arith.constant 0 : index
    %c0_81 = arith.constant 0 : index
    %99 = vector.load %arg7[%c0_78, %c2_79, %c0_80, %c0_81] : memref<2x4x8x32xf32, #tpu.memory_space<vmem>>, vector<1x1x8x32xf32>
    %100 = vector.shape_cast %99 : vector<1x1x8x32xf32> to vector<8x32xf32>
    %cst_82 = arith.constant dense<0.000000e+00> : vector<8x32xf32>
    %101 = tpu.matmul %98, %100, %cst_82 {dimension_numbers = #tpu.dot_dimension_numbers<[1], [0], [0], [1], [0, 0, 1, 1], [], []>} : vector<8x8xf32>, vector<8x32xf32>, vector<8x32xf32> -> vector<8x32xf32>
    %102 = arith.addf %77, %101 : vector<8x32xf32>
    %c0_83 = arith.constant 0 : index
    %c3 = arith.constant 3 : index
    %c0_84 = arith.constant 0 : index
    %c0_85 = arith.constant 0 : index
    %103 = vector.load %arg4[%c0_83, %c3, %c0_84, %c0_85] : memref<2x4x32x8xf32, #tpu.memory_space<vmem>>, vector<1x1x32x8xf32>
    %104 = vector.shape_cast %103 : vector<1x1x32x8xf32> to vector<32x8xf32>
    %cst_86 = arith.constant dense<0.000000e+00> : vector<8x8xf32>
    %105 = tpu.matmul %28, %104, %cst_86 {dimension_numbers = #tpu.dot_dimension_numbers<[1], [0], [0], [1], [0, 0, 1, 1], [], []>} : vector<8x32xf32>, vector<32x8xf32>, vector<8x8xf32> -> vector<8x8xf32>
    %c0_87 = arith.constant 0 : index
    %c3_88 = arith.constant 3 : index
    %c0_89 = arith.constant 0 : index
    %c0_90 = arith.constant 0 : index
    %106 = vector.load %arg5[%c0_87, %c3_88, %c0_89, %c0_90] : memref<2x4x32x8xf32, #tpu.memory_space<vmem>>, vector<1x1x32x8xf32>
    %107 = vector.shape_cast %106 : vector<1x1x32x8xf32> to vector<32x8xf32>
    %cst_91 = arith.constant dense<0.000000e+00> : vector<8x8xf32>
    %108 = tpu.matmul %28, %107, %cst_91 {dimension_numbers = #tpu.dot_dimension_numbers<[1], [0], [0], [1], [0, 0, 1, 1], [], []>} : vector<8x32xf32>, vector<32x8xf32>, vector<8x8xf32> -> vector<8x8xf32>
    %c0_92 = arith.constant 0 : index
    %c3_93 = arith.constant 3 : index
    %c0_94 = arith.constant 0 : index
    %c0_95 = arith.constant 0 : index
    %109 = vector.load %arg6[%c0_92, %c3_93, %c0_94, %c0_95] : memref<2x4x32x8xf32, #tpu.memory_space<vmem>>, vector<1x1x32x8xf32>
    %110 = vector.shape_cast %109 : vector<1x1x32x8xf32> to vector<32x8xf32>
    %cst_96 = arith.constant dense<0.000000e+00> : vector<8x8xf32>
    %111 = tpu.matmul %28, %110, %cst_96 {dimension_numbers = #tpu.dot_dimension_numbers<[1], [0], [0], [1], [0, 0, 1, 1], [], []>} : vector<8x32xf32>, vector<32x8xf32>, vector<8x8xf32> -> vector<8x8xf32>
    %cst_97 = arith.constant dense<0.000000e+00> : vector<8x8xf32>
    %112 = tpu.matmul %105, %108, %cst_97 {dimension_numbers = #tpu.dot_dimension_numbers<[1], [1], [0], [0], [0, 0, 1, 0], [], []>} : vector<8x8xf32>, vector<8x8xf32>, vector<8x8xf32> -> vector<8x8xf32>
    %cst_98 = arith.constant dense<0xFF800000> : vector<8xf32>
    %113 = vector.multi_reduction <maximumf>, %112, %cst_98 [1] : vector<8x8xf32> to vector<8xf32>
    %114 = vector.shape_cast %113 : vector<8xf32> to vector<8x1xf32>
    %115 = vector.broadcast %114 : vector<8x1xf32> to vector<8x8xf32>
    %116 = arith.subf %112, %115 : vector<8x8xf32>
    %117 = math.exp %116 : vector<8x8xf32>
    %cst_99 = arith.constant dense<0.000000e+00> : vector<8xf32>
    %118 = vector.multi_reduction <add>, %117, %cst_99 [1] : vector<8x8xf32> to vector<8xf32>
    %119 = vector.shape_cast %118 : vector<8xf32> to vector<8x1xf32>
    %120 = tpu.reciprocal %119 : vector<8x1xf32> -> vector<8x1xf32>
    %121 = vector.broadcast %120 : vector<8x1xf32> to vector<8x8xf32>
    %122 = arith.mulf %117, %121 : vector<8x8xf32>
    %cst_100 = arith.constant dense<0.000000e+00> : vector<8x8xf32>
    %123 = tpu.matmul %122, %111, %cst_100 {dimension_numbers = #tpu.dot_dimension_numbers<[1], [0], [0], [1], [0, 0, 1, 1], [], []>} : vector<8x8xf32>, vector<8x8xf32>, vector<8x8xf32> -> vector<8x8xf32>
    %c0_101 = arith.constant 0 : index
    %c3_102 = arith.constant 3 : index
    %c0_103 = arith.constant 0 : index
    %c0_104 = arith.constant 0 : index
    %124 = vector.load %arg7[%c0_101, %c3_102, %c0_103, %c0_104] : memref<2x4x8x32xf32, #tpu.memory_space<vmem>>, vector<1x1x8x32xf32>
    %125 = vector.shape_cast %124 : vector<1x1x8x32xf32> to vector<8x32xf32>
    %cst_105 = arith.constant dense<0.000000e+00> : vector<8x32xf32>
    %126 = tpu.matmul %123, %125, %cst_105 {dimension_numbers = #tpu.dot_dimension_numbers<[1], [0], [0], [1], [0, 0, 1, 1], [], []>} : vector<8x8xf32>, vector<8x32xf32>, vector<8x32xf32> -> vector<8x32xf32>
    %127 = arith.addf %102, %126 : vector<8x32xf32>
    %128 = arith.addf %2, %127 : vector<8x32xf32>
    %c0_106 = arith.constant 0 : index
    %c0_107 = arith.constant 0 : index
    %c0_108 = arith.constant 0 : index
    %129 = vector.load %arg8[%c0_106, %c0_107, %c0_108] : memref<2x1x32xf32, #tpu.memory_space<vmem>>, vector<1x1x32xf32>
    %130 = vector.shape_cast %129 : vector<1x1x32xf32> to vector<1x32xf32>
    %131 = vector.broadcast %130 : vector<1x32xf32> to vector<8x32xf32>
    %132 = arith.addf %128, %131 : vector<8x32xf32>
    %c0_109 = arith.constant 0 : index
    %c0_110 = arith.constant 0 : index
    %c0_111 = arith.constant 0 : index
    %133 = vector.load %arg9[%c0_109, %c0_110, %c0_111] : memref<2x1x32xf32, #tpu.memory_space<vmem>>, vector<1x1x32xf32>
    %134 = vector.shape_cast %133 : vector<1x1x32xf32> to vector<1x32xf32>
    %c0_112 = arith.constant 0 : index
    %c0_113 = arith.constant 0 : index
    %c0_114 = arith.constant 0 : index
    %135 = vector.load %arg10[%c0_112, %c0_113, %c0_114] : memref<2x1x32xf32, #tpu.memory_space<vmem>>, vector<1x1x32xf32>
    %136 = vector.shape_cast %135 : vector<1x1x32xf32> to vector<1x32xf32>
    %cst_115 = arith.constant dense<0.000000e+00> : vector<8xf32>
    %137 = vector.multi_reduction <add>, %132, %cst_115 [1] : vector<8x32xf32> to vector<8xf32>
    %138 = vector.shape_cast %137 : vector<8xf32> to vector<8x1xf32>
    %cst_116 = arith.constant 3.200000e+01 : f32
    %139 = vector.broadcast %cst_116 : f32 to vector<8x1xf32>
    %140 = arith.divf %138, %139 : vector<8x1xf32>
    %141 = vector.broadcast %140 : vector<8x1xf32> to vector<8x32xf32>
    %142 = arith.subf %132, %141 : vector<8x32xf32>
    %143 = arith.mulf %142, %142 : vector<8x32xf32>
    %cst_117 = arith.constant dense<0.000000e+00> : vector<8xf32>
    %144 = vector.multi_reduction <add>, %143, %cst_117 [1] : vector<8x32xf32> to vector<8xf32>
    %145 = vector.shape_cast %144 : vector<8xf32> to vector<8x1xf32>
    %cst_118 = arith.constant 3.200000e+01 : f32
    %146 = vector.broadcast %cst_118 : f32 to vector<8x1xf32>
    %147 = arith.divf %145, %146 : vector<8x1xf32>
    %148 = vector.broadcast %140 : vector<8x1xf32> to vector<8x32xf32>
    %149 = arith.subf %132, %148 : vector<8x32xf32>
    %cst_119 = arith.constant 9.99999974E-6 : f32
    %150 = vector.broadcast %cst_119 : f32 to vector<8x1xf32>
    %151 = arith.addf %147, %150 : vector<8x1xf32>
    %152 = math.rsqrt %151 : vector<8x1xf32>
    %153 = vector.broadcast %152 : vector<8x1xf32> to vector<8x32xf32>
    %154 = arith.mulf %149, %153 : vector<8x32xf32>
    %155 = vector.broadcast %134 : vector<1x32xf32> to vector<8x32xf32>
    %156 = arith.mulf %154, %155 : vector<8x32xf32>
    %157 = vector.broadcast %136 : vector<1x32xf32> to vector<8x32xf32>
    %158 = arith.addf %156, %157 : vector<8x32xf32>
    %c0_120 = arith.constant 0 : index
    %c0_121 = arith.constant 0 : index
    %c0_122 = arith.constant 0 : index
    %159 = vector.load %arg11[%c0_120, %c0_121, %c0_122] : memref<2x32x64xf32, #tpu.memory_space<vmem>>, vector<1x32x64xf32>
    %160 = vector.shape_cast %159 : vector<1x32x64xf32> to vector<32x64xf32>
    %cst_123 = arith.constant dense<0.000000e+00> : vector<8x64xf32>
    %161 = tpu.matmul %158, %160, %cst_123 {dimension_numbers = #tpu.dot_dimension_numbers<[1], [0], [0], [1], [0, 0, 1, 1], [], []>} : vector<8x32xf32>, vector<32x64xf32>, vector<8x64xf32> -> vector<8x64xf32>
    %c0_124 = arith.constant 0 : index
    %c0_125 = arith.constant 0 : index
    %c0_126 = arith.constant 0 : index
    %162 = vector.load %arg12[%c0_124, %c0_125, %c0_126] : memref<2x1x64xf32, #tpu.memory_space<vmem>>, vector<1x1x64xf32>
    %163 = vector.shape_cast %162 : vector<1x1x64xf32> to vector<1x64xf32>
    %164 = vector.broadcast %163 : vector<1x64xf32> to vector<8x64xf32>
    %165 = arith.addf %161, %164 : vector<8x64xf32>
    %cst_127 = arith.constant 0.000000e+00 : f32
    %166 = vector.broadcast %cst_127 : f32 to vector<8x64xf32>
    %167 = arith.maximumf %165, %166 : vector<8x64xf32>
    %c0_128 = arith.constant 0 : index
    %c0_129 = arith.constant 0 : index
    %c0_130 = arith.constant 0 : index
    %168 = vector.load %arg13[%c0_128, %c0_129, %c0_130] : memref<2x64x32xf32, #tpu.memory_space<vmem>>, vector<1x64x32xf32>
    %169 = vector.shape_cast %168 : vector<1x64x32xf32> to vector<64x32xf32>
    %cst_131 = arith.constant dense<0.000000e+00> : vector<8x32xf32>
    %170 = tpu.matmul %167, %169, %cst_131 {dimension_numbers = #tpu.dot_dimension_numbers<[1], [0], [0], [1], [0, 0, 1, 1], [], []>} : vector<8x64xf32>, vector<64x32xf32>, vector<8x32xf32> -> vector<8x32xf32>
    %c0_132 = arith.constant 0 : index
    %c0_133 = arith.constant 0 : index
    %c0_134 = arith.constant 0 : index
    %171 = vector.load %arg14[%c0_132, %c0_133, %c0_134] : memref<2x1x32xf32, #tpu.memory_space<vmem>>, vector<1x1x32xf32>
    %172 = vector.shape_cast %171 : vector<1x1x32xf32> to vector<1x32xf32>
    %173 = vector.broadcast %172 : vector<1x32xf32> to vector<8x32xf32>
    %174 = arith.addf %170, %173 : vector<8x32xf32>
    %175 = arith.addf %132, %174 : vector<8x32xf32>
    %c1_135 = arith.constant 1 : index
    %c0_136 = arith.constant 0 : index
    %c0_137 = arith.constant 0 : index
    %176 = vector.load %arg2[%c1_135, %c0_136, %c0_137] : memref<2x1x32xf32, #tpu.memory_space<vmem>>, vector<1x1x32xf32>
    %177 = vector.shape_cast %176 : vector<1x1x32xf32> to vector<1x32xf32>
    %c1_138 = arith.constant 1 : index
    %c0_139 = arith.constant 0 : index
    %c0_140 = arith.constant 0 : index
    %178 = vector.load %arg3[%c1_138, %c0_139, %c0_140] : memref<2x1x32xf32, #tpu.memory_space<vmem>>, vector<1x1x32xf32>
    %179 = vector.shape_cast %178 : vector<1x1x32xf32> to vector<1x32xf32>
    %cst_141 = arith.constant dense<0.000000e+00> : vector<8xf32>
    %180 = vector.multi_reduction <add>, %175, %cst_141 [1] : vector<8x32xf32> to vector<8xf32>
    %181 = vector.shape_cast %180 : vector<8xf32> to vector<8x1xf32>
    %cst_142 = arith.constant 3.200000e+01 : f32
    %182 = vector.broadcast %cst_142 : f32 to vector<8x1xf32>
    %183 = arith.divf %181, %182 : vector<8x1xf32>
    %184 = vector.broadcast %183 : vector<8x1xf32> to vector<8x32xf32>
    %185 = arith.subf %175, %184 : vector<8x32xf32>
    %186 = arith.mulf %185, %185 : vector<8x32xf32>
    %cst_143 = arith.constant dense<0.000000e+00> : vector<8xf32>
    %187 = vector.multi_reduction <add>, %186, %cst_143 [1] : vector<8x32xf32> to vector<8xf32>
    %188 = vector.shape_cast %187 : vector<8xf32> to vector<8x1xf32>
    %cst_144 = arith.constant 3.200000e+01 : f32
    %189 = vector.broadcast %cst_144 : f32 to vector<8x1xf32>
    %190 = arith.divf %188, %189 : vector<8x1xf32>
    %191 = vector.broadcast %183 : vector<8x1xf32> to vector<8x32xf32>
    %192 = arith.subf %175, %191 : vector<8x32xf32>
    %cst_145 = arith.constant 9.99999974E-6 : f32
    %193 = vector.broadcast %cst_145 : f32 to vector<8x1xf32>
    %194 = arith.addf %190, %193 : vector<8x1xf32>
    %195 = math.rsqrt %194 : vector<8x1xf32>
    %196 = vector.broadcast %195 : vector<8x1xf32> to vector<8x32xf32>
    %197 = arith.mulf %192, %196 : vector<8x32xf32>
    %198 = vector.broadcast %177 : vector<1x32xf32> to vector<8x32xf32>
    %199 = arith.mulf %197, %198 : vector<8x32xf32>
    %200 = vector.broadcast %179 : vector<1x32xf32> to vector<8x32xf32>
    %201 = arith.addf %199, %200 : vector<8x32xf32>
    %c1_146 = arith.constant 1 : index
    %c0_147 = arith.constant 0 : index
    %c0_148 = arith.constant 0 : index
    %c0_149 = arith.constant 0 : index
    %202 = vector.load %arg4[%c1_146, %c0_147, %c0_148, %c0_149] : memref<2x4x32x8xf32, #tpu.memory_space<vmem>>, vector<1x1x32x8xf32>
    %203 = vector.shape_cast %202 : vector<1x1x32x8xf32> to vector<32x8xf32>
    %cst_150 = arith.constant dense<0.000000e+00> : vector<8x8xf32>
    %204 = tpu.matmul %201, %203, %cst_150 {dimension_numbers = #tpu.dot_dimension_numbers<[1], [0], [0], [1], [0, 0, 1, 1], [], []>} : vector<8x32xf32>, vector<32x8xf32>, vector<8x8xf32> -> vector<8x8xf32>
    %c1_151 = arith.constant 1 : index
    %c0_152 = arith.constant 0 : index
    %c0_153 = arith.constant 0 : index
    %c0_154 = arith.constant 0 : index
    %205 = vector.load %arg5[%c1_151, %c0_152, %c0_153, %c0_154] : memref<2x4x32x8xf32, #tpu.memory_space<vmem>>, vector<1x1x32x8xf32>
    %206 = vector.shape_cast %205 : vector<1x1x32x8xf32> to vector<32x8xf32>
    %cst_155 = arith.constant dense<0.000000e+00> : vector<8x8xf32>
    %207 = tpu.matmul %201, %206, %cst_155 {dimension_numbers = #tpu.dot_dimension_numbers<[1], [0], [0], [1], [0, 0, 1, 1], [], []>} : vector<8x32xf32>, vector<32x8xf32>, vector<8x8xf32> -> vector<8x8xf32>
    %c1_156 = arith.constant 1 : index
    %c0_157 = arith.constant 0 : index
    %c0_158 = arith.constant 0 : index
    %c0_159 = arith.constant 0 : index
    %208 = vector.load %arg6[%c1_156, %c0_157, %c0_158, %c0_159] : memref<2x4x32x8xf32, #tpu.memory_space<vmem>>, vector<1x1x32x8xf32>
    %209 = vector.shape_cast %208 : vector<1x1x32x8xf32> to vector<32x8xf32>
    %cst_160 = arith.constant dense<0.000000e+00> : vector<8x8xf32>
    %210 = tpu.matmul %201, %209, %cst_160 {dimension_numbers = #tpu.dot_dimension_numbers<[1], [0], [0], [1], [0, 0, 1, 1], [], []>} : vector<8x32xf32>, vector<32x8xf32>, vector<8x8xf32> -> vector<8x8xf32>
    %cst_161 = arith.constant dense<0.000000e+00> : vector<8x8xf32>
    %211 = tpu.matmul %204, %207, %cst_161 {dimension_numbers = #tpu.dot_dimension_numbers<[1], [1], [0], [0], [0, 0, 1, 0], [], []>} : vector<8x8xf32>, vector<8x8xf32>, vector<8x8xf32> -> vector<8x8xf32>
    %212 = vector.extract_strided_slice %211 {offsets = [1, 0], sizes = [1, 8], strides = [1, 1]} : vector<8x8xf32> to vector<1x8xf32>
    %cst_162 = arith.constant dense<0xFF800000> : vector<8xf32>
    %213 = vector.multi_reduction <maximumf>, %211, %cst_162 [1] : vector<8x8xf32> to vector<8xf32>
    %214 = vector.shape_cast %213 : vector<8xf32> to vector<8x1xf32>
    %215 = vector.broadcast %214 : vector<8x1xf32> to vector<8x8xf32>
    %216 = arith.subf %211, %215 : vector<8x8xf32>
    %217 = math.exp %216 : vector<8x8xf32>
    %cst_163 = arith.constant dense<0.000000e+00> : vector<8xf32>
    %218 = vector.multi_reduction <add>, %217, %cst_163 [1] : vector<8x8xf32> to vector<8xf32>
    %219 = vector.shape_cast %218 : vector<8xf32> to vector<8x1xf32>
    %220 = tpu.reciprocal %219 : vector<8x1xf32> -> vector<8x1xf32>
    %221 = vector.broadcast %220 : vector<8x1xf32> to vector<8x8xf32>
    %222 = arith.mulf %217, %221 : vector<8x8xf32>
    %cst_164 = arith.constant dense<0.000000e+00> : vector<8x8xf32>
    %223 = tpu.matmul %222, %210, %cst_164 {dimension_numbers = #tpu.dot_dimension_numbers<[1], [0], [0], [1], [0, 0, 1, 1], [], []>} : vector<8x8xf32>, vector<8x8xf32>, vector<8x8xf32> -> vector<8x8xf32>
    %c1_165 = arith.constant 1 : index
    %c0_166 = arith.constant 0 : index
    %c0_167 = arith.constant 0 : index
    %c0_168 = arith.constant 0 : index
    %224 = vector.load %arg7[%c1_165, %c0_166, %c0_167, %c0_168] : memref<2x4x8x32xf32, #tpu.memory_space<vmem>>, vector<1x1x8x32xf32>
    %225 = vector.shape_cast %224 : vector<1x1x8x32xf32> to vector<8x32xf32>
    %cst_169 = arith.constant dense<0.000000e+00> : vector<8x32xf32>
    %226 = tpu.matmul %223, %225, %cst_169 {dimension_numbers = #tpu.dot_dimension_numbers<[1], [0], [0], [1], [0, 0, 1, 1], [], []>} : vector<8x8xf32>, vector<8x32xf32>, vector<8x32xf32> -> vector<8x32xf32>
    %c1_170 = arith.constant 1 : index
    %c1_171 = arith.constant 1 : index
    %c0_172 = arith.constant 0 : index
    %c0_173 = arith.constant 0 : index
    %227 = vector.load %arg4[%c1_170, %c1_171, %c0_172, %c0_173] : memref<2x4x32x8xf32, #tpu.memory_space<vmem>>, vector<1x1x32x8xf32>
    %228 = vector.shape_cast %227 : vector<1x1x32x8xf32> to vector<32x8xf32>
    %cst_174 = arith.constant dense<0.000000e+00> : vector<8x8xf32>
    %229 = tpu.matmul %201, %228, %cst_174 {dimension_numbers = #tpu.dot_dimension_numbers<[1], [0], [0], [1], [0, 0, 1, 1], [], []>} : vector<8x32xf32>, vector<32x8xf32>, vector<8x8xf32> -> vector<8x8xf32>
    %c1_175 = arith.constant 1 : index
    %c1_176 = arith.constant 1 : index
    %c0_177 = arith.constant 0 : index
    %c0_178 = arith.constant 0 : index
    %230 = vector.load %arg5[%c1_175, %c1_176, %c0_177, %c0_178] : memref<2x4x32x8xf32, #tpu.memory_space<vmem>>, vector<1x1x32x8xf32>
    %231 = vector.shape_cast %230 : vector<1x1x32x8xf32> to vector<32x8xf32>
    %cst_179 = arith.constant dense<0.000000e+00> : vector<8x8xf32>
    %232 = tpu.matmul %201, %231, %cst_179 {dimension_numbers = #tpu.dot_dimension_numbers<[1], [0], [0], [1], [0, 0, 1, 1], [], []>} : vector<8x32xf32>, vector<32x8xf32>, vector<8x8xf32> -> vector<8x8xf32>
    %c1_180 = arith.constant 1 : index
    %c1_181 = arith.constant 1 : index
    %c0_182 = arith.constant 0 : index
    %c0_183 = arith.constant 0 : index
    %233 = vector.load %arg6[%c1_180, %c1_181, %c0_182, %c0_183] : memref<2x4x32x8xf32, #tpu.memory_space<vmem>>, vector<1x1x32x8xf32>
    %234 = vector.shape_cast %233 : vector<1x1x32x8xf32> to vector<32x8xf32>
    %cst_184 = arith.constant dense<0.000000e+00> : vector<8x8xf32>
    %235 = tpu.matmul %201, %234, %cst_184 {dimension_numbers = #tpu.dot_dimension_numbers<[1], [0], [0], [1], [0, 0, 1, 1], [], []>} : vector<8x32xf32>, vector<32x8xf32>, vector<8x8xf32> -> vector<8x8xf32>
    %cst_185 = arith.constant dense<0.000000e+00> : vector<8x8xf32>
    %236 = tpu.matmul %229, %232, %cst_185 {dimension_numbers = #tpu.dot_dimension_numbers<[1], [1], [0], [0], [0, 0, 1, 0], [], []>} : vector<8x8xf32>, vector<8x8xf32>, vector<8x8xf32> -> vector<8x8xf32>
    %237 = vector.extract_strided_slice %236 {offsets = [1, 0], sizes = [1, 8], strides = [1, 1]} : vector<8x8xf32> to vector<1x8xf32>
    %238 = arith.addf %212, %237 : vector<1x8xf32>
    %cst_186 = arith.constant dense<0xFF800000> : vector<8xf32>
    %239 = vector.multi_reduction <maximumf>, %236, %cst_186 [1] : vector<8x8xf32> to vector<8xf32>
    %240 = vector.shape_cast %239 : vector<8xf32> to vector<8x1xf32>
    %241 = vector.broadcast %240 : vector<8x1xf32> to vector<8x8xf32>
    %242 = arith.subf %236, %241 : vector<8x8xf32>
    %243 = math.exp %242 : vector<8x8xf32>
    %cst_187 = arith.constant dense<0.000000e+00> : vector<8xf32>
    %244 = vector.multi_reduction <add>, %243, %cst_187 [1] : vector<8x8xf32> to vector<8xf32>
    %245 = vector.shape_cast %244 : vector<8xf32> to vector<8x1xf32>
    %246 = tpu.reciprocal %245 : vector<8x1xf32> -> vector<8x1xf32>
    %247 = vector.broadcast %246 : vector<8x1xf32> to vector<8x8xf32>
    %248 = arith.mulf %243, %247 : vector<8x8xf32>
    %cst_188 = arith.constant dense<0.000000e+00> : vector<8x8xf32>
    %249 = tpu.matmul %248, %235, %cst_188 {dimension_numbers = #tpu.dot_dimension_numbers<[1], [0], [0], [1], [0, 0, 1, 1], [], []>} : vector<8x8xf32>, vector<8x8xf32>, vector<8x8xf32> -> vector<8x8xf32>
    %c1_189 = arith.constant 1 : index
    %c1_190 = arith.constant 1 : index
    %c0_191 = arith.constant 0 : index
    %c0_192 = arith.constant 0 : index
    %250 = vector.load %arg7[%c1_189, %c1_190, %c0_191, %c0_192] : memref<2x4x8x32xf32, #tpu.memory_space<vmem>>, vector<1x1x8x32xf32>
    %251 = vector.shape_cast %250 : vector<1x1x8x32xf32> to vector<8x32xf32>
    %cst_193 = arith.constant dense<0.000000e+00> : vector<8x32xf32>
    %252 = tpu.matmul %249, %251, %cst_193 {dimension_numbers = #tpu.dot_dimension_numbers<[1], [0], [0], [1], [0, 0, 1, 1], [], []>} : vector<8x8xf32>, vector<8x32xf32>, vector<8x32xf32> -> vector<8x32xf32>
    %253 = arith.addf %226, %252 : vector<8x32xf32>
    %c1_194 = arith.constant 1 : index
    %c2_195 = arith.constant 2 : index
    %c0_196 = arith.constant 0 : index
    %c0_197 = arith.constant 0 : index
    %254 = vector.load %arg4[%c1_194, %c2_195, %c0_196, %c0_197] : memref<2x4x32x8xf32, #tpu.memory_space<vmem>>, vector<1x1x32x8xf32>
    %255 = vector.shape_cast %254 : vector<1x1x32x8xf32> to vector<32x8xf32>
    %cst_198 = arith.constant dense<0.000000e+00> : vector<8x8xf32>
    %256 = tpu.matmul %201, %255, %cst_198 {dimension_numbers = #tpu.dot_dimension_numbers<[1], [0], [0], [1], [0, 0, 1, 1], [], []>} : vector<8x32xf32>, vector<32x8xf32>, vector<8x8xf32> -> vector<8x8xf32>
    %c1_199 = arith.constant 1 : index
    %c2_200 = arith.constant 2 : index
    %c0_201 = arith.constant 0 : index
    %c0_202 = arith.constant 0 : index
    %257 = vector.load %arg5[%c1_199, %c2_200, %c0_201, %c0_202] : memref<2x4x32x8xf32, #tpu.memory_space<vmem>>, vector<1x1x32x8xf32>
    %258 = vector.shape_cast %257 : vector<1x1x32x8xf32> to vector<32x8xf32>
    %cst_203 = arith.constant dense<0.000000e+00> : vector<8x8xf32>
    %259 = tpu.matmul %201, %258, %cst_203 {dimension_numbers = #tpu.dot_dimension_numbers<[1], [0], [0], [1], [0, 0, 1, 1], [], []>} : vector<8x32xf32>, vector<32x8xf32>, vector<8x8xf32> -> vector<8x8xf32>
    %c1_204 = arith.constant 1 : index
    %c2_205 = arith.constant 2 : index
    %c0_206 = arith.constant 0 : index
    %c0_207 = arith.constant 0 : index
    %260 = vector.load %arg6[%c1_204, %c2_205, %c0_206, %c0_207] : memref<2x4x32x8xf32, #tpu.memory_space<vmem>>, vector<1x1x32x8xf32>
    %261 = vector.shape_cast %260 : vector<1x1x32x8xf32> to vector<32x8xf32>
    %cst_208 = arith.constant dense<0.000000e+00> : vector<8x8xf32>
    %262 = tpu.matmul %201, %261, %cst_208 {dimension_numbers = #tpu.dot_dimension_numbers<[1], [0], [0], [1], [0, 0, 1, 1], [], []>} : vector<8x32xf32>, vector<32x8xf32>, vector<8x8xf32> -> vector<8x8xf32>
    %cst_209 = arith.constant dense<0.000000e+00> : vector<8x8xf32>
    %263 = tpu.matmul %256, %259, %cst_209 {dimension_numbers = #tpu.dot_dimension_numbers<[1], [1], [0], [0], [0, 0, 1, 0], [], []>} : vector<8x8xf32>, vector<8x8xf32>, vector<8x8xf32> -> vector<8x8xf32>
    %264 = vector.extract_strided_slice %263 {offsets = [1, 0], sizes = [1, 8], strides = [1, 1]} : vector<8x8xf32> to vector<1x8xf32>
    %265 = arith.addf %238, %264 : vector<1x8xf32>
    %cst_210 = arith.constant dense<0xFF800000> : vector<8xf32>
    %266 = vector.multi_reduction <maximumf>, %263, %cst_210 [1] : vector<8x8xf32> to vector<8xf32>
    %267 = vector.shape_cast %266 : vector<8xf32> to vector<8x1xf32>
    %268 = vector.broadcast %267 : vector<8x1xf32> to vector<8x8xf32>
    %269 = arith.subf %263, %268 : vector<8x8xf32>
    %270 = math.exp %269 : vector<8x8xf32>
    %cst_211 = arith.constant dense<0.000000e+00> : vector<8xf32>
    %271 = vector.multi_reduction <add>, %270, %cst_211 [1] : vector<8x8xf32> to vector<8xf32>
    %272 = vector.shape_cast %271 : vector<8xf32> to vector<8x1xf32>
    %273 = tpu.reciprocal %272 : vector<8x1xf32> -> vector<8x1xf32>
    %274 = vector.broadcast %273 : vector<8x1xf32> to vector<8x8xf32>
    %275 = arith.mulf %270, %274 : vector<8x8xf32>
    %cst_212 = arith.constant dense<0.000000e+00> : vector<8x8xf32>
    %276 = tpu.matmul %275, %262, %cst_212 {dimension_numbers = #tpu.dot_dimension_numbers<[1], [0], [0], [1], [0, 0, 1, 1], [], []>} : vector<8x8xf32>, vector<8x8xf32>, vector<8x8xf32> -> vector<8x8xf32>
    %c1_213 = arith.constant 1 : index
    %c2_214 = arith.constant 2 : index
    %c0_215 = arith.constant 0 : index
    %c0_216 = arith.constant 0 : index
    %277 = vector.load %arg7[%c1_213, %c2_214, %c0_215, %c0_216] : memref<2x4x8x32xf32, #tpu.memory_space<vmem>>, vector<1x1x8x32xf32>
    %278 = vector.shape_cast %277 : vector<1x1x8x32xf32> to vector<8x32xf32>
    %cst_217 = arith.constant dense<0.000000e+00> : vector<8x32xf32>
    %279 = tpu.matmul %276, %278, %cst_217 {dimension_numbers = #tpu.dot_dimension_numbers<[1], [0], [0], [1], [0, 0, 1, 1], [], []>} : vector<8x8xf32>, vector<8x32xf32>, vector<8x32xf32> -> vector<8x32xf32>
    %280 = arith.addf %253, %279 : vector<8x32xf32>
    %c1_218 = arith.constant 1 : index
    %c3_219 = arith.constant 3 : index
    %c0_220 = arith.constant 0 : index
    %c0_221 = arith.constant 0 : index
    %281 = vector.load %arg4[%c1_218, %c3_219, %c0_220, %c0_221] : memref<2x4x32x8xf32, #tpu.memory_space<vmem>>, vector<1x1x32x8xf32>
    %282 = vector.shape_cast %281 : vector<1x1x32x8xf32> to vector<32x8xf32>
    %cst_222 = arith.constant dense<0.000000e+00> : vector<8x8xf32>
    %283 = tpu.matmul %201, %282, %cst_222 {dimension_numbers = #tpu.dot_dimension_numbers<[1], [0], [0], [1], [0, 0, 1, 1], [], []>} : vector<8x32xf32>, vector<32x8xf32>, vector<8x8xf32> -> vector<8x8xf32>
    %c1_223 = arith.constant 1 : index
    %c3_224 = arith.constant 3 : index
    %c0_225 = arith.constant 0 : index
    %c0_226 = arith.constant 0 : index
    %284 = vector.load %arg5[%c1_223, %c3_224, %c0_225, %c0_226] : memref<2x4x32x8xf32, #tpu.memory_space<vmem>>, vector<1x1x32x8xf32>
    %285 = vector.shape_cast %284 : vector<1x1x32x8xf32> to vector<32x8xf32>
    %cst_227 = arith.constant dense<0.000000e+00> : vector<8x8xf32>
    %286 = tpu.matmul %201, %285, %cst_227 {dimension_numbers = #tpu.dot_dimension_numbers<[1], [0], [0], [1], [0, 0, 1, 1], [], []>} : vector<8x32xf32>, vector<32x8xf32>, vector<8x8xf32> -> vector<8x8xf32>
    %c1_228 = arith.constant 1 : index
    %c3_229 = arith.constant 3 : index
    %c0_230 = arith.constant 0 : index
    %c0_231 = arith.constant 0 : index
    %287 = vector.load %arg6[%c1_228, %c3_229, %c0_230, %c0_231] : memref<2x4x32x8xf32, #tpu.memory_space<vmem>>, vector<1x1x32x8xf32>
    %288 = vector.shape_cast %287 : vector<1x1x32x8xf32> to vector<32x8xf32>
    %cst_232 = arith.constant dense<0.000000e+00> : vector<8x8xf32>
    %289 = tpu.matmul %201, %288, %cst_232 {dimension_numbers = #tpu.dot_dimension_numbers<[1], [0], [0], [1], [0, 0, 1, 1], [], []>} : vector<8x32xf32>, vector<32x8xf32>, vector<8x8xf32> -> vector<8x8xf32>
    %cst_233 = arith.constant dense<0.000000e+00> : vector<8x8xf32>
    %290 = tpu.matmul %283, %286, %cst_233 {dimension_numbers = #tpu.dot_dimension_numbers<[1], [1], [0], [0], [0, 0, 1, 0], [], []>} : vector<8x8xf32>, vector<8x8xf32>, vector<8x8xf32> -> vector<8x8xf32>
    %291 = vector.extract_strided_slice %290 {offsets = [1, 0], sizes = [1, 8], strides = [1, 1]} : vector<8x8xf32> to vector<1x8xf32>
    %292 = arith.addf %265, %291 : vector<1x8xf32>
    %cst_234 = arith.constant dense<0xFF800000> : vector<8xf32>
    %293 = vector.multi_reduction <maximumf>, %290, %cst_234 [1] : vector<8x8xf32> to vector<8xf32>
    %294 = vector.shape_cast %293 : vector<8xf32> to vector<8x1xf32>
    %295 = vector.broadcast %294 : vector<8x1xf32> to vector<8x8xf32>
    %296 = arith.subf %290, %295 : vector<8x8xf32>
    %297 = math.exp %296 : vector<8x8xf32>
    %cst_235 = arith.constant dense<0.000000e+00> : vector<8xf32>
    %298 = vector.multi_reduction <add>, %297, %cst_235 [1] : vector<8x8xf32> to vector<8xf32>
    %299 = vector.shape_cast %298 : vector<8xf32> to vector<8x1xf32>
    %300 = tpu.reciprocal %299 : vector<8x1xf32> -> vector<8x1xf32>
    %301 = vector.broadcast %300 : vector<8x1xf32> to vector<8x8xf32>
    %302 = arith.mulf %297, %301 : vector<8x8xf32>
    %cst_236 = arith.constant dense<0.000000e+00> : vector<8x8xf32>
    %303 = tpu.matmul %302, %289, %cst_236 {dimension_numbers = #tpu.dot_dimension_numbers<[1], [0], [0], [1], [0, 0, 1, 1], [], []>} : vector<8x8xf32>, vector<8x8xf32>, vector<8x8xf32> -> vector<8x8xf32>
    %c1_237 = arith.constant 1 : index
    %c3_238 = arith.constant 3 : index
    %c0_239 = arith.constant 0 : index
    %c0_240 = arith.constant 0 : index
    %304 = vector.load %arg7[%c1_237, %c3_238, %c0_239, %c0_240] : memref<2x4x8x32xf32, #tpu.memory_space<vmem>>, vector<1x1x8x32xf32>
    %305 = vector.shape_cast %304 : vector<1x1x8x32xf32> to vector<8x32xf32>
    %cst_241 = arith.constant dense<0.000000e+00> : vector<8x32xf32>
    %306 = tpu.matmul %303, %305, %cst_241 {dimension_numbers = #tpu.dot_dimension_numbers<[1], [0], [0], [1], [0, 0, 1, 1], [], []>} : vector<8x8xf32>, vector<8x32xf32>, vector<8x32xf32> -> vector<8x32xf32>
    %307 = arith.addf %280, %306 : vector<8x32xf32>
    %308 = arith.addf %175, %307 : vector<8x32xf32>
    %c1_242 = arith.constant 1 : index
    %c0_243 = arith.constant 0 : index
    %c0_244 = arith.constant 0 : index
    %309 = vector.load %arg8[%c1_242, %c0_243, %c0_244] : memref<2x1x32xf32, #tpu.memory_space<vmem>>, vector<1x1x32xf32>
    %310 = vector.shape_cast %309 : vector<1x1x32xf32> to vector<1x32xf32>
    %311 = vector.broadcast %310 : vector<1x32xf32> to vector<8x32xf32>
    %312 = arith.addf %308, %311 : vector<8x32xf32>
    %c1_245 = arith.constant 1 : index
    %c0_246 = arith.constant 0 : index
    %c0_247 = arith.constant 0 : index
    %313 = vector.load %arg9[%c1_245, %c0_246, %c0_247] : memref<2x1x32xf32, #tpu.memory_space<vmem>>, vector<1x1x32xf32>
    %314 = vector.shape_cast %313 : vector<1x1x32xf32> to vector<1x32xf32>
    %c1_248 = arith.constant 1 : index
    %c0_249 = arith.constant 0 : index
    %c0_250 = arith.constant 0 : index
    %315 = vector.load %arg10[%c1_248, %c0_249, %c0_250] : memref<2x1x32xf32, #tpu.memory_space<vmem>>, vector<1x1x32xf32>
    %316 = vector.shape_cast %315 : vector<1x1x32xf32> to vector<1x32xf32>
    %cst_251 = arith.constant dense<0.000000e+00> : vector<8xf32>
    %317 = vector.multi_reduction <add>, %312, %cst_251 [1] : vector<8x32xf32> to vector<8xf32>
    %318 = vector.shape_cast %317 : vector<8xf32> to vector<8x1xf32>
    %cst_252 = arith.constant 3.200000e+01 : f32
    %319 = vector.broadcast %cst_252 : f32 to vector<8x1xf32>
    %320 = arith.divf %318, %319 : vector<8x1xf32>
    %321 = vector.broadcast %320 : vector<8x1xf32> to vector<8x32xf32>
    %322 = arith.subf %312, %321 : vector<8x32xf32>
    %323 = arith.mulf %322, %322 : vector<8x32xf32>
    %cst_253 = arith.constant dense<0.000000e+00> : vector<8xf32>
    %324 = vector.multi_reduction <add>, %323, %cst_253 [1] : vector<8x32xf32> to vector<8xf32>
    %325 = vector.shape_cast %324 : vector<8xf32> to vector<8x1xf32>
    %cst_254 = arith.constant 3.200000e+01 : f32
    %326 = vector.broadcast %cst_254 : f32 to vector<8x1xf32>
    %327 = arith.divf %325, %326 : vector<8x1xf32>
    %328 = vector.broadcast %320 : vector<8x1xf32> to vector<8x32xf32>
    %329 = arith.subf %312, %328 : vector<8x32xf32>
    %cst_255 = arith.constant 9.99999974E-6 : f32
    %330 = vector.broadcast %cst_255 : f32 to vector<8x1xf32>
    %331 = arith.addf %327, %330 : vector<8x1xf32>
    %332 = math.rsqrt %331 : vector<8x1xf32>
    %333 = vector.broadcast %332 : vector<8x1xf32> to vector<8x32xf32>
    %334 = arith.mulf %329, %333 : vector<8x32xf32>
    %335 = vector.broadcast %314 : vector<1x32xf32> to vector<8x32xf32>
    %336 = arith.mulf %334, %335 : vector<8x32xf32>
    %337 = vector.broadcast %316 : vector<1x32xf32> to vector<8x32xf32>
    %338 = arith.addf %336, %337 : vector<8x32xf32>
    %c1_256 = arith.constant 1 : index
    %c0_257 = arith.constant 0 : index
    %c0_258 = arith.constant 0 : index
    %339 = vector.load %arg11[%c1_256, %c0_257, %c0_258] : memref<2x32x64xf32, #tpu.memory_space<vmem>>, vector<1x32x64xf32>
    %340 = vector.shape_cast %339 : vector<1x32x64xf32> to vector<32x64xf32>
    %cst_259 = arith.constant dense<0.000000e+00> : vector<8x64xf32>
    %341 = tpu.matmul %338, %340, %cst_259 {dimension_numbers = #tpu.dot_dimension_numbers<[1], [0], [0], [1], [0, 0, 1, 1], [], []>} : vector<8x32xf32>, vector<32x64xf32>, vector<8x64xf32> -> vector<8x64xf32>
    %c1_260 = arith.constant 1 : index
    %c0_261 = arith.constant 0 : index
    %c0_262 = arith.constant 0 : index
    %342 = vector.load %arg12[%c1_260, %c0_261, %c0_262] : memref<2x1x64xf32, #tpu.memory_space<vmem>>, vector<1x1x64xf32>
    %343 = vector.shape_cast %342 : vector<1x1x64xf32> to vector<1x64xf32>
    %344 = vector.broadcast %343 : vector<1x64xf32> to vector<8x64xf32>
    %345 = arith.addf %341, %344 : vector<8x64xf32>
    %cst_263 = arith.constant 0.000000e+00 : f32
    %346 = vector.broadcast %cst_263 : f32 to vector<8x64xf32>
    %347 = arith.maximumf %345, %346 : vector<8x64xf32>
    %c1_264 = arith.constant 1 : index
    %c0_265 = arith.constant 0 : index
    %c0_266 = arith.constant 0 : index
    %348 = vector.load %arg13[%c1_264, %c0_265, %c0_266] : memref<2x64x32xf32, #tpu.memory_space<vmem>>, vector<1x64x32xf32>
    %349 = vector.shape_cast %348 : vector<1x64x32xf32> to vector<64x32xf32>
    %cst_267 = arith.constant dense<0.000000e+00> : vector<8x32xf32>
    %350 = tpu.matmul %347, %349, %cst_267 {dimension_numbers = #tpu.dot_dimension_numbers<[1], [0], [0], [1], [0, 0, 1, 1], [], []>} : vector<8x64xf32>, vector<64x32xf32>, vector<8x32xf32> -> vector<8x32xf32>
    %c1_268 = arith.constant 1 : index
    %c0_269 = arith.constant 0 : index
    %c0_270 = arith.constant 0 : index
    %351 = vector.load %arg14[%c1_268, %c0_269, %c0_270] : memref<2x1x32xf32, #tpu.memory_space<vmem>>, vector<1x1x32xf32>
    %352 = vector.shape_cast %351 : vector<1x1x32xf32> to vector<1x32xf32>
    %353 = vector.broadcast %352 : vector<1x32xf32> to vector<8x32xf32>
    %354 = arith.addf %350, %353 : vector<8x32xf32>
    %355 = arith.addf %312, %354 : vector<8x32xf32>
    %c0_271 = arith.constant 0 : index
    %c0_272 = arith.constant 0 : index
    %356 = vector.load %arg15[%c0_271, %c0_272] : memref<1x32xf32, #tpu.memory_space<vmem>>, vector<1x32xf32>
    %c0_273 = arith.constant 0 : index
    %c0_274 = arith.constant 0 : index
    %357 = vector.load %arg16[%c0_273, %c0_274] : memref<1x32xf32, #tpu.memory_space<vmem>>, vector<1x32xf32>
    %cst_275 = arith.constant dense<0.000000e+00> : vector<8xf32>
    %358 = vector.multi_reduction <add>, %355, %cst_275 [1] : vector<8x32xf32> to vector<8xf32>
    %359 = vector.shape_cast %358 : vector<8xf32> to vector<8x1xf32>
    %cst_276 = arith.constant 3.200000e+01 : f32
    %360 = vector.broadcast %cst_276 : f32 to vector<8x1xf32>
    %361 = arith.divf %359, %360 : vector<8x1xf32>
    %362 = vector.broadcast %361 : vector<8x1xf32> to vector<8x32xf32>
    %363 = arith.subf %355, %362 : vector<8x32xf32>
    %364 = arith.mulf %363, %363 : vector<8x32xf32>
    %cst_277 = arith.constant dense<0.000000e+00> : vector<8xf32>
    %365 = vector.multi_reduction <add>, %364, %cst_277 [1] : vector<8x32xf32> to vector<8xf32>
    %366 = vector.shape_cast %365 : vector<8xf32> to vector<8x1xf32>
    %cst_278 = arith.constant 3.200000e+01 : f32
    %367 = vector.broadcast %cst_278 : f32 to vector<8x1xf32>
    %368 = arith.divf %366, %367 : vector<8x1xf32>
    %369 = vector.broadcast %361 : vector<8x1xf32> to vector<8x32xf32>
    %370 = arith.subf %355, %369 : vector<8x32xf32>
    %cst_279 = arith.constant 9.99999974E-6 : f32
    %371 = vector.broadcast %cst_279 : f32 to vector<8x1xf32>
    %372 = arith.addf %368, %371 : vector<8x1xf32>
    %373 = math.rsqrt %372 : vector<8x1xf32>
    %374 = vector.broadcast %373 : vector<8x1xf32> to vector<8x32xf32>
    %375 = arith.mulf %370, %374 : vector<8x32xf32>
    %376 = vector.broadcast %356 : vector<1x32xf32> to vector<8x32xf32>
    %377 = arith.mulf %375, %376 : vector<8x32xf32>
    %378 = vector.broadcast %357 : vector<1x32xf32> to vector<8x32xf32>
    %379 = arith.addf %377, %378 : vector<8x32xf32>
    %380 = vector.extract_strided_slice %379 {offsets = [0, 0], sizes = [1, 32], strides = [1, 1]} : vector<8x32xf32> to vector<1x32xf32>
    %c0_280 = arith.constant 0 : index
    %c0_281 = arith.constant 0 : index
    %381 = vector.load %arg17[%c0_280, %c0_281] : memref<32x128xf32, #tpu.memory_space<vmem>>, vector<32x128xf32>
    %cst_282 = arith.constant dense<0.000000e+00> : vector<1x128xf32>
    %382 = tpu.matmul %380, %381, %cst_282 {dimension_numbers = #tpu.dot_dimension_numbers<[1], [0], [0], [1], [0, 0, 1, 1], [], []>} : vector<1x32xf32>, vector<32x128xf32>, vector<1x128xf32> -> vector<1x128xf32>
    %cst_283 = arith.constant 0.000000e+00 : f32
    %383 = vector.broadcast %cst_283 : f32 to vector<8x128xf32>
    %c0_284 = arith.constant 0 : index
    %c0_285 = arith.constant 0 : index
    %384 = vector.load %arg18[%c0_284, %c0_285] : memref<8x128xf32, #tpu.memory_space<vmem>>, vector<8x128xf32>
    tpu.vector_store %arg18[%c0_284, %c0_285], %383 {strides = array<i32>} : memref<8x128xf32, #tpu.memory_space<vmem>>, vector<8x128xf32>,
    %c0_286 = arith.constant 0 : index
    %c0_287 = arith.constant 0 : index
    %385 = vector.load %arg18[%c0_286, %c0_287] : memref<8x128xf32, #tpu.memory_space<vmem>>, vector<1x128xf32>
    tpu.vector_store %arg18[%c0_286, %c0_287], %382 {strides = array<i32>} : memref<8x128xf32, #tpu.memory_space<vmem>>, vector<1x128xf32>,
    %c1_288 = arith.constant 1 : index
    %c0_289 = arith.constant 0 : index
    %386 = vector.load %arg18[%c1_288, %c0_289] : memref<8x128xf32, #tpu.memory_space<vmem>>, vector<1x8xf32>
    tpu.vector_store %arg18[%c1_288, %c0_289], %292 {strides = array<i32>} : memref<8x128xf32, #tpu.memory_space<vmem>>, vector<1x8xf32>,
    return
  }
}

</mosaic_0001>

<llo_original>
// kernel: tpu_custom_call.1
$region0: #{tpu_custom_call.1}
  #allocation0 [shape = 'u32[]', space=smem, size = 0x4, offset = 0x4, fixed_abs, tag = 'smem constant byte address 0x4 - core index']
  #allocation1 [shape = 'u32[144,128]{1,0:T(1,128)}', space=vmem, size = 0x12000, scoped, tag = 'internal scratch']
  %s0 = inlined_call_operand.vmem [shape: f32[8,32], index: 0, kind: input, shape index: {}]
  %s1 = inlined_call_operand.vmem [shape: f32[8,32], index: 1, kind: input, shape index: {}]
  %s2 = inlined_call_operand.vmem [shape: f32[2,1,32], index: 2, kind: input, shape index: {}]
  %s3 = inlined_call_operand.vmem [shape: f32[2,1,32], index: 3, kind: input, shape index: {}]
  %s4 = inlined_call_operand.vmem [shape: f32[2,4,32,8], index: 4, kind: input, shape index: {}]
  %s5 = inlined_call_operand.vmem [shape: f32[2,4,32,8], index: 5, kind: input, shape index: {}]
  %s6 = inlined_call_operand.vmem [shape: f32[2,4,32,8], index: 6, kind: input, shape index: {}]
  %s7 = inlined_call_operand.vmem [shape: f32[2,4,8,32], index: 7, kind: input, shape index: {}]
  %s8 = inlined_call_operand.vmem [shape: f32[2,1,32], index: 8, kind: input, shape index: {}]
  %s9 = inlined_call_operand.vmem [shape: f32[2,1,32], index: 9, kind: input, shape index: {}]
  %s10 = inlined_call_operand.vmem [shape: f32[2,1,32], index: 10, kind: input, shape index: {}]
  %s11 = inlined_call_operand.vmem [shape: f32[2,32,64], index: 11, kind: input, shape index: {}]
  %s12 = inlined_call_operand.vmem [shape: f32[2,1,64], index: 12, kind: input, shape index: {}]
  %s13 = inlined_call_operand.vmem [shape: f32[2,64,32], index: 13, kind: input, shape index: {}]
  %s14 = inlined_call_operand.vmem [shape: f32[2,1,32], index: 14, kind: input, shape index: {}]
  %s15 = inlined_call_operand.vmem [shape: f32[1,32], index: 15, kind: input, shape index: {}]
  %s16 = inlined_call_operand.vmem [shape: f32[1,32], index: 16, kind: input, shape index: {}]
  %s17 = inlined_call_operand.vmem [shape: f32[32,128], index: 17, kind: input, shape index: {}]
  %s18 = inlined_call_operand.hbm [shape: f32[8,128], index: 18, kind: output, shape index: {}]
  %s19 = sld [smem:[#allocation0]]
  $region82: #{tpu_custom_call.1} parent=0
    _
  %s21 = ssub.s32 1, %s19
  %s22 = scalar_select 0, %s21, %s19
  $region1: #{tpu_custom_call.1} parent=0
    #allocation2 [shape = 'u8[4096]{0}', space=vmem, size = 0x1000, scoped, tag = 'output window, operand 0, single buffered']
    #allocation3 [shape = 's32[1]{0}', space=sflag, size = 0x4, scoped, tag = 'scoped memory for tpu_custom_call.1']
    %23 = vsyncpa [#allocation3], 0
    // Predicated region
    $region2: #{tpu_custom_call.1} parent=1 // pred_check
      _
    $region3: #{tpu_custom_call.1} parent=1 // pred_check_branch
      %25 = sbr.rel (0) target = $region5
    $region4: #{tpu_custom_call.1} parent=1 // pred_region
      _
    $region5: #{tpu_custom_call.1} parent=1 // pred_fallthru
      _
    // Predicated region
    $region6: #{tpu_custom_call.1} parent=1 // pred_check
      _
    $region7: #{tpu_custom_call.1} parent=1 // pred_check_branch
      %27 = sbr.rel (0) target = $region9
    $region8: #{tpu_custom_call.1} parent=1 // pred_region
      _
    $region9: #{tpu_custom_call.1} parent=1 // pred_fallthru
      _
    // Predicated region
    $region10: #{tpu_custom_call.1} parent=1 // pred_check
      _
    $region11: #{tpu_custom_call.1} parent=1 // pred_check_branch
      %29 = sbr.rel (0) target = $region13
    $region12: #{tpu_custom_call.1} parent=1 // pred_region
      _
    $region13: #{tpu_custom_call.1} parent=1 // pred_fallthru
      _
    // Predicated region
    $region14: #{tpu_custom_call.1} parent=1 // pred_check
      _
    $region15: #{tpu_custom_call.1} parent=1 // pred_check_branch
      %31 = sbr.rel (0) target = $region17
    $region16: #{tpu_custom_call.1} parent=1 // pred_region
      _
    $region17: #{tpu_custom_call.1} parent=1 // pred_fallthru
      _
    // Predicated region
    $region18: #{tpu_custom_call.1} parent=1 // pred_check
      _
    $region19: #{tpu_custom_call.1} parent=1 // pred_check_branch
      %33 = sbr.rel (0) target = $region21
    $region20: #{tpu_custom_call.1} parent=1 // pred_region
      _
    $region21: #{tpu_custom_call.1} parent=1 // pred_fallthru
      _
    // Predicated region
    $region22: #{tpu_custom_call.1} parent=1 // pred_check
      _
    $region23: #{tpu_custom_call.1} parent=1 // pred_check_branch
      %35 = sbr.rel (0) target = $region25
    $region24: #{tpu_custom_call.1} parent=1 // pred_region
      _
    $region25: #{tpu_custom_call.1} parent=1 // pred_fallthru
      _
    // Predicated region
    $region26: #{tpu_custom_call.1} parent=1 // pred_check
      _
    $region27: #{tpu_custom_call.1} parent=1 // pred_check_branch
      %37 = sbr.rel (0) target = $region29
    $region28: #{tpu_custom_call.1} parent=1 // pred_region
      _
    $region29: #{tpu_custom_call.1} parent=1 // pred_fallthru
      _
    // Predicated region
    $region30: #{tpu_custom_call.1} parent=1 // pred_check
      _
    $region31: #{tpu_custom_call.1} parent=1 // pred_check_branch
      %39 = sbr.rel (0) target = $region33
    $region32: #{tpu_custom_call.1} parent=1 // pred_region
      _
    $region33: #{tpu_custom_call.1} parent=1 // pred_fallthru
      _
    // Predicated region
    $region34: #{tpu_custom_call.1} parent=1 // pred_check
      _
    $region35: #{tpu_custom_call.1} parent=1 // pred_check_branch
      %41 = sbr.rel (0) target = $region37
    $region36: #{tpu_custom_call.1} parent=1 // pred_region
      _
    $region37: #{tpu_custom_call.1} parent=1 // pred_fallthru
      _
    // Predicated region
    $region38: #{tpu_custom_call.1} parent=1 // pred_check
      _
    $region39: #{tpu_custom_call.1} parent=1 // pred_check_branch
      %43 = sbr.rel (0) target = $region41
    $region40: #{tpu_custom_call.1} parent=1 // pred_region
      _
    $region41: #{tpu_custom_call.1} parent=1 // pred_fallthru
      _
    // Predicated region
    $region42: #{tpu_custom_call.1} parent=1 // pred_check
      _
    $region43: #{tpu_custom_call.1} parent=1 // pred_check_branch
      %45 = sbr.rel (0) target = $region45
    $region44: #{tpu_custom_call.1} parent=1 // pred_region
      _
    $region45: #{tpu_custom_call.1} parent=1 // pred_fallthru
      _
    // Predicated region
    $region46: #{tpu_custom_call.1} parent=1 // pred_check
      _
    $region47: #{tpu_custom_call.1} parent=1 // pred_check_branch
      %47 = sbr.rel (0) target = $region49
    $region48: #{tpu_custom_call.1} parent=1 // pred_region
      _
    $region49: #{tpu_custom_call.1} parent=1 // pred_fallthru
      _
    // Predicated region
    $region50: #{tpu_custom_call.1} parent=1 // pred_check
      _
    $region51: #{tpu_custom_call.1} parent=1 // pred_check_branch
      %49 = sbr.rel (0) target = $region53
    $region52: #{tpu_custom_call.1} parent=1 // pred_region
      _
    $region53: #{tpu_custom_call.1} parent=1 // pred_fallthru
      _
    // Predicated region
    $region54: #{tpu_custom_call.1} parent=1 // pred_check
      _
    $region55: #{tpu_custom_call.1} parent=1 // pred_check_branch
      %51 = sbr.rel (0) target = $region57
    $region56: #{tpu_custom_call.1} parent=1 // pred_region
      _
    $region57: #{tpu_custom_call.1} parent=1 // pred_fallthru
      _
    // Predicated region
    $region58: #{tpu_custom_call.1} parent=1 // pred_check
      _
    $region59: #{tpu_custom_call.1} parent=1 // pred_check_branch
      %53 = sbr.rel (0) target = $region61
    $region60: #{tpu_custom_call.1} parent=1 // pred_region
      _
    $region61: #{tpu_custom_call.1} parent=1 // pred_fallthru
      _
    // Predicated region
    $region62: #{tpu_custom_call.1} parent=1 // pred_check
      _
    $region63: #{tpu_custom_call.1} parent=1 // pred_check_branch
      %55 = sbr.rel (0) target = $region65
    $region64: #{tpu_custom_call.1} parent=1 // pred_region
      _
    $region65: #{tpu_custom_call.1} parent=1 // pred_fallthru
      _
    // Predicated region
    $region66: #{tpu_custom_call.1} parent=1 // pred_check
      _
    $region67: #{tpu_custom_call.1} parent=1 // pred_check_branch
      %57 = sbr.rel (0) target = $region69
    $region68: #{tpu_custom_call.1} parent=1 // pred_region
      _
    $region69: #{tpu_custom_call.1} parent=1 // pred_fallthru
      _
    // Predicated region
    $region70: #{tpu_custom_call.1} parent=1 // pred_check
      _
    $region71: #{tpu_custom_call.1} parent=1 // pred_check_branch
      %59 = sbr.rel (0) target = $region73
    $region72: #{tpu_custom_call.1} parent=1 // pred_region
      _
    $region73: #{tpu_custom_call.1} parent=1 // pred_fallthru
      _
    %v60 = vld [vmem:[%s0] sm:$0xff]
    %v61 = vld [vmem:[%s1] sm:$0xff]
    %v62 = vadd.f32 %v60, %v61
    %v63 = vld [vmem:[%s2] sm:$0x1]
    %v64 = vld [vmem:[%s3] sm:$0x1]
    %vm65 = vcmask 261120
    %v66 = vsel %vm65, %v62, 0.0
    %67 = vadd.xlane.f32.xlu0 %v66
    %v68 = vpop.xlane.xlu0 %67
    %v69 = vrcp.pop 32.0
    %v70 = vmul.f32 %v68, %v69
    %v71 = vsub.f32 %v62, %v70
    %v72 = vmul.f32 %v71, %v71
    %v73 = vsel %vm65, %v72, 0.0
    %74 = vadd.xlane.f32.xlu0 %v73
    %v75 = vpop.xlane.xlu0 %74
    %v76 = vmul.f32 %v75, %v69
    %v77 = vadd.f32 %v76, 1e-05
    %v78 = vrsqrt.pop %v77
    %v79 = vmul.f32 %v71, %v78
    %v81 = vlaneseq
    %v82 = vshrl.u32 %v81, 7
    %v83 = vsub.s32 0, %v82
    %v84 = vrot.slane %v63, %v83
    %v86 = vmul.f32 %v79, %v84
    %v88 = vlaneseq
    %v89 = vshrl.u32 %v88, 7
    %v90 = vsub.s32 0, %v89
    %v91 = vrot.slane %v64, %v90
    %v93 = vadd.f32 %v86, %v91
    %v94 = vld [vmem:[%s4] sm:$0xff]
    %v95 = vld [vmem:[%s4 + $0x8] sm:$0xff]
    %v96 = vld [vmem:[%s4 + $0x10] sm:$0xff]
    %v97 = vld [vmem:[%s4 + $0x18] sm:$0xff]
    %v99 = vsel %vm65, %v93, 0
    %101 = vmatprep.subr.mxu0 0.0
    %102 = vmatpush1.msra.mxu0 %v94
    %103 = vmatprep.subr.mxu0 0.0
    %104 = vmatpush1.msra.mxu0 %v95
    %105 = vmatprep.subr.mxu0 0.0
    %106 = vmatpush1.msra.mxu0 %v96
    %107 = vmatprep.subr.mxu0 0.0
    %108 = vmatpush1.msra.mxu0 %v97
    %109 = vmatprep.subr.mxu0 0.0
    %110 = vmatpush1.msra.mxu0 0.0
    %111 = vmatprep.subr.mxu0 0.0
    %112 = vmatpush1.msra.mxu0 0.0
    %113 = vmatprep.subr.mxu0 0.0
    %114 = vmatpush1.msra.mxu0 0.0
    %115 = vmatprep.subr.mxu0 0.0
    %116 = vmatpush1.msra.mxu0 0.0
    %117 = vmatprep.subr.mxu0 0.0
    %118 = vmatpush1.msra.mxu0 0.0
    %119 = vmatprep.subr.mxu0 0.0
    %120 = vmatpush1.msra.mxu0 0.0
    %121 = vmatprep.subr.mxu0 0.0
    %122 = vmatpush1.msra.mxu0 0.0
    %123 = vmatprep.subr.mxu0 0.0
    %124 = vmatpush1.msra.mxu0 0.0
    %125 = vmatprep.subr.mxu0 0.0
    %126 = vmatpush1.msra.mxu0 0.0
    %127 = vmatprep.subr.mxu0 0.0
    %128 = vmatpush1.msra.mxu0 0.0
    %129 = vmatprep.subr.mxu0 0.0
    %130 = vmatpush1.msra.mxu0 0.0
    %131 = vmatprep.subr.mxu0 0.0
    %132 = vmatpush1.msra.mxu0 0.0
    %133 = vmatprep.subr.mxu0 0.0
    %134 = vmatpush1.msra.mxu0 0.0
    %135 = vmatprep.subr.mxu0 0.0
    %136 = vmatpush1.msra.mxu0 0.0
    %137 = vmatprep.subr.mxu0 0.0
    %138 = vmatpush1.msra.mxu0 0.0
    %139 = vmatprep.subr.mxu0 0.0
    %140 = vmatpush1.msra.mxu0 0.0
    %141 = vmatprep.subr.mxu0 0.0
    %142 = vmatpush1.msra.mxu0 0.0
    %143 = vmatprep.subr.mxu0 0.0
    %144 = vmatpush1.msra.mxu0 0.0
    %145 = vmatprep.subr.mxu0 0.0
    %146 = vmatpush1.msra.mxu0 0.0
    %147 = vmatprep.subr.mxu0 0.0
    %148 = vmatpush1.msra.mxu0 0.0
    %149 = vmatprep.subr.mxu0 0.0
    %150 = vmatpush1.msra.mxu0 0.0
    %151 = vmatprep.subr.mxu0 0.0
    %152 = vmatpush1.msra.mxu0 0.0
    %153 = vmatprep.subr.mxu0 0.0
    %154 = vmatpush1.msra.mxu0 0.0
    %155 = vmatprep.subr.mxu0 0.0
    %156 = vmatpush1.msra.mxu0 0.0
    %157 = vmatprep.subr.mxu0 0.0
    %158 = vmatpush1.msra.mxu0 0.0
    %159 = vmatprep.subr.mxu0 0.0
    %160 = vmatpush1.msra.mxu0 0.0
    %161 = vmatprep.subr.mxu0 0.0
    %162 = vmatpush1.msra.mxu0 0.0
    %163 = vmatprep.subr.mxu0 0.0
    %164 = vmatpush1.msra.mxu0 0.0
    %165 = vmatprep.mubr.f32.mxu0 0.0
    %166 = vmatmul.mubr.f32.gmra.mrb[0].mxu0 %v99
    %v167 = vpop.f32.mrb[0].mxu0
    %v168 = vadd.f32 0.0, %v167
    %v169 = vpop.f32.mrb[0].mxu0
    %170 = vdwg.mxu0
    %v171 = vld [vmem:[%s5] sm:$0xff]
    %v172 = vld [vmem:[%s5 + $0x8] sm:$0xff]
    %v173 = vld [vmem:[%s5 + $0x10] sm:$0xff]
    %v174 = vld [vmem:[%s5 + $0x18] sm:$0xff]
    %175 = vmatprep.subr.mxu0 0.0
    %176 = vmatpush1.msra.mxu0 %v171
    %177 = vmatprep.subr.mxu0 0.0
    %178 = vmatpush1.msra.mxu0 %v172
    %179 = vmatprep.subr.mxu0 0.0
    %180 = vmatpush1.msra.mxu0 %v173
    %181 = vmatprep.subr.mxu0 0.0
    %182 = vmatpush1.msra.mxu0 %v174
    %183 = vmatprep.subr.mxu0 0.0
    %184 = vmatpush1.msra.mxu0 0.0
    %185 = vmatprep.subr.mxu0 0.0
    %186 = vmatpush1.msra.mxu0 0.0
    %187 = vmatprep.subr.mxu0 0.0
    %188 = vmatpush1.msra.mxu0 0.0
    %189 = vmatprep.subr.mxu0 0.0
    %190 = vmatpush1.msra.mxu0 0.0
    %191 = vmatprep.subr.mxu0 0.0
    %192 = vmatpush1.msra.mxu0 0.0
    %193 = vmatprep.subr.mxu0 0.0
    %194 = vmatpush1.msra.mxu0 0.0
    %195 = vmatprep.subr.mxu0 0.0
    %196 = vmatpush1.msra.mxu0 0.0
    %197 = vmatprep.subr.mxu0 0.0
    %198 = vmatpush1.msra.mxu0 0.0
    %199 = vmatprep.subr.mxu0 0.0
    %200 = vmatpush1.msra.mxu0 0.0
    %201 = vmatprep.subr.mxu0 0.0
    %202 = vmatpush1.msra.mxu0 0.0
    %203 = vmatprep.subr.mxu0 0.0
    %204 = vmatpush1.msra.mxu0 0.0
    %205 = vmatprep.subr.mxu0 0.0
    %206 = vmatpush1.msra.mxu0 0.0
    %207 = vmatprep.subr.mxu0 0.0
    %208 = vmatpush1.msra.mxu0 0.0
    %209 = vmatprep.subr.mxu0 0.0
    %210 = vmatpush1.msra.mxu0 0.0
    %211 = vmatprep.subr.mxu0 0.0
    %212 = vmatpush1.msra.mxu0 0.0
    %213 = vmatprep.subr.mxu0 0.0
    %214 = vmatpush1.msra.mxu0 0.0
    %215 = vmatprep.subr.mxu0 0.0
    %216 = vmatpush1.msra.mxu0 0.0
    %217 = vmatprep.subr.mxu0 0.0
    %218 = vmatpush1.msra.mxu0 0.0
    %219 = vmatprep.subr.mxu0 0.0
    %220 = vmatpush1.msra.mxu0 0.0
    %221 = vmatprep.subr.mxu0 0.0
    %222 = vmatpush1.msra.mxu0 0.0
    %223 = vmatprep.subr.mxu0 0.0
    %224 = vmatpush1.msra.mxu0 0.0
    %225 = vmatprep.subr.mxu0 0.0
    %226 = vmatpush1.msra.mxu0 0.0
    %227 = vmatprep.subr.mxu0 0.0
    %228 = vmatpush1.msra.mxu0 0.0
    %229 = vmatprep.subr.mxu0 0.0
    %230 = vmatpush1.msra.mxu0 0.0
    %231 = vmatprep.subr.mxu0 0.0
    %232 = vmatpush1.msra.mxu0 0.0
    %233 = vmatprep.subr.mxu0 0.0
    %234 = vmatpush1.msra.mxu0 0.0
    %235 = vmatprep.subr.mxu0 0.0
    %236 = vmatpush1.msra.mxu0 0.0
    %237 = vmatprep.subr.mxu0 0.0
    %238 = vmatpush1.msra.mxu0 0.0
    %239 = vmatprep.mubr.f32.mxu0 0.0
    %240 = vmatmul.mubr.f32.gmra.mrb[0].mxu0 %v99
    %v241 = vpop.f32.mrb[0].mxu0
    %v242 = vadd.f32 0.0, %v241
    %v243 = vpop.f32.mrb[0].mxu0
    %244 = vdwg.mxu0
    %v245 = vld [vmem:[%s6] sm:$0xff]
    %v246 = vld [vmem:[%s6 + $0x8] sm:$0xff]
    %v247 = vld [vmem:[%s6 + $0x10] sm:$0xff]
    %v248 = vld [vmem:[%s6 + $0x18] sm:$0xff]
    %249 = vmatprep.subr.mxu0 0.0
    %250 = vmatpush1.msra.mxu0 %v245
    %251 = vmatprep.subr.mxu0 0.0
    %252 = vmatpush1.msra.mxu0 %v246
    %253 = vmatprep.subr.mxu0 0.0
    %254 = vmatpush1.msra.mxu0 %v247
    %255 = vmatprep.subr.mxu0 0.0
    %256 = vmatpush1.msra.mxu0 %v248
    %257 = vmatprep.subr.mxu0 0.0
    %258 = vmatpush1.msra.mxu0 0.0
    %259 = vmatprep.subr.mxu0 0.0
    %260 = vmatpush1.msra.mxu0 0.0
    %261 = vmatprep.subr.mxu0 0.0
    %262 = vmatpush1.msra.mxu0 0.0
    %263 = vmatprep.subr.mxu0 0.0
    %264 = vmatpush1.msra.mxu0 0.0
    %265 = vmatprep.subr.mxu0 0.0
    %266 = vmatpush1.msra.mxu0 0.0
    %267 = vmatprep.subr.mxu0 0.0
    %268 = vmatpush1.msra.mxu0 0.0
    %269 = vmatprep.subr.mxu0 0.0
    %270 = vmatpush1.msra.mxu0 0.0
    %271 = vmatprep.subr.mxu0 0.0
    %272 = vmatpush1.msra.mxu0 0.0
    %273 = vmatprep.subr.mxu0 0.0
    %274 = vmatpush1.msra.mxu0 0.0
    %275 = vmatprep.subr.mxu0 0.0
    %276 = vmatpush1.msra.mxu0 0.0
    %277 = vmatprep.subr.mxu0 0.0
    %278 = vmatpush1.msra.mxu0 0.0
    %279 = vmatprep.subr.mxu0 0.0
    %280 = vmatpush1.msra.mxu0 0.0
    %281 = vmatprep.subr.mxu0 0.0
    %282 = vmatpush1.msra.mxu0 0.0
    %283 = vmatprep.subr.mxu0 0.0
    %284 = vmatpush1.msra.mxu0 0.0
    %285 = vmatprep.subr.mxu0 0.0
    %286 = vmatpush1.msra.mxu0 0.0
    %287 = vmatprep.subr.mxu0 0.0
    %288 = vmatpush1.msra.mxu0 0.0
    %289 = vmatprep.subr.mxu0 0.0
    %290 = vmatpush1.msra.mxu0 0.0
    %291 = vmatprep.subr.mxu0 0.0
    %292 = vmatpush1.msra.mxu0 0.0
    %293 = vmatprep.subr.mxu0 0.0
    %294 = vmatpush1.msra.mxu0 0.0
    %295 = vmatprep.subr.mxu0 0.0
    %296 = vmatpush1.msra.mxu0 0.0
    %297 = vmatprep.subr.mxu0 0.0
    %298 = vmatpush1.msra.mxu0 0.0
    %299 = vmatprep.subr.mxu0 0.0
    %300 = vmatpush1.msra.mxu0 0.0
    %301 = vmatprep.subr.mxu0 0.0
    %302 = vmatpush1.msra.mxu0 0.0
    %303 = vmatprep.subr.mxu0 0.0
    %304 = vmatpush1.msra.mxu0 0.0
    %305 = vmatprep.subr.mxu0 0.0
    %306 = vmatpush1.msra.mxu0 0.0
    %307 = vmatprep.subr.mxu0 0.0
    %308 = vmatpush1.msra.mxu0 0.0
    %309 = vmatprep.subr.mxu0 0.0
    %310 = vmatpush1.msra.mxu0 0.0
    %311 = vmatprep.subr.mxu0 0.0
    %312 = vmatpush1.msra.mxu0 0.0
    %313 = vmatprep.mubr.f32.mxu0 0.0
    %314 = vmatmul.mubr.f32.gmra.mrb[0].mxu0 %v99
    %v315 = vpop.f32.mrb[0].mxu0
    %v316 = vadd.f32 0.0, %v315
    %v317 = vpop.f32.mrb[0].mxu0
    %318 = vdwg.mxu0
    %vm319 = vcmask 64512
    %v321 = vsel %vm319, %v168, 0
    %v324 = vsel %vm319, %v242, 0
    %326 = vmatprep.subr.mxu0 0.0
    %327 = vmatpush1.xpose.msra.mxu0 %v324
    %328 = vmatprep.subr.mxu0 0.0
    %329 = vmatpush1.xpose.msra.mxu0 0.0
    %330 = vmatprep.subr.mxu0 0.0
    %331 = vmatpush1.xpose.msra.mxu0 0.0
    %332 = vmatprep.subr.mxu0 0.0
    %333 = vmatpush1.xpose.msra.mxu0 0.0
    %334 = vmatprep.subr.mxu0 0.0
    %335 = vmatpush1.xpose.msra.mxu0 0.0
    %336 = vmatprep.subr.mxu0 0.0
    %337 = vmatpush1.xpose.msra.mxu0 0.0
    %338 = vmatprep.subr.mxu0 0.0
    %339 = vmatpush1.xpose.msra.mxu0 0.0
    %340 = vmatprep.subr.mxu0 0.0
    %341 = vmatpush1.xpose.msra.mxu0 0.0
    %342 = vmatprep.subr.mxu0 0.0
    %343 = vmatpush1.xpose.msra.mxu0 0.0
    %344 = vmatprep.subr.mxu0 0.0
    %345 = vmatpush1.xpose.msra.mxu0 0.0
    %346 = vmatprep.subr.mxu0 0.0
    %347 = vmatpush1.xpose.msra.mxu0 0.0
    %348 = vmatprep.subr.mxu0 0.0
    %349 = vmatpush1.xpose.msra.mxu0 0.0
    %350 = vmatprep.subr.mxu0 0.0
    %351 = vmatpush1.xpose.msra.mxu0 0.0
    %352 = vmatprep.subr.mxu0 0.0
    %353 = vmatpush1.xpose.msra.mxu0 0.0
    %354 = vmatprep.subr.mxu0 0.0
    %355 = vmatpush1.xpose.msra.mxu0 0.0
    %356 = vmatprep.subr.mxu0 0.0
    %357 = vmatpush1.xpose.msra.mxu0 0.0
    %358 = vmatprep.subr.mxu0 0.0
    %359 = vmatpush1.xpose.msra.mxu0 0.0
    %360 = vmatprep.subr.mxu0 0.0
    %361 = vmatpush1.xpose.msra.mxu0 0.0
    %362 = vmatprep.subr.mxu0 0.0
    %363 = vmatpush1.xpose.msra.mxu0 0.0
    %364 = vmatprep.subr.mxu0 0.0
    %365 = vmatpush1.xpose.msra.mxu0 0.0
    %366 = vmatprep.subr.mxu0 0.0
    %367 = vmatpush1.xpose.msra.mxu0 0.0
    %368 = vmatprep.subr.mxu0 0.0
    %369 = vmatpush1.xpose.msra.mxu0 0.0
    %370 = vmatprep.subr.mxu0 0.0
    %371 = vmatpush1.xpose.msra.mxu0 0.0
    %372 = vmatprep.subr.mxu0 0.0
    %373 = vmatpush1.xpose.msra.mxu0 0.0
    %374 = vmatprep.subr.mxu0 0.0
    %375 = vmatpush1.xpose.msra.mxu0 0.0
    %376 = vmatprep.subr.mxu0 0.0
    %377 = vmatpush1.xpose.msra.mxu0 0.0
    %378 = vmatprep.subr.mxu0 0.0
    %379 = vmatpush1.xpose.msra.mxu0 0.0
    %380 = vmatprep.subr.mxu0 0.0
    %381 = vmatpush1.xpose.msra.mxu0 0.0
    %382 = vmatprep.subr.mxu0 0.0
    %383 = vmatpush1.xpose.msra.mxu0 0.0
    %384 = vmatprep.subr.mxu0 0.0
    %385 = vmatpush1.xpose.msra.mxu0 0.0
    %386 = vmatprep.subr.mxu0 0.0
    %387 = vmatpush1.xpose.msra.mxu0 0.0
    %388 = vmatprep.subr.mxu0 0.0
    %389 = vmatpush1.xpose.msra.mxu0 0.0
    %390 = vmatprep.mubr.f32.mxu0 0.0
    %391 = vmatmul.mubr.f32.gmra.mrb[0].mxu0 %v321
    %v392 = vpop.f32.mrb[0].mxu0
    %v393 = vadd.f32 0.0, %v392
    %v394 = vpop.f32.mrb[0].mxu0
    %395 = vdwg.mxu0
    %v396 = vsel %vm319, %v393, -inf
    %397 = vmax.xlane.f32.xlu0 %v396
    %v398 = vpop.xlane.xlu0 %397
    %v399 = vsub.f32 %v393, %v398
    %v400 = vmul.f32 %v399, 1.442695
    %v401 = vpow.pop %v400
    %v402 = vsel %vm319, %v401, 0.0
    %403 = vadd.xlane.f32.xlu0 %v402
    %v404 = vpop.xlane.xlu0 %403
    %v405 = vrcp.pop %v404
    %v406 = vmul.f32 %v401, %v405
    %v408 = vsel %vm319, %v406, 0
    %410 = vmatprep.subr.mxu0 0.0
    %411 = vmatpush1.msra.mxu0 %v316
    %412 = vmatprep.subr.mxu0 0.0
    %413 = vmatpush1.msra.mxu0 0.0
    %414 = vmatprep.subr.mxu0 0.0
    %415 = vmatpush1.msra.mxu0 0.0
    %416 = vmatprep.subr.mxu0 0.0
    %417 = vmatpush1.msra.mxu0 0.0
    %418 = vmatprep.subr.mxu0 0.0
    %419 = vmatpush1.msra.mxu0 0.0
    %420 = vmatprep.subr.mxu0 0.0
    %421 = vmatpush1.msra.mxu0 0.0
    %422 = vmatprep.subr.mxu0 0.0
    %423 = vmatpush1.msra.mxu0 0.0
    %424 = vmatprep.subr.mxu0 0.0
    %425 = vmatpush1.msra.mxu0 0.0
    %426 = vmatprep.subr.mxu0 0.0
    %427 = vmatpush1.msra.mxu0 0.0
    %428 = vmatprep.subr.mxu0 0.0
    %429 = vmatpush1.msra.mxu0 0.0
    %430 = vmatprep.subr.mxu0 0.0
    %431 = vmatpush1.msra.mxu0 0.0
    %432 = vmatprep.subr.mxu0 0.0
    %433 = vmatpush1.msra.mxu0 0.0
    %434 = vmatprep.subr.mxu0 0.0
    %435 = vmatpush1.msra.mxu0 0.0
    %436 = vmatprep.subr.mxu0 0.0
    %437 = vmatpush1.msra.mxu0 0.0
    %438 = vmatprep.subr.mxu0 0.0
    %439 = vmatpush1.msra.mxu0 0.0
    %440 = vmatprep.subr.mxu0 0.0
    %441 = vmatpush1.msra.mxu0 0.0
    %442 = vmatprep.subr.mxu0 0.0
    %443 = vmatpush1.msra.mxu0 0.0
    %444 = vmatprep.subr.mxu0 0.0
    %445 = vmatpush1.msra.mxu0 0.0
    %446 = vmatprep.subr.mxu0 0.0
    %447 = vmatpush1.msra.mxu0 0.0
    %448 = vmatprep.subr.mxu0 0.0
    %449 = vmatpush1.msra.mxu0 0.0
    %450 = vmatprep.subr.mxu0 0.0
    %451 = vmatpush1.msra.mxu0 0.0
    %452 = vmatprep.subr.mxu0 0.0
    %453 = vmatpush1.msra.mxu0 0.0
    %454 = vmatprep.subr.mxu0 0.0
    %455 = vmatpush1.msra.mxu0 0.0
    %456 = vmatprep.subr.mxu0 0.0
    %457 = vmatpush1.msra.mxu0 0.0
    %458 = vmatprep.subr.mxu0 0.0
    %459 = vmatpush1.msra.mxu0 0.0
    %460 = vmatprep.subr.mxu0 0.0
    %461 = vmatpush1.msra.mxu0 0.0
    %462 = vmatprep.subr.mxu0 0.0
    %463 = vmatpush1.msra.mxu0 0.0
    %464 = vmatprep.subr.mxu0 0.0
    %465 = vmatpush1.msra.mxu0 0.0
    %466 = vmatprep.subr.mxu0 0.0
    %467 = vmatpush1.msra.mxu0 0.0
    %468 = vmatprep.subr.mxu0 0.0
    %469 = vmatpush1.msra.mxu0 0.0
    %470 = vmatprep.subr.mxu0 0.0
    %471 = vmatpush1.msra.mxu0 0.0
    %472 = vmatprep.subr.mxu0 0.0
    %473 = vmatpush1.msra.mxu0 0.0
    %474 = vmatprep.mubr.f32.mxu0 0.0
    %475 = vmatmul.mubr.f32.gmra.mrb[0].mxu0 %v408
    %v476 = vpop.f32.mrb[0].mxu0
    %v477 = vadd.f32 0.0, %v476
    %v478 = vpop.f32.mrb[0].mxu0
    %479 = vdwg.mxu0
    %v480 = vld [vmem:[%s7] sm:$0xff]
    %s481 = scalar_lea.vmem %s4, 32
    %v482 = vld [vmem:[%s481] sm:$0xff]
    %v483 = vld [vmem:[%s481 + $0x8] sm:$0xff]
    %v484 = vld [vmem:[%s481 + $0x10] sm:$0xff]
    %v485 = vld [vmem:[%s481 + $0x18] sm:$0xff]
    %486 = vmatprep.subr.mxu0 0.0
    %487 = vmatpush1.msra.mxu0 %v482
    %488 = vmatprep.subr.mxu0 0.0
    %489 = vmatpush1.msra.mxu0 %v483
    %490 = vmatprep.subr.mxu0 0.0
    %491 = vmatpush1.msra.mxu0 %v484
    %492 = vmatprep.subr.mxu0 0.0
    %493 = vmatpush1.msra.mxu0 %v485
    %494 = vmatprep.subr.mxu0 0.0
    %495 = vmatpush1.msra.mxu0 0.0
    %496 = vmatprep.subr.mxu0 0.0
    %497 = vmatpush1.msra.mxu0 0.0
    %498 = vmatprep.subr.mxu0 0.0
    %499 = vmatpush1.msra.mxu0 0.0
    %500 = vmatprep.subr.mxu0 0.0
    %501 = vmatpush1.msra.mxu0 0.0
    %502 = vmatprep.subr.mxu0 0.0
    %503 = vmatpush1.msra.mxu0 0.0
    %504 = vmatprep.subr.mxu0 0.0
    %505 = vmatpush1.msra.mxu0 0.0
    %506 = vmatprep.subr.mxu0 0.0
    %507 = vmatpush1.msra.mxu0 0.0
    %508 = vmatprep.subr.mxu0 0.0
    %509 = vmatpush1.msra.mxu0 0.0
    %510 = vmatprep.subr.mxu0 0.0
    %511 = vmatpush1.msra.mxu0 0.0
    %512 = vmatprep.subr.mxu0 0.0
    %513 = vmatpush1.msra.mxu0 0.0
    %514 = vmatprep.subr.mxu0 0.0
    %515 = vmatpush1.msra.mxu0 0.0
    %516 = vmatprep.subr.mxu0 0.0
    %517 = vmatpush1.msra.mxu0 0.0
    %518 = vmatprep.subr.mxu0 0.0
    %519 = vmatpush1.msra.mxu0 0.0
    %520 = vmatprep.subr.mxu0 0.0
    %521 = vmatpush1.msra.mxu0 0.0
    %522 = vmatprep.subr.mxu0 0.0
    %523 = vmatpush1.msra.mxu0 0.0
    %524 = vmatprep.subr.mxu0 0.0
    %525 = vmatpush1.msra.mxu0 0.0
    %526 = vmatprep.subr.mxu0 0.0
    %527 = vmatpush1.msra.mxu0 0.0
    %528 = vmatprep.subr.mxu0 0.0
    %529 = vmatpush1.msra.mxu0 0.0
    %530 = vmatprep.subr.mxu0 0.0
    %531 = vmatpush1.msra.mxu0 0.0
    %532 = vmatprep.subr.mxu0 0.0
    %533 = vmatpush1.msra.mxu0 0.0
    %534 = vmatprep.subr.mxu0 0.0
    %535 = vmatpush1.msra.mxu0 0.0
    %536 = vmatprep.subr.mxu0 0.0
    %537 = vmatpush1.msra.mxu0 0.0
    %538 = vmatprep.subr.mxu0 0.0
    %539 = vmatpush1.msra.mxu0 0.0
    %540 = vmatprep.subr.mxu0 0.0
    %541 = vmatpush1.msra.mxu0 0.0
    %542 = vmatprep.subr.mxu0 0.0
    %543 = vmatpush1.msra.mxu0 0.0
    %544 = vmatprep.subr.mxu0 0.0
    %545 = vmatpush1.msra.mxu0 0.0
    %546 = vmatprep.subr.mxu0 0.0
    %547 = vmatpush1.msra.mxu0 0.0
    %548 = vmatprep.subr.mxu0 0.0
    %549 = vmatpush1.msra.mxu0 0.0
    %550 = vmatprep.mubr.f32.mxu0 0.0
    %551 = vmatmul.mubr.f32.gmra.mrb[0].mxu0 %v99
    %v552 = vpop.f32.mrb[0].mxu0
    %v553 = vadd.f32 0.0, %v552
    %v554 = vpop.f32.mrb[0].mxu0
    %555 = vdwg.mxu0
    %s556 = scalar_lea.vmem %s5, 32
    %v557 = vld [vmem:[%s556] sm:$0xff]
    %v558 = vld [vmem:[%s556 + $0x8] sm:$0xff]
    %v559 = vld [vmem:[%s556 + $0x10] sm:$0xff]
    %v560 = vld [vmem:[%s556 + $0x18] sm:$0xff]
    %561 = vmatprep.subr.mxu0 0.0
    %562 = vmatpush1.msra.mxu0 %v557
    %563 = vmatprep.subr.mxu0 0.0
    %564 = vmatpush1.msra.mxu0 %v558
    %565 = vmatprep.subr.mxu0 0.0
    %566 = vmatpush1.msra.mxu0 %v559
    %567 = vmatprep.subr.mxu0 0.0
    %568 = vmatpush1.msra.mxu0 %v560
    %569 = vmatprep.subr.mxu0 0.0
    %570 = vmatpush1.msra.mxu0 0.0
    %571 = vmatprep.subr.mxu0 0.0
    %572 = vmatpush1.msra.mxu0 0.0
    %573 = vmatprep.subr.mxu0 0.0
    %574 = vmatpush1.msra.mxu0 0.0
    %575 = vmatprep.subr.mxu0 0.0
    %576 = vmatpush1.msra.mxu0 0.0
    %577 = vmatprep.subr.mxu0 0.0
    %578 = vmatpush1.msra.mxu0 0.0
    %579 = vmatprep.subr.mxu0 0.0
    %580 = vmatpush1.msra.mxu0 0.0
    %581 = vmatprep.subr.mxu0 0.0
    %582 = vmatpush1.msra.mxu0 0.0
    %583 = vmatprep.subr.mxu0 0.0
    %584 = vmatpush1.msra.mxu0 0.0
    %585 = vmatprep.subr.mxu0 0.0
    %586 = vmatpush1.msra.mxu0 0.0
    %587 = vmatprep.subr.mxu0 0.0
    %588 = vmatpush1.msra.mxu0 0.0
    %589 = vmatprep.subr.mxu0 0.0
    %590 = vmatpush1.msra.mxu0 0.0
    %591 = vmatprep.subr.mxu0 0.0
    %592 = vmatpush1.msra.mxu0 0.0
    %593 = vmatprep.subr.mxu0 0.0
    %594 = vmatpush1.msra.mxu0 0.0
    %595 = vmatprep.subr.mxu0 0.0
    %596 = vmatpush1.msra.mxu0 0.0
    %597 = vmatprep.subr.mxu0 0.0
    %598 = vmatpush1.msra.mxu0 0.0
    %599 = vmatprep.subr.mxu0 0.0
    %600 = vmatpush1.msra.mxu0 0.0
    %601 = vmatprep.subr.mxu0 0.0
    %602 = vmatpush1.msra.mxu0 0.0
    %603 = vmatprep.subr.mxu0 0.0
    %604 = vmatpush1.msra.mxu0 0.0
    %605 = vmatprep.subr.mxu0 0.0
    %606 = vmatpush1.msra.mxu0 0.0
    %607 = vmatprep.subr.mxu0 0.0
    %608 = vmatpush1.msra.mxu0 0.0
    %609 = vmatprep.subr.mxu0 0.0
    %610 = vmatpush1.msra.mxu0 0.0
    %611 = vmatprep.subr.mxu0 0.0
    %612 = vmatpush1.msra.mxu0 0.0
    %613 = vmatprep.subr.mxu0 0.0
    %614 = vmatpush1.msra.mxu0 0.0
    %615 = vmatprep.subr.mxu0 0.0
    %616 = vmatpush1.msra.mxu0 0.0
    %617 = vmatprep.subr.mxu0 0.0
    %618 = vmatpush1.msra.mxu0 0.0
    %619 = vmatprep.subr.mxu0 0.0
    %620 = vmatpush1.msra.mxu0 0.0
    %621 = vmatprep.subr.mxu0 0.0
    %622 = vmatpush1.msra.mxu0 0.0
    %623 = vmatprep.subr.mxu0 0.0
    %624 = vmatpush1.msra.mxu0 0.0
    %625 = vmatprep.mubr.f32.mxu0 0.0
    %626 = vmatmul.mubr.f32.gmra.mrb[0].mxu0 %v99
    %v627 = vpop.f32.mrb[0].mxu0
    %v628 = vadd.f32 0.0, %v627
    %v629 = vpop.f32.mrb[0].mxu0
    %630 = vdwg.mxu0
    %s631 = scalar_lea.vmem %s6, 32
    %v632 = vld [vmem:[%s631] sm:$0xff]
    %v633 = vld [vmem:[%s631 + $0x8] sm:$0xff]
    %v634 = vld [vmem:[%s631 + $0x10] sm:$0xff]
    %v635 = vld [vmem:[%s631 + $0x18] sm:$0xff]
    %636 = vmatprep.subr.mxu0 0.0
    %637 = vmatpush1.msra.mxu0 %v632
    %638 = vmatprep.subr.mxu0 0.0
    %639 = vmatpush1.msra.mxu0 %v633
    %640 = vmatprep.subr.mxu0 0.0
    %641 = vmatpush1.msra.mxu0 %v634
    %642 = vmatprep.subr.mxu0 0.0
    %643 = vmatpush1.msra.mxu0 %v635
    %644 = vmatprep.subr.mxu0 0.0
    %645 = vmatpush1.msra.mxu0 0.0
    %646 = vmatprep.subr.mxu0 0.0
    %647 = vmatpush1.msra.mxu0 0.0
    %648 = vmatprep.subr.mxu0 0.0
    %649 = vmatpush1.msra.mxu0 0.0
    %650 = vmatprep.subr.mxu0 0.0
    %651 = vmatpush1.msra.mxu0 0.0
    %652 = vmatprep.subr.mxu0 0.0
    %653 = vmatpush1.msra.mxu0 0.0
    %654 = vmatprep.subr.mxu0 0.0
    %655 = vmatpush1.msra.mxu0 0.0
    %656 = vmatprep.subr.mxu0 0.0
    %657 = vmatpush1.msra.mxu0 0.0
    %658 = vmatprep.subr.mxu0 0.0
    %659 = vmatpush1.msra.mxu0 0.0
    %660 = vmatprep.subr.mxu0 0.0
    %661 = vmatpush1.msra.mxu0 0.0
    %662 = vmatprep.subr.mxu0 0.0
    %663 = vmatpush1.msra.mxu0 0.0
    %664 = vmatprep.subr.mxu0 0.0
    %665 = vmatpush1.msra.mxu0 0.0
    %666 = vmatprep.subr.mxu0 0.0
    %667 = vmatpush1.msra.mxu0 0.0
    %668 = vmatprep.subr.mxu0 0.0
    %669 = vmatpush1.msra.mxu0 0.0
    %670 = vmatprep.subr.mxu0 0.0
    %671 = vmatpush1.msra.mxu0 0.0
    %672 = vmatprep.subr.mxu0 0.0
    %673 = vmatpush1.msra.mxu0 0.0
    %674 = vmatprep.subr.mxu0 0.0
    %675 = vmatpush1.msra.mxu0 0.0
    %676 = vmatprep.subr.mxu0 0.0
    %677 = vmatpush1.msra.mxu0 0.0
    %678 = vmatprep.subr.mxu0 0.0
    %679 = vmatpush1.msra.mxu0 0.0
    %680 = vmatprep.subr.mxu0 0.0
    %681 = vmatpush1.msra.mxu0 0.0
    %682 = vmatprep.subr.mxu0 0.0
    %683 = vmatpush1.msra.mxu0 0.0
    %684 = vmatprep.subr.mxu0 0.0
    %685 = vmatpush1.msra.mxu0 0.0
    %686 = vmatprep.subr.mxu0 0.0
    %687 = vmatpush1.msra.mxu0 0.0
    %688 = vmatprep.subr.mxu0 0.0
    %689 = vmatpush1.msra.mxu0 0.0
    %690 = vmatprep.subr.mxu0 0.0
    %691 = vmatpush1.msra.mxu0 0.0
    %692 = vmatprep.subr.mxu0 0.0
    %693 = vmatpush1.msra.mxu0 0.0
    %694 = vmatprep.subr.mxu0 0.0
    %695 = vmatpush1.msra.mxu0 0.0
    %696 = vmatprep.subr.mxu0 0.0
    %697 = vmatpush1.msra.mxu0 0.0
    %698 = vmatprep.subr.mxu0 0.0
    %699 = vmatpush1.msra.mxu0 0.0
    %700 = vmatprep.mubr.f32.mxu0 0.0
    %701 = vmatmul.mubr.f32.gmra.mrb[0].mxu0 %v99
    %v702 = vpop.f32.mrb[0].mxu0
    %v703 = vadd.f32 0.0, %v702
    %v704 = vpop.f32.mrb[0].mxu0
    %705 = vdwg.mxu0
    %v707 = vsel %vm319, %v553, 0
    %v710 = vsel %vm319, %v628, 0
    %712 = vmatprep.subr.mxu0 0.0
    %713 = vmatpush1.xpose.msra.mxu0 %v710
    %714 = vmatprep.subr.mxu0 0.0
    %715 = vmatpush1.xpose.msra.mxu0 0.0
    %716 = vmatprep.subr.mxu0 0.0
    %717 = vmatpush1.xpose.msra.mxu0 0.0
    %718 = vmatprep.subr.mxu0 0.0
    %719 = vmatpush1.xpose.msra.mxu0 0.0
    %720 = vmatprep.subr.mxu0 0.0
    %721 = vmatpush1.xpose.msra.mxu0 0.0
    %722 = vmatprep.subr.mxu0 0.0
    %723 = vmatpush1.xpose.msra.mxu0 0.0
    %724 = vmatprep.subr.mxu0 0.0
    %725 = vmatpush1.xpose.msra.mxu0 0.0
    %726 = vmatprep.subr.mxu0 0.0
    %727 = vmatpush1.xpose.msra.mxu0 0.0
    %728 = vmatprep.subr.mxu0 0.0
    %729 = vmatpush1.xpose.msra.mxu0 0.0
    %730 = vmatprep.subr.mxu0 0.0
    %731 = vmatpush1.xpose.msra.mxu0 0.0
    %732 = vmatprep.subr.mxu0 0.0
    %733 = vmatpush1.xpose.msra.mxu0 0.0
    %734 = vmatprep.subr.mxu0 0.0
    %735 = vmatpush1.xpose.msra.mxu0 0.0
    %736 = vmatprep.subr.mxu0 0.0
    %737 = vmatpush1.xpose.msra.mxu0 0.0
    %738 = vmatprep.subr.mxu0 0.0
    %739 = vmatpush1.xpose.msra.mxu0 0.0
    %740 = vmatprep.subr.mxu0 0.0
    %741 = vmatpush1.xpose.msra.mxu0 0.0
    %742 = vmatprep.subr.mxu0 0.0
    %743 = vmatpush1.xpose.msra.mxu0 0.0
    %744 = vmatprep.subr.mxu0 0.0
    %745 = vmatpush1.xpose.msra.mxu0 0.0
    %746 = vmatprep.subr.mxu0 0.0
    %747 = vmatpush1.xpose.msra.mxu0 0.0
    %748 = vmatprep.subr.mxu0 0.0
    %749 = vmatpush1.xpose.msra.mxu0 0.0
    %750 = vmatprep.subr.mxu0 0.0
    %751 = vmatpush1.xpose.msra.mxu0 0.0
    %752 = vmatprep.subr.mxu0 0.0
    %753 = vmatpush1.xpose.msra.mxu0 0.0
    %754 = vmatprep.subr.mxu0 0.0
    %755 = vmatpush1.xpose.msra.mxu0 0.0
    %756 = vmatprep.subr.mxu0 0.0
    %757 = vmatpush1.xpose.msra.mxu0 0.0
    %758 = vmatprep.subr.mxu0 0.0
    %759 = vmatpush1.xpose.msra.mxu0 0.0
    %760 = vmatprep.subr.mxu0 0.0
    %761 = vmatpush1.xpose.msra.mxu0 0.0
    %762 = vmatprep.subr.mxu0 0.0
    %763 = vmatpush1.xpose.msra.mxu0 0.0
    %764 = vmatprep.subr.mxu0 0.0
    %765 = vmatpush1.xpose.msra.mxu0 0.0
    %766 = vmatprep.subr.mxu0 0.0
    %767 = vmatpush1.xpose.msra.mxu0 0.0
    %768 = vmatprep.subr.mxu0 0.0
    %769 = vmatpush1.xpose.msra.mxu0 0.0
    %770 = vmatprep.subr.mxu0 0.0
    %771 = vmatpush1.xpose.msra.mxu0 0.0
    %772 = vmatprep.subr.mxu0 0.0
    %773 = vmatpush1.xpose.msra.mxu0 0.0
    %774 = vmatprep.subr.mxu0 0.0
    %775 = vmatpush1.xpose.msra.mxu0 0.0
    %776 = vmatprep.mubr.f32.mxu0 0.0
    %777 = vmatmul.mubr.f32.gmra.mrb[0].mxu0 %v707
    %v778 = vpop.f32.mrb[0].mxu0
    %v779 = vadd.f32 0.0, %v778
    %v780 = vpop.f32.mrb[0].mxu0
    %781 = vdwg.mxu0
    %v782 = vsel %vm319, %v779, -inf
    %783 = vmax.xlane.f32.xlu0 %v782
    %v784 = vpop.xlane.xlu0 %783
    %v785 = vsub.f32 %v779, %v784
    %v786 = vmul.f32 %v785, 1.442695
    %v787 = vpow.pop %v786
    %v788 = vsel %vm319, %v787, 0.0
    %789 = vadd.xlane.f32.xlu0 %v788
    %v790 = vpop.xlane.xlu0 %789
    %v791 = vrcp.pop %v790
    %v792 = vmul.f32 %v787, %v791
    %v794 = vsel %vm319, %v792, 0
    %796 = vmatprep.subr.mxu0 0.0
    %797 = vmatpush1.msra.mxu0 %v703
    %798 = vmatprep.subr.mxu0 0.0
    %799 = vmatpush1.msra.mxu0 0.0
    %800 = vmatprep.subr.mxu0 0.0
    %801 = vmatpush1.msra.mxu0 0.0
    %802 = vmatprep.subr.mxu0 0.0
    %803 = vmatpush1.msra.mxu0 0.0
    %804 = vmatprep.subr.mxu0 0.0
    %805 = vmatpush1.msra.mxu0 0.0
    %806 = vmatprep.subr.mxu0 0.0
    %807 = vmatpush1.msra.mxu0 0.0
    %808 = vmatprep.subr.mxu0 0.0
    %809 = vmatpush1.msra.mxu0 0.0
    %810 = vmatprep.subr.mxu0 0.0
    %811 = vmatpush1.msra.mxu0 0.0
    %812 = vmatprep.subr.mxu0 0.0
    %813 = vmatpush1.msra.mxu0 0.0
    %814 = vmatprep.subr.mxu0 0.0
    %815 = vmatpush1.msra.mxu0 0.0
    %816 = vmatprep.subr.mxu0 0.0
    %817 = vmatpush1.msra.mxu0 0.0
    %818 = vmatprep.subr.mxu0 0.0
    %819 = vmatpush1.msra.mxu0 0.0
    %820 = vmatprep.subr.mxu0 0.0
    %821 = vmatpush1.msra.mxu0 0.0
    %822 = vmatprep.subr.mxu0 0.0
    %823 = vmatpush1.msra.mxu0 0.0
    %824 = vmatprep.subr.mxu0 0.0
    %825 = vmatpush1.msra.mxu0 0.0
    %826 = vmatprep.subr.mxu0 0.0
    %827 = vmatpush1.msra.mxu0 0.0
    %828 = vmatprep.subr.mxu0 0.0
    %829 = vmatpush1.msra.mxu0 0.0
    %830 = vmatprep.subr.mxu0 0.0
    %831 = vmatpush1.msra.mxu0 0.0
    %832 = vmatprep.subr.mxu0 0.0
    %833 = vmatpush1.msra.mxu0 0.0
    %834 = vmatprep.subr.mxu0 0.0
    %835 = vmatpush1.msra.mxu0 0.0
    %836 = vmatprep.subr.mxu0 0.0
    %837 = vmatpush1.msra.mxu0 0.0
    %838 = vmatprep.subr.mxu0 0.0
    %839 = vmatpush1.msra.mxu0 0.0
    %840 = vmatprep.subr.mxu0 0.0
    %841 = vmatpush1.msra.mxu0 0.0
    %842 = vmatprep.subr.mxu0 0.0
    %843 = vmatpush1.msra.mxu0 0.0
    %844 = vmatprep.subr.mxu0 0.0
    %845 = vmatpush1.msra.mxu0 0.0
    %846 = vmatprep.subr.mxu0 0.0
    %847 = vmatpush1.msra.mxu0 0.0
    %848 = vmatprep.subr.mxu0 0.0
    %849 = vmatpush1.msra.mxu0 0.0
    %850 = vmatprep.subr.mxu0 0.0
    %851 = vmatpush1.msra.mxu0 0.0
    %852 = vmatprep.subr.mxu0 0.0
    %853 = vmatpush1.msra.mxu0 0.0
    %854 = vmatprep.subr.mxu0 0.0
    %855 = vmatpush1.msra.mxu0 0.0
    %856 = vmatprep.subr.mxu0 0.0
    %857 = vmatpush1.msra.mxu0 0.0
    %858 = vmatprep.subr.mxu0 0.0
    %859 = vmatpush1.msra.mxu0 0.0
    %860 = vmatprep.mubr.f32.mxu0 0.0
    %861 = vmatmul.mubr.f32.gmra.mrb[0].mxu0 %v794
    %v862 = vpop.f32.mrb[0].mxu0
    %v863 = vadd.f32 0.0, %v862
    %v864 = vpop.f32.mrb[0].mxu0
    %865 = vdwg.mxu0
    %s866 = scalar_lea.vmem %s7, 8
    %v867 = vld [vmem:[%s866] sm:$0xff]
    %v869 = vsel %vm319, %v863, 0
    %871 = vmatprep.subr.mxu0 0.0
    %872 = vmatpush1.msra.mxu0 %v867
    %873 = vmatprep.subr.mxu0 0.0
    %874 = vmatpush1.msra.mxu0 0.0
    %875 = vmatprep.subr.mxu0 0.0
    %876 = vmatpush1.msra.mxu0 0.0
    %877 = vmatprep.subr.mxu0 0.0
    %878 = vmatpush1.msra.mxu0 0.0
    %879 = vmatprep.subr.mxu0 0.0
    %880 = vmatpush1.msra.mxu0 0.0
    %881 = vmatprep.subr.mxu0 0.0
    %882 = vmatpush1.msra.mxu0 0.0
    %883 = vmatprep.subr.mxu0 0.0
    %884 = vmatpush1.msra.mxu0 0.0
    %885 = vmatprep.subr.mxu0 0.0
    %886 = vmatpush1.msra.mxu0 0.0
    %887 = vmatprep.subr.mxu0 0.0
    %888 = vmatpush1.msra.mxu0 0.0
    %889 = vmatprep.subr.mxu0 0.0
    %890 = vmatpush1.msra.mxu0 0.0
    %891 = vmatprep.subr.mxu0 0.0
    %892 = vmatpush1.msra.mxu0 0.0
    %893 = vmatprep.subr.mxu0 0.0
    %894 = vmatpush1.msra.mxu0 0.0
    %895 = vmatprep.subr.mxu0 0.0
    %896 = vmatpush1.msra.mxu0 0.0
    %897 = vmatprep.subr.mxu0 0.0
    %898 = vmatpush1.msra.mxu0 0.0
    %899 = vmatprep.subr.mxu0 0.0
    %900 = vmatpush1.msra.mxu0 0.0
    %901 = vmatprep.subr.mxu0 0.0
    %902 = vmatpush1.msra.mxu0 0.0
    %903 = vmatprep.subr.mxu0 0.0
    %904 = vmatpush1.msra.mxu0 0.0
    %905 = vmatprep.subr.mxu0 0.0
    %906 = vmatpush1.msra.mxu0 0.0
    %907 = vmatprep.subr.mxu0 0.0
    %908 = vmatpush1.msra.mxu0 0.0
    %909 = vmatprep.subr.mxu0 0.0
    %910 = vmatpush1.msra.mxu0 0.0
    %911 = vmatprep.subr.mxu0 0.0
    %912 = vmatpush1.msra.mxu0 0.0
    %913 = vmatprep.subr.mxu0 0.0
    %914 = vmatpush1.msra.mxu0 0.0
    %915 = vmatprep.subr.mxu0 0.0
    %916 = vmatpush1.msra.mxu0 0.0
    %917 = vmatprep.subr.mxu0 0.0
    %918 = vmatpush1.msra.mxu0 0.0
    %919 = vmatprep.subr.mxu0 0.0
    %920 = vmatpush1.msra.mxu0 0.0
    %921 = vmatprep.subr.mxu0 0.0
    %922 = vmatpush1.msra.mxu0 0.0
    %923 = vmatprep.subr.mxu0 0.0
    %924 = vmatpush1.msra.mxu0 0.0
    %925 = vmatprep.subr.mxu0 0.0
    %926 = vmatpush1.msra.mxu0 0.0
    %927 = vmatprep.subr.mxu0 0.0
    %928 = vmatpush1.msra.mxu0 0.0
    %929 = vmatprep.subr.mxu0 0.0
    %930 = vmatpush1.msra.mxu0 0.0
    %931 = vmatprep.subr.mxu0 0.0
    %932 = vmatpush1.msra.mxu0 0.0
    %933 = vmatprep.subr.mxu0 0.0
    %934 = vmatpush1.msra.mxu0 0.0
    %935 = vmatprep.mubr.f32.mxu0 0.0
    %936 = vmatmul.mubr.f32.gmra.mrb[0].mxu0 %v869
    %v937 = vpop.f32.mrb[0].mxu0
    %v938 = vadd.f32 0.0, %v937
    %v939 = vpop.f32.mrb[0].mxu0
    %940 = vdwg.mxu0
    %v942 = vsel %vm319, %v477, 0
    %944 = vmatprep.subr.mxu0 0.0
    %945 = vmatpush1.msra.mxu0 %v480
    %946 = vmatprep.subr.mxu0 0.0
    %947 = vmatpush1.msra.mxu0 0.0
    %948 = vmatprep.subr.mxu0 0.0
    %949 = vmatpush1.msra.mxu0 0.0
    %950 = vmatprep.subr.mxu0 0.0
    %951 = vmatpush1.msra.mxu0 0.0
    %952 = vmatprep.subr.mxu0 0.0
    %953 = vmatpush1.msra.mxu0 0.0
    %954 = vmatprep.subr.mxu0 0.0
    %955 = vmatpush1.msra.mxu0 0.0
    %956 = vmatprep.subr.mxu0 0.0
    %957 = vmatpush1.msra.mxu0 0.0
    %958 = vmatprep.subr.mxu0 0.0
    %959 = vmatpush1.msra.mxu0 0.0
    %960 = vmatprep.subr.mxu0 0.0
    %961 = vmatpush1.msra.mxu0 0.0
    %962 = vmatprep.subr.mxu0 0.0
    %963 = vmatpush1.msra.mxu0 0.0
    %964 = vmatprep.subr.mxu0 0.0
    %965 = vmatpush1.msra.mxu0 0.0
    %966 = vmatprep.subr.mxu0 0.0
    %967 = vmatpush1.msra.mxu0 0.0
    %968 = vmatprep.subr.mxu0 0.0
    %969 = vmatpush1.msra.mxu0 0.0
    %970 = vmatprep.subr.mxu0 0.0
    %971 = vmatpush1.msra.mxu0 0.0
    %972 = vmatprep.subr.mxu0 0.0
    %973 = vmatpush1.msra.mxu0 0.0
    %974 = vmatprep.subr.mxu0 0.0
    %975 = vmatpush1.msra.mxu0 0.0
    %976 = vmatprep.subr.mxu0 0.0
    %977 = vmatpush1.msra.mxu0 0.0
    %978 = vmatprep.subr.mxu0 0.0
    %979 = vmatpush1.msra.mxu0 0.0
    %980 = vmatprep.subr.mxu0 0.0
    %981 = vmatpush1.msra.mxu0 0.0
    %982 = vmatprep.subr.mxu0 0.0
    %983 = vmatpush1.msra.mxu0 0.0
    %984 = vmatprep.subr.mxu0 0.0
    %985 = vmatpush1.msra.mxu0 0.0
    %986 = vmatprep.subr.mxu0 0.0
    %987 = vmatpush1.msra.mxu0 0.0
    %988 = vmatprep.subr.mxu0 0.0
    %989 = vmatpush1.msra.mxu0 0.0
    %990 = vmatprep.subr.mxu0 0.0
    %991 = vmatpush1.msra.mxu0 0.0
    %992 = vmatprep.subr.mxu0 0.0
    %993 = vmatpush1.msra.mxu0 0.0
    %994 = vmatprep.subr.mxu0 0.0
    %995 = vmatpush1.msra.mxu0 0.0
    %996 = vmatprep.subr.mxu0 0.0
    %997 = vmatpush1.msra.mxu0 0.0
    %998 = vmatprep.subr.mxu0 0.0
    %999 = vmatpush1.msra.mxu0 0.0
    %1000 = vmatprep.subr.mxu0 0.0
    %1001 = vmatpush1.msra.mxu0 0.0
    %1002 = vmatprep.subr.mxu0 0.0
    %1003 = vmatpush1.msra.mxu0 0.0
    %1004 = vmatprep.subr.mxu0 0.0
    %1005 = vmatpush1.msra.mxu0 0.0
    %1006 = vmatprep.subr.mxu0 0.0
    %1007 = vmatpush1.msra.mxu0 0.0
    %1008 = vmatprep.mubr.f32.mxu0 0.0
    %1009 = vmatmul.mubr.f32.gmra.mrb[0].mxu0 %v942
    %v1010 = vpop.f32.mrb[0].mxu0
    %v1011 = vadd.f32 %v938, %v1010
    %v1012 = vpop.f32.mrb[0].mxu0
    %1013 = vdwg.mxu0
    %s1014 = scalar_lea.vmem %s4, 64
    %v1015 = vld [vmem:[%s1014] sm:$0xff]
    %v1016 = vld [vmem:[%s1014 + $0x8] sm:$0xff]
    %v1017 = vld [vmem:[%s1014 + $0x10] sm:$0xff]
    %v1018 = vld [vmem:[%s1014 + $0x18] sm:$0xff]
    %1019 = vmatprep.subr.mxu0 0.0
    %1020 = vmatpush1.msra.mxu0 %v1015
    %1021 = vmatprep.subr.mxu0 0.0
    %1022 = vmatpush1.msra.mxu0 %v1016
    %1023 = vmatprep.subr.mxu0 0.0
    %1024 = vmatpush1.msra.mxu0 %v1017
    %1025 = vmatprep.subr.mxu0 0.0
    %1026 = vmatpush1.msra.mxu0 %v1018
    %1027 = vmatprep.subr.mxu0 0.0
    %1028 = vmatpush1.msra.mxu0 0.0
    %1029 = vmatprep.subr.mxu0 0.0
    %1030 = vmatpush1.msra.mxu0 0.0
    %1031 = vmatprep.subr.mxu0 0.0
    %1032 = vmatpush1.msra.mxu0 0.0
    %1033 = vmatprep.subr.mxu0 0.0
    %1034 = vmatpush1.msra.mxu0 0.0
    %1035 = vmatprep.subr.mxu0 0.0
    %1036 = vmatpush1.msra.mxu0 0.0
    %1037 = vmatprep.subr.mxu0 0.0
    %1038 = vmatpush1.msra.mxu0 0.0
    %1039 = vmatprep.subr.mxu0 0.0
    %1040 = vmatpush1.msra.mxu0 0.0
    %1041 = vmatprep.subr.mxu0 0.0
    %1042 = vmatpush1.msra.mxu0 0.0
    %1043 = vmatprep.subr.mxu0 0.0
    %1044 = vmatpush1.msra.mxu0 0.0
    %1045 = vmatprep.subr.mxu0 0.0
    %1046 = vmatpush1.msra.mxu0 0.0
    %1047 = vmatprep.subr.mxu0 0.0
    %1048 = vmatpush1.msra.mxu0 0.0
    %1049 = vmatprep.subr.mxu0 0.0
    %1050 = vmatpush1.msra.mxu0 0.0
    %1051 = vmatprep.subr.mxu0 0.0
    %1052 = vmatpush1.msra.mxu0 0.0
    %1053 = vmatprep.subr.mxu0 0.0
    %1054 = vmatpush1.msra.mxu0 0.0
    %1055 = vmatprep.subr.mxu0 0.0
    %1056 = vmatpush1.msra.mxu0 0.0
    %1057 = vmatprep.subr.mxu0 0.0
    %1058 = vmatpush1.msra.mxu0 0.0
    %1059 = vmatprep.subr.mxu0 0.0
    %1060 = vmatpush1.msra.mxu0 0.0
    %1061 = vmatprep.subr.mxu0 0.0
    %1062 = vmatpush1.msra.mxu0 0.0
    %1063 = vmatprep.subr.mxu0 0.0
    %1064 = vmatpush1.msra.mxu0 0.0
    %1065 = vmatprep.subr.mxu0 0.0
    %1066 = vmatpush1.msra.mxu0 0.0
    %1067 = vmatprep.subr.mxu0 0.0
    %1068 = vmatpush1.msra.mxu0 0.0
    %1069 = vmatprep.subr.mxu0 0.0
    %1070 = vmatpush1.msra.mxu0 0.0
    %1071 = vmatprep.subr.mxu0 0.0
    %1072 = vmatpush1.msra.mxu0 0.0
    %1073 = vmatprep.subr.mxu0 0.0
    %1074 = vmatpush1.msra.mxu0 0.0
    %1075 = vmatprep.subr.mxu0 0.0
    %1076 = vmatpush1.msra.mxu0 0.0
    %1077 = vmatprep.subr.mxu0 0.0
    %1078 = vmatpush1.msra.mxu0 0.0
    %1079 = vmatprep.subr.mxu0 0.0
    %1080 = vmatpush1.msra.mxu0 0.0
    %1081 = vmatprep.subr.mxu0 0.0
    %1082 = vmatpush1.msra.mxu0 0.0
    %1083 = vmatprep.mubr.f32.mxu0 0.0
    %1084 = vmatmul.mubr.f32.gmra.mrb[0].mxu0 %v99
    %v1085 = vpop.f32.mrb[0].mxu0
    %v1086 = vadd.f32 0.0, %v1085
    %v1087 = vpop.f32.mrb[0].mxu0
    %1088 = vdwg.mxu0
    %s1089 = scalar_lea.vmem %s5, 64
    %v1090 = vld [vmem:[%s1089] sm:$0xff]
    %v1091 = vld [vmem:[%s1089 + $0x8] sm:$0xff]
    %v1092 = vld [vmem:[%s1089 + $0x10] sm:$0xff]
    %v1093 = vld [vmem:[%s1089 + $0x18] sm:$0xff]
    %1094 = vmatprep.subr.mxu0 0.0
    %1095 = vmatpush1.msra.mxu0 %v1090
    %1096 = vmatprep.subr.mxu0 0.0
    %1097 = vmatpush1.msra.mxu0 %v1091
    %1098 = vmatprep.subr.mxu0 0.0
    %1099 = vmatpush1.msra.mxu0 %v1092
    %1100 = vmatprep.subr.mxu0 0.0
    %1101 = vmatpush1.msra.mxu0 %v1093
    %1102 = vmatprep.subr.mxu0 0.0
    %1103 = vmatpush1.msra.mxu0 0.0
    %1104 = vmatprep.subr.mxu0 0.0
    %1105 = vmatpush1.msra.mxu0 0.0
    %1106 = vmatprep.subr.mxu0 0.0
    %1107 = vmatpush1.msra.mxu0 0.0
    %1108 = vmatprep.subr.mxu0 0.0
    %1109 = vmatpush1.msra.mxu0 0.0
    %1110 = vmatprep.subr.mxu0 0.0
    %1111 = vmatpush1.msra.mxu0 0.0
    %1112 = vmatprep.subr.mxu0 0.0
    %1113 = vmatpush1.msra.mxu0 0.0
    %1114 = vmatprep.subr.mxu0 0.0
    %1115 = vmatpush1.msra.mxu0 0.0
    %1116 = vmatprep.subr.mxu0 0.0
    %1117 = vmatpush1.msra.mxu0 0.0
    %1118 = vmatprep.subr.mxu0 0.0
    %1119 = vmatpush1.msra.mxu0 0.0
    %1120 = vmatprep.subr.mxu0 0.0
    %1121 = vmatpush1.msra.mxu0 0.0
    %1122 = vmatprep.subr.mxu0 0.0
    %1123 = vmatpush1.msra.mxu0 0.0
    %1124 = vmatprep.subr.mxu0 0.0
    %1125 = vmatpush1.msra.mxu0 0.0
    %1126 = vmatprep.subr.mxu0 0.0
    %1127 = vmatpush1.msra.mxu0 0.0
    %1128 = vmatprep.subr.mxu0 0.0
    %1129 = vmatpush1.msra.mxu0 0.0
    %1130 = vmatprep.subr.mxu0 0.0
    %1131 = vmatpush1.msra.mxu0 0.0
    %1132 = vmatprep.subr.mxu0 0.0
    %1133 = vmatpush1.msra.mxu0 0.0
    %1134 = vmatprep.subr.mxu0 0.0
    %1135 = vmatpush1.msra.mxu0 0.0
    %1136 = vmatprep.subr.mxu0 0.0
    %1137 = vmatpush1.msra.mxu0 0.0
    %1138 = vmatprep.subr.mxu0 0.0
    %1139 = vmatpush1.msra.mxu0 0.0
    %1140 = vmatprep.subr.mxu0 0.0
    %1141 = vmatpush1.msra.mxu0 0.0
    %1142 = vmatprep.subr.mxu0 0.0
    %1143 = vmatpush1.msra.mxu0 0.0
    %1144 = vmatprep.subr.mxu0 0.0
    %1145 = vmatpush1.msra.mxu0 0.0
    %1146 = vmatprep.subr.mxu0 0.0
    %1147 = vmatpush1.msra.mxu0 0.0
    %1148 = vmatprep.subr.mxu0 0.0
    %1149 = vmatpush1.msra.mxu0 0.0
    %1150 = vmatprep.subr.mxu0 0.0
    %1151 = vmatpush1.msra.mxu0 0.0
    %1152 = vmatprep.subr.mxu0 0.0
    %1153 = vmatpush1.msra.mxu0 0.0
    %1154 = vmatprep.subr.mxu0 0.0
    %1155 = vmatpush1.msra.mxu0 0.0
    %1156 = vmatprep.subr.mxu0 0.0
    %1157 = vmatpush1.msra.mxu0 0.0
    %1158 = vmatprep.mubr.f32.mxu0 0.0
    %1159 = vmatmul.mubr.f32.gmra.mrb[0].mxu0 %v99
    %v1160 = vpop.f32.mrb[0].mxu0
    %v1161 = vadd.f32 0.0, %v1160
    %v1162 = vpop.f32.mrb[0].mxu0
    %1163 = vdwg.mxu0
    %s1164 = scalar_lea.vmem %s6, 64
    %v1165 = vld [vmem:[%s1164] sm:$0xff]
    %v1166 = vld [vmem:[%s1164 + $0x8] sm:$0xff]
    %v1167 = vld [vmem:[%s1164 + $0x10] sm:$0xff]
    %v1168 = vld [vmem:[%s1164 + $0x18] sm:$0xff]
    %1169 = vmatprep.subr.mxu0 0.0
    %1170 = vmatpush1.msra.mxu0 %v1165
    %1171 = vmatprep.subr.mxu0 0.0
    %1172 = vmatpush1.msra.mxu0 %v1166
    %1173 = vmatprep.subr.mxu0 0.0
    %1174 = vmatpush1.msra.mxu0 %v1167
    %1175 = vmatprep.subr.mxu0 0.0
    %1176 = vmatpush1.msra.mxu0 %v1168
    %1177 = vmatprep.subr.mxu0 0.0
    %1178 = vmatpush1.msra.mxu0 0.0
    %1179 = vmatprep.subr.mxu0 0.0
    %1180 = vmatpush1.msra.mxu0 0.0
    %1181 = vmatprep.subr.mxu0 0.0
    %1182 = vmatpush1.msra.mxu0 0.0
    %1183 = vmatprep.subr.mxu0 0.0
    %1184 = vmatpush1.msra.mxu0 0.0
    %1185 = vmatprep.subr.mxu0 0.0
    %1186 = vmatpush1.msra.mxu0 0.0
    %1187 = vmatprep.subr.mxu0 0.0
    %1188 = vmatpush1.msra.mxu0 0.0
    %1189 = vmatprep.subr.mxu0 0.0
    %1190 = vmatpush1.msra.mxu0 0.0
    %1191 = vmatprep.subr.mxu0 0.0
    %1192 = vmatpush1.msra.mxu0 0.0
    %1193 = vmatprep.subr.mxu0 0.0
    %1194 = vmatpush1.msra.mxu0 0.0
    %1195 = vmatprep.subr.mxu0 0.0
    %1196 = vmatpush1.msra.mxu0 0.0
    %1197 = vmatprep.subr.mxu0 0.0
    %1198 = vmatpush1.msra.mxu0 0.0
    %1199 = vmatprep.subr.mxu0 0.0
    %1200 = vmatpush1.msra.mxu0 0.0
    %1201 = vmatprep.subr.mxu0 0.0
    %1202 = vmatpush1.msra.mxu0 0.0
    %1203 = vmatprep.subr.mxu0 0.0
    %1204 = vmatpush1.msra.mxu0 0.0
    %1205 = vmatprep.subr.mxu0 0.0
    %1206 = vmatpush1.msra.mxu0 0.0
    %1207 = vmatprep.subr.mxu0 0.0
    %1208 = vmatpush1.msra.mxu0 0.0
    %1209 = vmatprep.subr.mxu0 0.0
    %1210 = vmatpush1.msra.mxu0 0.0
    %1211 = vmatprep.subr.mxu0 0.0
    %1212 = vmatpush1.msra.mxu0 0.0
    %1213 = vmatprep.subr.mxu0 0.0
    %1214 = vmatpush1.msra.mxu0 0.0
    %1215 = vmatprep.subr.mxu0 0.0
    %1216 = vmatpush1.msra.mxu0 0.0
    %1217 = vmatprep.subr.mxu0 0.0
    %1218 = vmatpush1.msra.mxu0 0.0
    %1219 = vmatprep.subr.mxu0 0.0
    %1220 = vmatpush1.msra.mxu0 0.0
    %1221 = vmatprep.subr.mxu0 0.0
    %1222 = vmatpush1.msra.mxu0 0.0
    %1223 = vmatprep.subr.mxu0 0.0
    %1224 = vmatpush1.msra.mxu0 0.0
    %1225 = vmatprep.subr.mxu0 0.0
    %1226 = vmatpush1.msra.mxu0 0.0
    %1227 = vmatprep.subr.mxu0 0.0
    %1228 = vmatpush1.msra.mxu0 0.0
    %1229 = vmatprep.subr.mxu0 0.0
    %1230 = vmatpush1.msra.mxu0 0.0
    %1231 = vmatprep.subr.mxu0 0.0
    %1232 = vmatpush1.msra.mxu0 0.0
    %1233 = vmatprep.mubr.f32.mxu0 0.0
    %1234 = vmatmul.mubr.f32.gmra.mrb[0].mxu0 %v99
    %v1235 = vpop.f32.mrb[0].mxu0
    %v1236 = vadd.f32 0.0, %v1235
    %v1237 = vpop.f32.mrb[0].mxu0
    %1238 = vdwg.mxu0
    %v1240 = vsel %vm319, %v1086, 0
    %v1243 = vsel %vm319, %v1161, 0
    %1245 = vmatprep.subr.mxu0 0.0
    %1246 = vmatpush1.xpose.msra.mxu0 %v1243
    %1247 = vmatprep.subr.mxu0 0.0
    %1248 = vmatpush1.xpose.msra.mxu0 0.0
    %1249 = vmatprep.subr.mxu0 0.0
    %1250 = vmatpush1.xpose.msra.mxu0 0.0
    %1251 = vmatprep.subr.mxu0 0.0
    %1252 = vmatpush1.xpose.msra.mxu0 0.0
    %1253 = vmatprep.subr.mxu0 0.0
    %1254 = vmatpush1.xpose.msra.mxu0 0.0
    %1255 = vmatprep.subr.mxu0 0.0
    %1256 = vmatpush1.xpose.msra.mxu0 0.0
    %1257 = vmatprep.subr.mxu0 0.0
    %1258 = vmatpush1.xpose.msra.mxu0 0.0
    %1259 = vmatprep.subr.mxu0 0.0
    %1260 = vmatpush1.xpose.msra.mxu0 0.0
    %1261 = vmatprep.subr.mxu0 0.0
    %1262 = vmatpush1.xpose.msra.mxu0 0.0
    %1263 = vmatprep.subr.mxu0 0.0
    %1264 = vmatpush1.xpose.msra.mxu0 0.0
    %1265 = vmatprep.subr.mxu0 0.0
    %1266 = vmatpush1.xpose.msra.mxu0 0.0
    %1267 = vmatprep.subr.mxu0 0.0
    %1268 = vmatpush1.xpose.msra.mxu0 0.0
    %1269 = vmatprep.subr.mxu0 0.0
    %1270 = vmatpush1.xpose.msra.mxu0 0.0
    %1271 = vmatprep.subr.mxu0 0.0
    %1272 = vmatpush1.xpose.msra.mxu0 0.0
    %1273 = vmatprep.subr.mxu0 0.0
    %1274 = vmatpush1.xpose.msra.mxu0 0.0
    %1275 = vmatprep.subr.mxu0 0.0
    %1276 = vmatpush1.xpose.msra.mxu0 0.0
    %1277 = vmatprep.subr.mxu0 0.0
    %1278 = vmatpush1.xpose.msra.mxu0 0.0
    %1279 = vmatprep.subr.mxu0 0.0
    %1280 = vmatpush1.xpose.msra.mxu0 0.0
    %1281 = vmatprep.subr.mxu0 0.0
    %1282 = vmatpush1.xpose.msra.mxu0 0.0
    %1283 = vmatprep.subr.mxu0 0.0
    %1284 = vmatpush1.xpose.msra.mxu0 0.0
    %1285 = vmatprep.subr.mxu0 0.0
    %1286 = vmatpush1.xpose.msra.mxu0 0.0
    %1287 = vmatprep.subr.mxu0 0.0
    %1288 = vmatpush1.xpose.msra.mxu0 0.0
    %1289 = vmatprep.subr.mxu0 0.0
    %1290 = vmatpush1.xpose.msra.mxu0 0.0
    %1291 = vmatprep.subr.mxu0 0.0
    %1292 = vmatpush1.xpose.msra.mxu0 0.0
    %1293 = vmatprep.subr.mxu0 0.0
    %1294 = vmatpush1.xpose.msra.mxu0 0.0
    %1295 = vmatprep.subr.mxu0 0.0
    %1296 = vmatpush1.xpose.msra.mxu0 0.0
    %1297 = vmatprep.subr.mxu0 0.0
    %1298 = vmatpush1.xpose.msra.mxu0 0.0
    %1299 = vmatprep.subr.mxu0 0.0
    %1300 = vmatpush1.xpose.msra.mxu0 0.0
    %1301 = vmatprep.subr.mxu0 0.0
    %1302 = vmatpush1.xpose.msra.mxu0 0.0
    %1303 = vmatprep.subr.mxu0 0.0
    %1304 = vmatpush1.xpose.msra.mxu0 0.0
    %1305 = vmatprep.subr.mxu0 0.0
    %1306 = vmatpush1.xpose.msra.mxu0 0.0
    %1307 = vmatprep.subr.mxu0 0.0
    %1308 = vmatpush1.xpose.msra.mxu0 0.0
    %1309 = vmatprep.mubr.f32.mxu0 0.0
    %1310 = vmatmul.mubr.f32.gmra.mrb[0].mxu0 %v1240
    %v1311 = vpop.f32.mrb[0].mxu0
    %v1312 = vadd.f32 0.0, %v1311
    %v1313 = vpop.f32.mrb[0].mxu0
    %1314 = vdwg.mxu0
    %v1315 = vsel %vm319, %v1312, -inf
    %1316 = vmax.xlane.f32.xlu0 %v1315
    %v1317 = vpop.xlane.xlu0 %1316
    %v1318 = vsub.f32 %v1312, %v1317
    %v1319 = vmul.f32 %v1318, 1.442695
    %v1320 = vpow.pop %v1319
    %v1321 = vsel %vm319, %v1320, 0.0
    %1322 = vadd.xlane.f32.xlu0 %v1321
    %v1323 = vpop.xlane.xlu0 %1322
    %v1324 = vrcp.pop %v1323
    %v1325 = vmul.f32 %v1320, %v1324
    %v1327 = vsel %vm319, %v1325, 0
    %1329 = vmatprep.subr.mxu0 0.0
    %1330 = vmatpush1.msra.mxu0 %v1236
    %1331 = vmatprep.subr.mxu0 0.0
    %1332 = vmatpush1.msra.mxu0 0.0
    %1333 = vmatprep.subr.mxu0 0.0
    %1334 = vmatpush1.msra.mxu0 0.0
    %1335 = vmatprep.subr.mxu0 0.0
    %1336 = vmatpush1.msra.mxu0 0.0
    %1337 = vmatprep.subr.mxu0 0.0
    %1338 = vmatpush1.msra.mxu0 0.0
    %1339 = vmatprep.subr.mxu0 0.0
    %1340 = vmatpush1.msra.mxu0 0.0
    %1341 = vmatprep.subr.mxu0 0.0
    %1342 = vmatpush1.msra.mxu0 0.0
    %1343 = vmatprep.subr.mxu0 0.0
    %1344 = vmatpush1.msra.mxu0 0.0
    %1345 = vmatprep.subr.mxu0 0.0
    %1346 = vmatpush1.msra.mxu0 0.0
    %1347 = vmatprep.subr.mxu0 0.0
    %1348 = vmatpush1.msra.mxu0 0.0
    %1349 = vmatprep.subr.mxu0 0.0
    %1350 = vmatpush1.msra.mxu0 0.0
    %1351 = vmatprep.subr.mxu0 0.0
    %1352 = vmatpush1.msra.mxu0 0.0
    %1353 = vmatprep.subr.mxu0 0.0
    %1354 = vmatpush1.msra.mxu0 0.0
    %1355 = vmatprep.subr.mxu0 0.0
    %1356 = vmatpush1.msra.mxu0 0.0
    %1357 = vmatprep.subr.mxu0 0.0
    %1358 = vmatpush1.msra.mxu0 0.0
    %1359 = vmatprep.subr.mxu0 0.0
    %1360 = vmatpush1.msra.mxu0 0.0
    %1361 = vmatprep.subr.mxu0 0.0
    %1362 = vmatpush1.msra.mxu0 0.0
    %1363 = vmatprep.subr.mxu0 0.0
    %1364 = vmatpush1.msra.mxu0 0.0
    %1365 = vmatprep.subr.mxu0 0.0
    %1366 = vmatpush1.msra.mxu0 0.0
    %1367 = vmatprep.subr.mxu0 0.0
    %1368 = vmatpush1.msra.mxu0 0.0
    %1369 = vmatprep.subr.mxu0 0.0
    %1370 = vmatpush1.msra.mxu0 0.0
    %1371 = vmatprep.subr.mxu0 0.0
    %1372 = vmatpush1.msra.mxu0 0.0
    %1373 = vmatprep.subr.mxu0 0.0
    %1374 = vmatpush1.msra.mxu0 0.0
    %1375 = vmatprep.subr.mxu0 0.0
    %1376 = vmatpush1.msra.mxu0 0.0
    %1377 = vmatprep.subr.mxu0 0.0
    %1378 = vmatpush1.msra.mxu0 0.0
    %1379 = vmatprep.subr.mxu0 0.0
    %1380 = vmatpush1.msra.mxu0 0.0
    %1381 = vmatprep.subr.mxu0 0.0
    %1382 = vmatpush1.msra.mxu0 0.0
    %1383 = vmatprep.subr.mxu0 0.0
    %1384 = vmatpush1.msra.mxu0 0.0
    %1385 = vmatprep.subr.mxu0 0.0
    %1386 = vmatpush1.msra.mxu0 0.0
    %1387 = vmatprep.subr.mxu0 0.0
    %1388 = vmatpush1.msra.mxu0 0.0
    %1389 = vmatprep.subr.mxu0 0.0
    %1390 = vmatpush1.msra.mxu0 0.0
    %1391 = vmatprep.subr.mxu0 0.0
    %1392 = vmatpush1.msra.mxu0 0.0
    %1393 = vmatprep.mubr.f32.mxu0 0.0
    %1394 = vmatmul.mubr.f32.gmra.mrb[0].mxu0 %v1327
    %v1395 = vpop.f32.mrb[0].mxu0
    %v1396 = vadd.f32 0.0, %v1395
    %v1397 = vpop.f32.mrb[0].mxu0
    %1398 = vdwg.mxu0
    %s1399 = scalar_lea.vmem %s7, 16
    %v1400 = vld [vmem:[%s1399] sm:$0xff]
    %v1402 = vsel %vm319, %v1396, 0
    %1404 = vmatprep.subr.mxu0 0.0
    %1405 = vmatpush1.msra.mxu0 %v1400
    %1406 = vmatprep.subr.mxu0 0.0
    %1407 = vmatpush1.msra.mxu0 0.0
    %1408 = vmatprep.subr.mxu0 0.0
    %1409 = vmatpush1.msra.mxu0 0.0
    %1410 = vmatprep.subr.mxu0 0.0
    %1411 = vmatpush1.msra.mxu0 0.0
    %1412 = vmatprep.subr.mxu0 0.0
    %1413 = vmatpush1.msra.mxu0 0.0
    %1414 = vmatprep.subr.mxu0 0.0
    %1415 = vmatpush1.msra.mxu0 0.0
    %1416 = vmatprep.subr.mxu0 0.0
    %1417 = vmatpush1.msra.mxu0 0.0
    %1418 = vmatprep.subr.mxu0 0.0
    %1419 = vmatpush1.msra.mxu0 0.0
    %1420 = vmatprep.subr.mxu0 0.0
    %1421 = vmatpush1.msra.mxu0 0.0
    %1422 = vmatprep.subr.mxu0 0.0
    %1423 = vmatpush1.msra.mxu0 0.0
    %1424 = vmatprep.subr.mxu0 0.0
    %1425 = vmatpush1.msra.mxu0 0.0
    %1426 = vmatprep.subr.mxu0 0.0
    %1427 = vmatpush1.msra.mxu0 0.0
    %1428 = vmatprep.subr.mxu0 0.0
    %1429 = vmatpush1.msra.mxu0 0.0
    %1430 = vmatprep.subr.mxu0 0.0
    %1431 = vmatpush1.msra.mxu0 0.0
    %1432 = vmatprep.subr.mxu0 0.0
    %1433 = vmatpush1.msra.mxu0 0.0
    %1434 = vmatprep.subr.mxu0 0.0
    %1435 = vmatpush1.msra.mxu0 0.0
    %1436 = vmatprep.subr.mxu0 0.0
    %1437 = vmatpush1.msra.mxu0 0.0
    %1438 = vmatprep.subr.mxu0 0.0
    %1439 = vmatpush1.msra.mxu0 0.0
    %1440 = vmatprep.subr.mxu0 0.0
    %1441 = vmatpush1.msra.mxu0 0.0
    %1442 = vmatprep.subr.mxu0 0.0
    %1443 = vmatpush1.msra.mxu0 0.0
    %1444 = vmatprep.subr.mxu0 0.0
    %1445 = vmatpush1.msra.mxu0 0.0
    %1446 = vmatprep.subr.mxu0 0.0
    %1447 = vmatpush1.msra.mxu0 0.0
    %1448 = vmatprep.subr.mxu0 0.0
    %1449 = vmatpush1.msra.mxu0 0.0
    %1450 = vmatprep.subr.mxu0 0.0
    %1451 = vmatpush1.msra.mxu0 0.0
    %1452 = vmatprep.subr.mxu0 0.0
    %1453 = vmatpush1.msra.mxu0 0.0
    %1454 = vmatprep.subr.mxu0 0.0
    %1455 = vmatpush1.msra.mxu0 0.0
    %1456 = vmatprep.subr.mxu0 0.0
    %1457 = vmatpush1.msra.mxu0 0.0
    %1458 = vmatprep.subr.mxu0 0.0
    %1459 = vmatpush1.msra.mxu0 0.0
    %1460 = vmatprep.subr.mxu0 0.0
    %1461 = vmatpush1.msra.mxu0 0.0
    %1462 = vmatprep.subr.mxu0 0.0
    %1463 = vmatpush1.msra.mxu0 0.0
    %1464 = vmatprep.subr.mxu0 0.0
    %1465 = vmatpush1.msra.mxu0 0.0
    %1466 = vmatprep.subr.mxu0 0.0
    %1467 = vmatpush1.msra.mxu0 0.0
    %1468 = vmatprep.mubr.f32.mxu0 0.0
    %1469 = vmatmul.mubr.f32.gmra.mrb[0].mxu0 %v1402
    %v1470 = vpop.f32.mrb[0].mxu0
    %v1471 = vadd.f32 0.0, %v1470
    %v1472 = vpop.f32.mrb[0].mxu0
    %1473 = vdwg.mxu0
    %v1474 = vadd.f32 %v1011, %v1471
    %s1475 = scalar_lea.vmem %s4, 96
    %v1476 = vld [vmem:[%s1475] sm:$0xff]
    %v1477 = vld [vmem:[%s1475 + $0x8] sm:$0xff]
    %v1478 = vld [vmem:[%s1475 + $0x10] sm:$0xff]
    %v1479 = vld [vmem:[%s1475 + $0x18] sm:$0xff]
    %1480 = vmatprep.subr.mxu0 0.0
    %1481 = vmatpush1.msra.mxu0 %v1476
    %1482 = vmatprep.subr.mxu0 0.0
    %1483 = vmatpush1.msra.mxu0 %v1477
    %1484 = vmatprep.subr.mxu0 0.0
    %1485 = vmatpush1.msra.mxu0 %v1478
    %1486 = vmatprep.subr.mxu0 0.0
    %1487 = vmatpush1.msra.mxu0 %v1479
    %1488 = vmatprep.subr.mxu0 0.0
    %1489 = vmatpush1.msra.mxu0 0.0
    %1490 = vmatprep.subr.mxu0 0.0
    %1491 = vmatpush1.msra.mxu0 0.0
    %1492 = vmatprep.subr.mxu0 0.0
    %1493 = vmatpush1.msra.mxu0 0.0
    %1494 = vmatprep.subr.mxu0 0.0
    %1495 = vmatpush1.msra.mxu0 0.0
    %1496 = vmatprep.subr.mxu0 0.0
    %1497 = vmatpush1.msra.mxu0 0.0
    %1498 = vmatprep.subr.mxu0 0.0
    %1499 = vmatpush1.msra.mxu0 0.0
    %1500 = vmatprep.subr.mxu0 0.0
    %1501 = vmatpush1.msra.mxu0 0.0
    %1502 = vmatprep.subr.mxu0 0.0
    %1503 = vmatpush1.msra.mxu0 0.0
    %1504 = vmatprep.subr.mxu0 0.0
    %1505 = vmatpush1.msra.mxu0 0.0
    %1506 = vmatprep.subr.mxu0 0.0
    %1507 = vmatpush1.msra.mxu0 0.0
    %1508 = vmatprep.subr.mxu0 0.0
    %1509 = vmatpush1.msra.mxu0 0.0
    %1510 = vmatprep.subr.mxu0 0.0
    %1511 = vmatpush1.msra.mxu0 0.0
    %1512 = vmatprep.subr.mxu0 0.0
    %1513 = vmatpush1.msra.mxu0 0.0
    %1514 = vmatprep.subr.mxu0 0.0
    %1515 = vmatpush1.msra.mxu0 0.0
    %1516 = vmatprep.subr.mxu0 0.0
    %1517 = vmatpush1.msra.mxu0 0.0
    %1518 = vmatprep.subr.mxu0 0.0
    %1519 = vmatpush1.msra.mxu0 0.0
    %1520 = vmatprep.subr.mxu0 0.0
    %1521 = vmatpush1.msra.mxu0 0.0
    %1522 = vmatprep.subr.mxu0 0.0
    %1523 = vmatpush1.msra.mxu0 0.0
    %1524 = vmatprep.subr.mxu0 0.0
    %1525 = vmatpush1.msra.mxu0 0.0
    %1526 = vmatprep.subr.mxu0 0.0
    %1527 = vmatpush1.msra.mxu0 0.0
    %1528 = vmatprep.subr.mxu0 0.0
    %1529 = vmatpush1.msra.mxu0 0.0
    %1530 = vmatprep.subr.mxu0 0.0
    %1531 = vmatpush1.msra.mxu0 0.0
    %1532 = vmatprep.subr.mxu0 0.0
    %1533 = vmatpush1.msra.mxu0 0.0
    %1534 = vmatprep.subr.mxu0 0.0
    %1535 = vmatpush1.msra.mxu0 0.0
    %1536 = vmatprep.subr.mxu0 0.0
    %1537 = vmatpush1.msra.mxu0 0.0
    %1538 = vmatprep.subr.mxu0 0.0
    %1539 = vmatpush1.msra.mxu0 0.0
    %1540 = vmatprep.subr.mxu0 0.0
    %1541 = vmatpush1.msra.mxu0 0.0
    %1542 = vmatprep.subr.mxu0 0.0
    %1543 = vmatpush1.msra.mxu0 0.0
    %1544 = vmatprep.mubr.f32.mxu0 0.0
    %1545 = vmatmul.mubr.f32.gmra.mrb[0].mxu0 %v99
    %v1546 = vpop.f32.mrb[0].mxu0
    %v1547 = vadd.f32 0.0, %v1546
    %v1548 = vpop.f32.mrb[0].mxu0
    %1549 = vdwg.mxu0
    %s1550 = scalar_lea.vmem %s5, 96
    %v1551 = vld [vmem:[%s1550] sm:$0xff]
    %v1552 = vld [vmem:[%s1550 + $0x8] sm:$0xff]
    %v1553 = vld [vmem:[%s1550 + $0x10] sm:$0xff]
    %v1554 = vld [vmem:[%s1550 + $0x18] sm:$0xff]
    %1555 = vmatprep.subr.mxu0 0.0
    %1556 = vmatpush1.msra.mxu0 %v1551
    %1557 = vmatprep.subr.mxu0 0.0
    %1558 = vmatpush1.msra.mxu0 %v1552
    %1559 = vmatprep.subr.mxu0 0.0
    %1560 = vmatpush1.msra.mxu0 %v1553
    %1561 = vmatprep.subr.mxu0 0.0
    %1562 = vmatpush1.msra.mxu0 %v1554
    %1563 = vmatprep.subr.mxu0 0.0
    %1564 = vmatpush1.msra.mxu0 0.0
    %1565 = vmatprep.subr.mxu0 0.0
    %1566 = vmatpush1.msra.mxu0 0.0
    %1567 = vmatprep.subr.mxu0 0.0
    %1568 = vmatpush1.msra.mxu0 0.0
    %1569 = vmatprep.subr.mxu0 0.0
    %1570 = vmatpush1.msra.mxu0 0.0
    %1571 = vmatprep.subr.mxu0 0.0
    %1572 = vmatpush1.msra.mxu0 0.0
    %1573 = vmatprep.subr.mxu0 0.0
    %1574 = vmatpush1.msra.mxu0 0.0
    %1575 = vmatprep.subr.mxu0 0.0
    %1576 = vmatpush1.msra.mxu0 0.0
    %1577 = vmatprep.subr.mxu0 0.0
    %1578 = vmatpush1.msra.mxu0 0.0
    %1579 = vmatprep.subr.mxu0 0.0
    %1580 = vmatpush1.msra.mxu0 0.0
    %1581 = vmatprep.subr.mxu0 0.0
    %1582 = vmatpush1.msra.mxu0 0.0
    %1583 = vmatprep.subr.mxu0 0.0
    %1584 = vmatpush1.msra.mxu0 0.0
    %1585 = vmatprep.subr.mxu0 0.0
    %1586 = vmatpush1.msra.mxu0 0.0
    %1587 = vmatprep.subr.mxu0 0.0
    %1588 = vmatpush1.msra.mxu0 0.0
    %1589 = vmatprep.subr.mxu0 0.0
    %1590 = vmatpush1.msra.mxu0 0.0
    %1591 = vmatprep.subr.mxu0 0.0
    %1592 = vmatpush1.msra.mxu0 0.0
    %1593 = vmatprep.subr.mxu0 0.0
    %1594 = vmatpush1.msra.mxu0 0.0
    %1595 = vmatprep.subr.mxu0 0.0
    %1596 = vmatpush1.msra.mxu0 0.0
    %1597 = vmatprep.subr.mxu0 0.0
    %1598 = vmatpush1.msra.mxu0 0.0
    %1599 = vmatprep.subr.mxu0 0.0
    %1600 = vmatpush1.msra.mxu0 0.0
    %1601 = vmatprep.subr.mxu0 0.0
    %1602 = vmatpush1.msra.mxu0 0.0
    %1603 = vmatprep.subr.mxu0 0.0
    %1604 = vmatpush1.msra.mxu0 0.0
    %1605 = vmatprep.subr.mxu0 0.0
    %1606 = vmatpush1.msra.mxu0 0.0
    %1607 = vmatprep.subr.mxu0 0.0
    %1608 = vmatpush1.msra.mxu0 0.0
    %1609 = vmatprep.subr.mxu0 0.0
    %1610 = vmatpush1.msra.mxu0 0.0
    %1611 = vmatprep.subr.mxu0 0.0
    %1612 = vmatpush1.msra.mxu0 0.0
    %1613 = vmatprep.subr.mxu0 0.0
    %1614 = vmatpush1.msra.mxu0 0.0
    %1615 = vmatprep.subr.mxu0 0.0
    %1616 = vmatpush1.msra.mxu0 0.0
    %1617 = vmatprep.subr.mxu0 0.0
    %1618 = vmatpush1.msra.mxu0 0.0
    %1619 = vmatprep.mubr.f32.mxu0 0.0
    %1620 = vmatmul.mubr.f32.gmra.mrb[0].mxu0 %v99
    %v1621 = vpop.f32.mrb[0].mxu0
    %v1622 = vadd.f32 0.0, %v1621
    %v1623 = vpop.f32.mrb[0].mxu0
    %1624 = vdwg.mxu0
    %s1625 = scalar_lea.vmem %s6, 96
    %v1626 = vld [vmem:[%s1625] sm:$0xff]
    %v1627 = vld [vmem:[%s1625 + $0x8] sm:$0xff]
    %v1628 = vld [vmem:[%s1625 + $0x10] sm:$0xff]
    %v1629 = vld [vmem:[%s1625 + $0x18] sm:$0xff]
    %1630 = vmatprep.subr.mxu0 0.0
    %1631 = vmatpush1.msra.mxu0 %v1626
    %1632 = vmatprep.subr.mxu0 0.0
    %1633 = vmatpush1.msra.mxu0 %v1627
    %1634 = vmatprep.subr.mxu0 0.0
    %1635 = vmatpush1.msra.mxu0 %v1628
    %1636 = vmatprep.subr.mxu0 0.0
    %1637 = vmatpush1.msra.mxu0 %v1629
    %1638 = vmatprep.subr.mxu0 0.0
    %1639 = vmatpush1.msra.mxu0 0.0
    %1640 = vmatprep.subr.mxu0 0.0
    %1641 = vmatpush1.msra.mxu0 0.0
    %1642 = vmatprep.subr.mxu0 0.0
    %1643 = vmatpush1.msra.mxu0 0.0
    %1644 = vmatprep.subr.mxu0 0.0
    %1645 = vmatpush1.msra.mxu0 0.0
    %1646 = vmatprep.subr.mxu0 0.0
    %1647 = vmatpush1.msra.mxu0 0.0
    %1648 = vmatprep.subr.mxu0 0.0
    %1649 = vmatpush1.msra.mxu0 0.0
    %1650 = vmatprep.subr.mxu0 0.0
    %1651 = vmatpush1.msra.mxu0 0.0
    %1652 = vmatprep.subr.mxu0 0.0
    %1653 = vmatpush1.msra.mxu0 0.0
    %1654 = vmatprep.subr.mxu0 0.0
    %1655 = vmatpush1.msra.mxu0 0.0
    %1656 = vmatprep.subr.mxu0 0.0
    %1657 = vmatpush1.msra.mxu0 0.0
    %1658 = vmatprep.subr.mxu0 0.0
    %1659 = vmatpush1.msra.mxu0 0.0
    %1660 = vmatprep.subr.mxu0 0.0
    %1661 = vmatpush1.msra.mxu0 0.0
    %1662 = vmatprep.subr.mxu0 0.0
    %1663 = vmatpush1.msra.mxu0 0.0
    %1664 = vmatprep.subr.mxu0 0.0
    %1665 = vmatpush1.msra.mxu0 0.0
    %1666 = vmatprep.subr.mxu0 0.0
    %1667 = vmatpush1.msra.mxu0 0.0
    %1668 = vmatprep.subr.mxu0 0.0
    %1669 = vmatpush1.msra.mxu0 0.0
    %1670 = vmatprep.subr.mxu0 0.0
    %1671 = vmatpush1.msra.mxu0 0.0
    %1672 = vmatprep.subr.mxu0 0.0
    %1673 = vmatpush1.msra.mxu0 0.0
    %1674 = vmatprep.subr.mxu0 0.0
    %1675 = vmatpush1.msra.mxu0 0.0
    %1676 = vmatprep.subr.mxu0 0.0
    %1677 = vmatpush1.msra.mxu0 0.0
    %1678 = vmatprep.subr.mxu0 0.0
    %1679 = vmatpush1.msra.mxu0 0.0
    %1680 = vmatprep.subr.mxu0 0.0
    %1681 = vmatpush1.msra.mxu0 0.0
    %1682 = vmatprep.subr.mxu0 0.0
    %1683 = vmatpush1.msra.mxu0 0.0
    %1684 = vmatprep.subr.mxu0 0.0
    %1685 = vmatpush1.msra.mxu0 0.0
    %1686 = vmatprep.subr.mxu0 0.0
    %1687 = vmatpush1.msra.mxu0 0.0
    %1688 = vmatprep.subr.mxu0 0.0
    %1689 = vmatpush1.msra.mxu0 0.0
    %1690 = vmatprep.subr.mxu0 0.0
    %1691 = vmatpush1.msra.mxu0 0.0
    %1692 = vmatprep.subr.mxu0 0.0
    %1693 = vmatpush1.msra.mxu0 0.0
    %1694 = vmatprep.mubr.f32.mxu0 0.0
    %1695 = vmatmul.mubr.f32.gmra.mrb[0].mxu0 %v99
    %v1696 = vpop.f32.mrb[0].mxu0
    %v1697 = vadd.f32 0.0, %v1696
    %v1698 = vpop.f32.mrb[0].mxu0
    %1699 = vdwg.mxu0
    %v1701 = vsel %vm319, %v1547, 0
    %v1704 = vsel %vm319, %v1622, 0
    %1706 = vmatprep.subr.mxu0 0.0
    %1707 = vmatpush1.xpose.msra.mxu0 %v1704
    %1708 = vmatprep.subr.mxu0 0.0
    %1709 = vmatpush1.xpose.msra.mxu0 0.0
    %1710 = vmatprep.subr.mxu0 0.0
    %1711 = vmatpush1.xpose.msra.mxu0 0.0
    %1712 = vmatprep.subr.mxu0 0.0
    %1713 = vmatpush1.xpose.msra.mxu0 0.0
    %1714 = vmatprep.subr.mxu0 0.0
    %1715 = vmatpush1.xpose.msra.mxu0 0.0
    %1716 = vmatprep.subr.mxu0 0.0
    %1717 = vmatpush1.xpose.msra.mxu0 0.0
    %1718 = vmatprep.subr.mxu0 0.0
    %1719 = vmatpush1.xpose.msra.mxu0 0.0
    %1720 = vmatprep.subr.mxu0 0.0
    %1721 = vmatpush1.xpose.msra.mxu0 0.0
    %1722 = vmatprep.subr.mxu0 0.0
    %1723 = vmatpush1.xpose.msra.mxu0 0.0
    %1724 = vmatprep.subr.mxu0 0.0
    %1725 = vmatpush1.xpose.msra.mxu0 0.0
    %1726 = vmatprep.subr.mxu0 0.0
    %1727 = vmatpush1.xpose.msra.mxu0 0.0
    %1728 = vmatprep.subr.mxu0 0.0
    %1729 = vmatpush1.xpose.msra.mxu0 0.0
    %1730 = vmatprep.subr.mxu0 0.0
    %1731 = vmatpush1.xpose.msra.mxu0 0.0
    %1732 = vmatprep.subr.mxu0 0.0
    %1733 = vmatpush1.xpose.msra.mxu0 0.0
    %1734 = vmatprep.subr.mxu0 0.0
    %1735 = vmatpush1.xpose.msra.mxu0 0.0
    %1736 = vmatprep.subr.mxu0 0.0
    %1737 = vmatpush1.xpose.msra.mxu0 0.0
    %1738 = vmatprep.subr.mxu0 0.0
    %1739 = vmatpush1.xpose.msra.mxu0 0.0
    %1740 = vmatprep.subr.mxu0 0.0
    %1741 = vmatpush1.xpose.msra.mxu0 0.0
    %1742 = vmatprep.subr.mxu0 0.0
    %1743 = vmatpush1.xpose.msra.mxu0 0.0
    %1744 = vmatprep.subr.mxu0 0.0
    %1745 = vmatpush1.xpose.msra.mxu0 0.0
    %1746 = vmatprep.subr.mxu0 0.0
    %1747 = vmatpush1.xpose.msra.mxu0 0.0
    %1748 = vmatprep.subr.mxu0 0.0
    %1749 = vmatpush1.xpose.msra.mxu0 0.0
    %1750 = vmatprep.subr.mxu0 0.0
    %1751 = vmatpush1.xpose.msra.mxu0 0.0
    %1752 = vmatprep.subr.mxu0 0.0
    %1753 = vmatpush1.xpose.msra.mxu0 0.0
    %1754 = vmatprep.subr.mxu0 0.0
    %1755 = vmatpush1.xpose.msra.mxu0 0.0
    %1756 = vmatprep.subr.mxu0 0.0
    %1757 = vmatpush1.xpose.msra.mxu0 0.0
    %1758 = vmatprep.subr.mxu0 0.0
    %1759 = vmatpush1.xpose.msra.mxu0 0.0
    %1760 = vmatprep.subr.mxu0 0.0
    %1761 = vmatpush1.xpose.msra.mxu0 0.0
    %1762 = vmatprep.subr.mxu0 0.0
    %1763 = vmatpush1.xpose.msra.mxu0 0.0
    %1764 = vmatprep.subr.mxu0 0.0
    %1765 = vmatpush1.xpose.msra.mxu0 0.0
    %1766 = vmatprep.subr.mxu0 0.0
    %1767 = vmatpush1.xpose.msra.mxu0 0.0
    %1768 = vmatprep.subr.mxu0 0.0
    %1769 = vmatpush1.xpose.msra.mxu0 0.0
    %1770 = vmatprep.mubr.f32.mxu0 0.0
    %1771 = vmatmul.mubr.f32.gmra.mrb[0].mxu0 %v1701
    %v1772 = vpop.f32.mrb[0].mxu0
    %v1773 = vadd.f32 0.0, %v1772
    %v1774 = vpop.f32.mrb[0].mxu0
    %1775 = vdwg.mxu0
    %v1776 = vsel %vm319, %v1773, -inf
    %1777 = vmax.xlane.f32.xlu0 %v1776
    %v1778 = vpop.xlane.xlu0 %1777
    %v1779 = vsub.f32 %v1773, %v1778
    %v1780 = vmul.f32 %v1779, 1.442695
    %v1781 = vpow.pop %v1780
    %v1782 = vsel %vm319, %v1781, 0.0
    %1783 = vadd.xlane.f32.xlu0 %v1782
    %v1784 = vpop.xlane.xlu0 %1783
    %v1785 = vrcp.pop %v1784
    %v1786 = vmul.f32 %v1781, %v1785
    %v1788 = vsel %vm319, %v1786, 0
    %1790 = vmatprep.subr.mxu0 0.0
    %1791 = vmatpush1.msra.mxu0 %v1697
    %1792 = vmatprep.subr.mxu0 0.0
    %1793 = vmatpush1.msra.mxu0 0.0
    %1794 = vmatprep.subr.mxu0 0.0
    %1795 = vmatpush1.msra.mxu0 0.0
    %1796 = vmatprep.subr.mxu0 0.0
    %1797 = vmatpush1.msra.mxu0 0.0
    %1798 = vmatprep.subr.mxu0 0.0
    %1799 = vmatpush1.msra.mxu0 0.0
    %1800 = vmatprep.subr.mxu0 0.0
    %1801 = vmatpush1.msra.mxu0 0.0
    %1802 = vmatprep.subr.mxu0 0.0
    %1803 = vmatpush1.msra.mxu0 0.0
    %1804 = vmatprep.subr.mxu0 0.0
    %1805 = vmatpush1.msra.mxu0 0.0
    %1806 = vmatprep.subr.mxu0 0.0
    %1807 = vmatpush1.msra.mxu0 0.0
    %1808 = vmatprep.subr.mxu0 0.0
    %1809 = vmatpush1.msra.mxu0 0.0
    %1810 = vmatprep.subr.mxu0 0.0
    %1811 = vmatpush1.msra.mxu0 0.0
    %1812 = vmatprep.subr.mxu0 0.0
    %1813 = vmatpush1.msra.mxu0 0.0
    %1814 = vmatprep.subr.mxu0 0.0
    %1815 = vmatpush1.msra.mxu0 0.0
    %1816 = vmatprep.subr.mxu0 0.0
    %1817 = vmatpush1.msra.mxu0 0.0
    %1818 = vmatprep.subr.mxu0 0.0
    %1819 = vmatpush1.msra.mxu0 0.0
    %1820 = vmatprep.subr.mxu0 0.0
    %1821 = vmatpush1.msra.mxu0 0.0
    %1822 = vmatprep.subr.mxu0 0.0
    %1823 = vmatpush1.msra.mxu0 0.0
    %1824 = vmatprep.subr.mxu0 0.0
    %1825 = vmatpush1.msra.mxu0 0.0
    %1826 = vmatprep.subr.mxu0 0.0
    %1827 = vmatpush1.msra.mxu0 0.0
    %1828 = vmatprep.subr.mxu0 0.0
    %1829 = vmatpush1.msra.mxu0 0.0
    %1830 = vmatprep.subr.mxu0 0.0
    %1831 = vmatpush1.msra.mxu0 0.0
    %1832 = vmatprep.subr.mxu0 0.0
    %1833 = vmatpush1.msra.mxu0 0.0
    %1834 = vmatprep.subr.mxu0 0.0
    %1835 = vmatpush1.msra.mxu0 0.0
    %1836 = vmatprep.subr.mxu0 0.0
    %1837 = vmatpush1.msra.mxu0 0.0
    %1838 = vmatprep.subr.mxu0 0.0
    %1839 = vmatpush1.msra.mxu0 0.0
    %1840 = vmatprep.subr.mxu0 0.0
    %1841 = vmatpush1.msra.mxu0 0.0
    %1842 = vmatprep.subr.mxu0 0.0
    %1843 = vmatpush1.msra.mxu0 0.0
    %1844 = vmatprep.subr.mxu0 0.0
    %1845 = vmatpush1.msra.mxu0 0.0
    %1846 = vmatprep.subr.mxu0 0.0
    %1847 = vmatpush1.msra.mxu0 0.0
    %1848 = vmatprep.subr.mxu0 0.0
    %1849 = vmatpush1.msra.mxu0 0.0
    %1850 = vmatprep.subr.mxu0 0.0
    %1851 = vmatpush1.msra.mxu0 0.0
    %1852 = vmatprep.subr.mxu0 0.0
    %1853 = vmatpush1.msra.mxu0 0.0
    %1854 = vmatprep.mubr.f32.mxu0 0.0
    %1855 = vmatmul.mubr.f32.gmra.mrb[0].mxu0 %v1788
    %v1856 = vpop.f32.mrb[0].mxu0
    %v1857 = vadd.f32 0.0, %v1856
    %v1858 = vpop.f32.mrb[0].mxu0
    %1859 = vdwg.mxu0
    %s1860 = scalar_lea.vmem %s7, 24
    %v1861 = vld [vmem:[%s1860] sm:$0xff]
    %v1863 = vsel %vm319, %v1857, 0
    %1865 = vmatprep.subr.mxu0 0.0
    %1866 = vmatpush1.msra.mxu0 %v1861
    %1867 = vmatprep.subr.mxu0 0.0
    %1868 = vmatpush1.msra.mxu0 0.0
    %1869 = vmatprep.subr.mxu0 0.0
    %1870 = vmatpush1.msra.mxu0 0.0
    %1871 = vmatprep.subr.mxu0 0.0
    %1872 = vmatpush1.msra.mxu0 0.0
    %1873 = vmatprep.subr.mxu0 0.0
    %1874 = vmatpush1.msra.mxu0 0.0
    %1875 = vmatprep.subr.mxu0 0.0
    %1876 = vmatpush1.msra.mxu0 0.0
    %1877 = vmatprep.subr.mxu0 0.0
    %1878 = vmatpush1.msra.mxu0 0.0
    %1879 = vmatprep.subr.mxu0 0.0
    %1880 = vmatpush1.msra.mxu0 0.0
    %1881 = vmatprep.subr.mxu0 0.0
    %1882 = vmatpush1.msra.mxu0 0.0
    %1883 = vmatprep.subr.mxu0 0.0
    %1884 = vmatpush1.msra.mxu0 0.0
    %1885 = vmatprep.subr.mxu0 0.0
    %1886 = vmatpush1.msra.mxu0 0.0
    %1887 = vmatprep.subr.mxu0 0.0
    %1888 = vmatpush1.msra.mxu0 0.0
    %1889 = vmatprep.subr.mxu0 0.0
    %1890 = vmatpush1.msra.mxu0 0.0
    %1891 = vmatprep.subr.mxu0 0.0
    %1892 = vmatpush1.msra.mxu0 0.0
    %1893 = vmatprep.subr.mxu0 0.0
    %1894 = vmatpush1.msra.mxu0 0.0
    %1895 = vmatprep.subr.mxu0 0.0
    %1896 = vmatpush1.msra.mxu0 0.0
    %1897 = vmatprep.subr.mxu0 0.0
    %1898 = vmatpush1.msra.mxu0 0.0
    %1899 = vmatprep.subr.mxu0 0.0
    %1900 = vmatpush1.msra.mxu0 0.0
    %1901 = vmatprep.subr.mxu0 0.0
    %1902 = vmatpush1.msra.mxu0 0.0
    %1903 = vmatprep.subr.mxu0 0.0
    %1904 = vmatpush1.msra.mxu0 0.0
    %1905 = vmatprep.subr.mxu0 0.0
    %1906 = vmatpush1.msra.mxu0 0.0
    %1907 = vmatprep.subr.mxu0 0.0
    %1908 = vmatpush1.msra.mxu0 0.0
    %1909 = vmatprep.subr.mxu0 0.0
    %1910 = vmatpush1.msra.mxu0 0.0
    %1911 = vmatprep.subr.mxu0 0.0
    %1912 = vmatpush1.msra.mxu0 0.0
    %1913 = vmatprep.subr.mxu0 0.0
    %1914 = vmatpush1.msra.mxu0 0.0
    %1915 = vmatprep.subr.mxu0 0.0
    %1916 = vmatpush1.msra.mxu0 0.0
    %1917 = vmatprep.subr.mxu0 0.0
    %1918 = vmatpush1.msra.mxu0 0.0
    %1919 = vmatprep.subr.mxu0 0.0
    %1920 = vmatpush1.msra.mxu0 0.0
    %1921 = vmatprep.subr.mxu0 0.0
    %1922 = vmatpush1.msra.mxu0 0.0
    %1923 = vmatprep.subr.mxu0 0.0
    %1924 = vmatpush1.msra.mxu0 0.0
    %1925 = vmatprep.subr.mxu0 0.0
    %1926 = vmatpush1.msra.mxu0 0.0
    %1927 = vmatprep.subr.mxu0 0.0
    %1928 = vmatpush1.msra.mxu0 0.0
    %1929 = vmatprep.mubr.f32.mxu0 0.0
    %1930 = vmatmul.mubr.f32.gmra.mrb[0].mxu0 %v1863
    %v1931 = vpop.f32.mrb[0].mxu0
    %v1932 = vadd.f32 0.0, %v1931
    %v1933 = vpop.f32.mrb[0].mxu0
    %1934 = vdwg.mxu0
    %v1935 = vadd.f32 %v1474, %v1932
    %v1936 = vadd.f32 %v62, %v1935
    %v1937 = vld [vmem:[%s8] sm:$0x1]
    %v1939 = vlaneseq
    %v1940 = vshrl.u32 %v1939, 7
    %v1941 = vsub.s32 0, %v1940
    %v1942 = vrot.slane %v1937, %v1941
    %v1944 = vadd.f32 %v1936, %v1942
    %v1945 = vld [vmem:[%s9] sm:$0x1]
    %v1946 = vld [vmem:[%s10] sm:$0x1]
    %v1947 = vsel %vm65, %v1944, 0.0
    %1948 = vadd.xlane.f32.xlu0 %v1947
    %v1949 = vpop.xlane.xlu0 %1948
    %v1950 = vmul.f32 %v1949, %v69
    %v1951 = vsub.f32 %v1944, %v1950
    %v1952 = vmul.f32 %v1951, %v1951
    %v1953 = vsel %vm65, %v1952, 0.0
    %1954 = vadd.xlane.f32.xlu0 %v1953
    %v1955 = vpop.xlane.xlu0 %1954
    %v1956 = vmul.f32 %v1955, %v69
    %v1957 = vadd.f32 %v1956, 1e-05
    %v1958 = vrsqrt.pop %v1957
    %v1959 = vmul.f32 %v1951, %v1958
    %v1961 = vlaneseq
    %v1962 = vshrl.u32 %v1961, 7
    %v1963 = vsub.s32 0, %v1962
    %v1964 = vrot.slane %v1945, %v1963
    %v1966 = vmul.f32 %v1959, %v1964
    %v1968 = vlaneseq
    %v1969 = vshrl.u32 %v1968, 7
    %v1970 = vsub.s32 0, %v1969
    %v1971 = vrot.slane %v1946, %v1970
    %v1973 = vadd.f32 %v1966, %v1971
    %v1974 = vld [vmem:[%s11] sm:$0xff]
    %v1975 = vld [vmem:[%s11 + $0x8] sm:$0xff]
    %v1976 = vld [vmem:[%s11 + $0x10] sm:$0xff]
    %v1977 = vld [vmem:[%s11 + $0x18] sm:$0xff]
    %v1978 = vld [vmem:[%s12] sm:$0x1]
    %v1980 = vlaneseq
    %v1981 = vshrl.u32 %v1980, 7
    %v1982 = vsub.s32 0, %v1981
    %v1983 = vrot.slane %v1978, %v1982
    %v1986 = vsel %vm65, %v1973, 0
    %1988 = vmatprep.subr.mxu0 0.0
    %1989 = vmatpush1.msra.mxu0 %v1974
    %1990 = vmatprep.subr.mxu0 0.0
    %1991 = vmatpush1.msra.mxu0 %v1975
    %1992 = vmatprep.subr.mxu0 0.0
    %1993 = vmatpush1.msra.mxu0 %v1976
    %1994 = vmatprep.subr.mxu0 0.0
    %1995 = vmatpush1.msra.mxu0 %v1977
    %1996 = vmatprep.subr.mxu0 0.0
    %1997 = vmatpush1.msra.mxu0 0.0
    %1998 = vmatprep.subr.mxu0 0.0
    %1999 = vmatpush1.msra.mxu0 0.0
    %2000 = vmatprep.subr.mxu0 0.0
    %2001 = vmatpush1.msra.mxu0 0.0
    %2002 = vmatprep.subr.mxu0 0.0
    %2003 = vmatpush1.msra.mxu0 0.0
    %2004 = vmatprep.subr.mxu0 0.0
    %2005 = vmatpush1.msra.mxu0 0.0
    %2006 = vmatprep.subr.mxu0 0.0
    %2007 = vmatpush1.msra.mxu0 0.0
    %2008 = vmatprep.subr.mxu0 0.0
    %2009 = vmatpush1.msra.mxu0 0.0
    %2010 = vmatprep.subr.mxu0 0.0
    %2011 = vmatpush1.msra.mxu0 0.0
    %2012 = vmatprep.subr.mxu0 0.0
    %2013 = vmatpush1.msra.mxu0 0.0
    %2014 = vmatprep.subr.mxu0 0.0
    %2015 = vmatpush1.msra.mxu0 0.0
    %2016 = vmatprep.subr.mxu0 0.0
    %2017 = vmatpush1.msra.mxu0 0.0
    %2018 = vmatprep.subr.mxu0 0.0
    %2019 = vmatpush1.msra.mxu0 0.0
    %2020 = vmatprep.subr.mxu0 0.0
    %2021 = vmatpush1.msra.mxu0 0.0
    %2022 = vmatprep.subr.mxu0 0.0
    %2023 = vmatpush1.msra.mxu0 0.0
    %2024 = vmatprep.subr.mxu0 0.0
    %2025 = vmatpush1.msra.mxu0 0.0
    %2026 = vmatprep.subr.mxu0 0.0
    %2027 = vmatpush1.msra.mxu0 0.0
    %2028 = vmatprep.subr.mxu0 0.0
    %2029 = vmatpush1.msra.mxu0 0.0
    %2030 = vmatprep.subr.mxu0 0.0
    %2031 = vmatpush1.msra.mxu0 0.0
    %2032 = vmatprep.subr.mxu0 0.0
    %2033 = vmatpush1.msra.mxu0 0.0
    %2034 = vmatprep.subr.mxu0 0.0
    %2035 = vmatpush1.msra.mxu0 0.0
    %2036 = vmatprep.subr.mxu0 0.0
    %2037 = vmatpush1.msra.mxu0 0.0
    %2038 = vmatprep.subr.mxu0 0.0
    %2039 = vmatpush1.msra.mxu0 0.0
    %2040 = vmatprep.subr.mxu0 0.0
    %2041 = vmatpush1.msra.mxu0 0.0
    %2042 = vmatprep.subr.mxu0 0.0
    %2043 = vmatpush1.msra.mxu0 0.0
    %2044 = vmatprep.subr.mxu0 0.0
    %2045 = vmatpush1.msra.mxu0 0.0
    %2046 = vmatprep.subr.mxu0 0.0
    %2047 = vmatpush1.msra.mxu0 0.0
    %2048 = vmatprep.subr.mxu0 0.0
    %2049 = vmatpush1.msra.mxu0 0.0
    %2050 = vmatprep.subr.mxu0 0.0
    %2051 = vmatpush1.msra.mxu0 0.0
    %2052 = vmatprep.mubr.f32.mxu0 0.0
    %2053 = vmatmul.mubr.f32.gmra.mrb[0].mxu0 %v1986
    %v2054 = vpop.f32.mrb[0].mxu0
    %v2055 = vadd.f32 %v1983, %v2054
    %v2056 = vpop.f32.mrb[0].mxu0
    %2057 = vdwg.mxu0
    %v2058 = vmax.f32 %v2055, 0.0
    %v2059 = vld [vmem:[%s13] sm:$0xff]
    %v2060 = vld [vmem:[%s13 + $0x8] sm:$0xff]
    %v2061 = vld [vmem:[%s13 + $0x10] sm:$0xff]
    %v2062 = vld [vmem:[%s13 + $0x18] sm:$0xff]
    %v2063 = vld [vmem:[%s13 + $0x20] sm:$0xff]
    %v2064 = vld [vmem:[%s13 + $0x28] sm:$0xff]
    %v2065 = vld [vmem:[%s13 + $0x30] sm:$0xff]
    %v2066 = vld [vmem:[%s13 + $0x38] sm:$0xff]
    %v2067 = vld [vmem:[%s14] sm:$0x1]
    %v2069 = vlaneseq
    %v2070 = vshrl.u32 %v2069, 7
    %v2071 = vsub.s32 0, %v2070
    %v2072 = vrot.slane %v2067, %v2071
    %vm2074 = vcmask 523264
    %v2076 = vsel %vm2074, %v2058, 0
    %2078 = vmatprep.subr.mxu0 0.0
    %2079 = vmatpush1.msra.mxu0 %v2059
    %2080 = vmatprep.subr.mxu0 0.0
    %2081 = vmatpush1.msra.mxu0 %v2060
    %2082 = vmatprep.subr.mxu0 0.0
    %2083 = vmatpush1.msra.mxu0 %v2061
    %2084 = vmatprep.subr.mxu0 0.0
    %2085 = vmatpush1.msra.mxu0 %v2062
    %2086 = vmatprep.subr.mxu0 0.0
    %2087 = vmatpush1.msra.mxu0 %v2063
    %2088 = vmatprep.subr.mxu0 0.0
    %2089 = vmatpush1.msra.mxu0 %v2064
    %2090 = vmatprep.subr.mxu0 0.0
    %2091 = vmatpush1.msra.mxu0 %v2065
    %2092 = vmatprep.subr.mxu0 0.0
    %2093 = vmatpush1.msra.mxu0 %v2066
    %2094 = vmatprep.subr.mxu0 0.0
    %2095 = vmatpush1.msra.mxu0 0.0
    %2096 = vmatprep.subr.mxu0 0.0
    %2097 = vmatpush1.msra.mxu0 0.0
    %2098 = vmatprep.subr.mxu0 0.0
    %2099 = vmatpush1.msra.mxu0 0.0
    %2100 = vmatprep.subr.mxu0 0.0
    %2101 = vmatpush1.msra.mxu0 0.0
    %2102 = vmatprep.subr.mxu0 0.0
    %2103 = vmatpush1.msra.mxu0 0.0
    %2104 = vmatprep.subr.mxu0 0.0
    %2105 = vmatpush1.msra.mxu0 0.0
    %2106 = vmatprep.subr.mxu0 0.0
    %2107 = vmatpush1.msra.mxu0 0.0
    %2108 = vmatprep.subr.mxu0 0.0
    %2109 = vmatpush1.msra.mxu0 0.0
    %2110 = vmatprep.subr.mxu0 0.0
    %2111 = vmatpush1.msra.mxu0 0.0
    %2112 = vmatprep.subr.mxu0 0.0
    %2113 = vmatpush1.msra.mxu0 0.0
    %2114 = vmatprep.subr.mxu0 0.0
    %2115 = vmatpush1.msra.mxu0 0.0
    %2116 = vmatprep.subr.mxu0 0.0
    %2117 = vmatpush1.msra.mxu0 0.0
    %2118 = vmatprep.subr.mxu0 0.0
    %2119 = vmatpush1.msra.mxu0 0.0
    %2120 = vmatprep.subr.mxu0 0.0
    %2121 = vmatpush1.msra.mxu0 0.0
    %2122 = vmatprep.subr.mxu0 0.0
    %2123 = vmatpush1.msra.mxu0 0.0
    %2124 = vmatprep.subr.mxu0 0.0
    %2125 = vmatpush1.msra.mxu0 0.0
    %2126 = vmatprep.subr.mxu0 0.0
    %2127 = vmatpush1.msra.mxu0 0.0
    %2128 = vmatprep.subr.mxu0 0.0
    %2129 = vmatpush1.msra.mxu0 0.0
    %2130 = vmatprep.subr.mxu0 0.0
    %2131 = vmatpush1.msra.mxu0 0.0
    %2132 = vmatprep.subr.mxu0 0.0
    %2133 = vmatpush1.msra.mxu0 0.0
    %2134 = vmatprep.subr.mxu0 0.0
    %2135 = vmatpush1.msra.mxu0 0.0
    %2136 = vmatprep.subr.mxu0 0.0
    %2137 = vmatpush1.msra.mxu0 0.0
    %2138 = vmatprep.subr.mxu0 0.0
    %2139 = vmatpush1.msra.mxu0 0.0
    %2140 = vmatprep.subr.mxu0 0.0
    %2141 = vmatpush1.msra.mxu0 0.0
    %2142 = vmatprep.mubr.f32.mxu0 0.0
    %2143 = vmatmul.mubr.f32.gmra.mrb[0].mxu0 %v2076
    %v2144 = vpop.f32.mrb[0].mxu0
    %v2145 = vadd.f32 %v2072, %v2144
    %v2146 = vpop.f32.mrb[0].mxu0
    %2147 = vdwg.mxu0
    %v2148 = vadd.f32 %v1944, %v2145
    %s2149 = scalar_lea.vmem %s2, 1
    %v2150 = vld [vmem:[%s2149] sm:$0x1]
    %s2151 = scalar_lea.vmem %s3, 1
    %v2152 = vld [vmem:[%s2151] sm:$0x1]
    %v2153 = vsel %vm65, %v2148, 0.0
    %2154 = vadd.xlane.f32.xlu0 %v2153
    %v2155 = vpop.xlane.xlu0 %2154
    %v2156 = vmul.f32 %v2155, %v69
    %v2157 = vsub.f32 %v2148, %v2156
    %v2158 = vmul.f32 %v2157, %v2157
    %v2159 = vsel %vm65, %v2158, 0.0
    %2160 = vadd.xlane.f32.xlu0 %v2159
    %v2161 = vpop.xlane.xlu0 %2160
    %v2162 = vmul.f32 %v2161, %v69
    %v2163 = vadd.f32 %v2162, 1e-05
    %v2164 = vrsqrt.pop %v2163
    %v2165 = vmul.f32 %v2157, %v2164
    %v2167 = vlaneseq
    %v2168 = vshrl.u32 %v2167, 7
    %v2169 = vsub.s32 0, %v2168
    %v2170 = vrot.slane %v2150, %v2169
    %v2172 = vmul.f32 %v2165, %v2170
    %v2174 = vlaneseq
    %v2175 = vshrl.u32 %v2174, 7
    %v2176 = vsub.s32 0, %v2175
    %v2177 = vrot.slane %v2152, %v2176
    %v2179 = vadd.f32 %v2172, %v2177
    %s2180 = scalar_lea.vmem %s4, 128
    %v2181 = vld [vmem:[%s2180] sm:$0xff]
    %v2182 = vld [vmem:[%s2180 + $0x8] sm:$0xff]
    %v2183 = vld [vmem:[%s2180 + $0x10] sm:$0xff]
    %v2184 = vld [vmem:[%s2180 + $0x18] sm:$0xff]
    %v2186 = vsel %vm65, %v2179, 0
    %2188 = vmatprep.subr.mxu0 0.0
    %2189 = vmatpush1.msra.mxu0 %v2181
    %2190 = vmatprep.subr.mxu0 0.0
    %2191 = vmatpush1.msra.mxu0 %v2182
    %2192 = vmatprep.subr.mxu0 0.0
    %2193 = vmatpush1.msra.mxu0 %v2183
    %2194 = vmatprep.subr.mxu0 0.0
    %2195 = vmatpush1.msra.mxu0 %v2184
    %2196 = vmatprep.subr.mxu0 0.0
    %2197 = vmatpush1.msra.mxu0 0.0
    %2198 = vmatprep.subr.mxu0 0.0
    %2199 = vmatpush1.msra.mxu0 0.0
    %2200 = vmatprep.subr.mxu0 0.0
    %2201 = vmatpush1.msra.mxu0 0.0
    %2202 = vmatprep.subr.mxu0 0.0
    %2203 = vmatpush1.msra.mxu0 0.0
    %2204 = vmatprep.subr.mxu0 0.0
    %2205 = vmatpush1.msra.mxu0 0.0
    %2206 = vmatprep.subr.mxu0 0.0
    %2207 = vmatpush1.msra.mxu0 0.0
    %2208 = vmatprep.subr.mxu0 0.0
    %2209 = vmatpush1.msra.mxu0 0.0
    %2210 = vmatprep.subr.mxu0 0.0
    %2211 = vmatpush1.msra.mxu0 0.0
    %2212 = vmatprep.subr.mxu0 0.0
    %2213 = vmatpush1.msra.mxu0 0.0
    %2214 = vmatprep.subr.mxu0 0.0
    %2215 = vmatpush1.msra.mxu0 0.0
    %2216 = vmatprep.subr.mxu0 0.0
    %2217 = vmatpush1.msra.mxu0 0.0
    %2218 = vmatprep.subr.mxu0 0.0
    %2219 = vmatpush1.msra.mxu0 0.0
    %2220 = vmatprep.subr.mxu0 0.0
    %2221 = vmatpush1.msra.mxu0 0.0
    %2222 = vmatprep.subr.mxu0 0.0
    %2223 = vmatpush1.msra.mxu0 0.0
    %2224 = vmatprep.subr.mxu0 0.0
    %2225 = vmatpush1.msra.mxu0 0.0
    %2226 = vmatprep.subr.mxu0 0.0
    %2227 = vmatpush1.msra.mxu0 0.0
    %2228 = vmatprep.subr.mxu0 0.0
    %2229 = vmatpush1.msra.mxu0 0.0
    %2230 = vmatprep.subr.mxu0 0.0
    %2231 = vmatpush1.msra.mxu0 0.0
    %2232 = vmatprep.subr.mxu0 0.0
    %2233 = vmatpush1.msra.mxu0 0.0
    %2234 = vmatprep.subr.mxu0 0.0
    %2235 = vmatpush1.msra.mxu0 0.0
    %2236 = vmatprep.subr.mxu0 0.0
    %2237 = vmatpush1.msra.mxu0 0.0
    %2238 = vmatprep.subr.mxu0 0.0
    %2239 = vmatpush1.msra.mxu0 0.0
    %2240 = vmatprep.subr.mxu0 0.0
    %2241 = vmatpush1.msra.mxu0 0.0
    %2242 = vmatprep.subr.mxu0 0.0
    %2243 = vmatpush1.msra.mxu0 0.0
    %2244 = vmatprep.subr.mxu0 0.0
    %2245 = vmatpush1.msra.mxu0 0.0
    %2246 = vmatprep.subr.mxu0 0.0
    %2247 = vmatpush1.msra.mxu0 0.0
    %2248 = vmatprep.subr.mxu0 0.0
    %2249 = vmatpush1.msra.mxu0 0.0
    %2250 = vmatprep.subr.mxu0 0.0
    %2251 = vmatpush1.msra.mxu0 0.0
    %2252 = vmatprep.mubr.f32.mxu0 0.0
    %2253 = vmatmul.mubr.f32.gmra.mrb[0].mxu0 %v2186
    %v2254 = vpop.f32.mrb[0].mxu0
    %v2255 = vadd.f32 0.0, %v2254
    %v2256 = vpop.f32.mrb[0].mxu0
    %2257 = vdwg.mxu0
    %s2258 = scalar_lea.vmem %s5, 128
    %v2259 = vld [vmem:[%s2258] sm:$0xff]
    %v2260 = vld [vmem:[%s2258 + $0x8] sm:$0xff]
    %v2261 = vld [vmem:[%s2258 + $0x10] sm:$0xff]
    %v2262 = vld [vmem:[%s2258 + $0x18] sm:$0xff]
    %2263 = vmatprep.subr.mxu0 0.0
    %2264 = vmatpush1.msra.mxu0 %v2259
    %2265 = vmatprep.subr.mxu0 0.0
    %2266 = vmatpush1.msra.mxu0 %v2260
    %2267 = vmatprep.subr.mxu0 0.0
    %2268 = vmatpush1.msra.mxu0 %v2261
    %2269 = vmatprep.subr.mxu0 0.0
    %2270 = vmatpush1.msra.mxu0 %v2262
    %2271 = vmatprep.subr.mxu0 0.0
    %2272 = vmatpush1.msra.mxu0 0.0
    %2273 = vmatprep.subr.mxu0 0.0
    %2274 = vmatpush1.msra.mxu0 0.0
    %2275 = vmatprep.subr.mxu0 0.0
    %2276 = vmatpush1.msra.mxu0 0.0
    %2277 = vmatprep.subr.mxu0 0.0
    %2278 = vmatpush1.msra.mxu0 0.0
    %2279 = vmatprep.subr.mxu0 0.0
    %2280 = vmatpush1.msra.mxu0 0.0
    %2281 = vmatprep.subr.mxu0 0.0
    %2282 = vmatpush1.msra.mxu0 0.0
    %2283 = vmatprep.subr.mxu0 0.0
    %2284 = vmatpush1.msra.mxu0 0.0
    %2285 = vmatprep.subr.mxu0 0.0
    %2286 = vmatpush1.msra.mxu0 0.0
    %2287 = vmatprep.subr.mxu0 0.0
    %2288 = vmatpush1.msra.mxu0 0.0
    %2289 = vmatprep.subr.mxu0 0.0
    %2290 = vmatpush1.msra.mxu0 0.0
    %2291 = vmatprep.subr.mxu0 0.0
    %2292 = vmatpush1.msra.mxu0 0.0
    %2293 = vmatprep.subr.mxu0 0.0
    %2294 = vmatpush1.msra.mxu0 0.0
    %2295 = vmatprep.subr.mxu0 0.0
    %2296 = vmatpush1.msra.mxu0 0.0
    %2297 = vmatprep.subr.mxu0 0.0
    %2298 = vmatpush1.msra.mxu0 0.0
    %2299 = vmatprep.subr.mxu0 0.0
    %2300 = vmatpush1.msra.mxu0 0.0
    %2301 = vmatprep.subr.mxu0 0.0
    %2302 = vmatpush1.msra.mxu0 0.0
    %2303 = vmatprep.subr.mxu0 0.0
    %2304 = vmatpush1.msra.mxu0 0.0
    %2305 = vmatprep.subr.mxu0 0.0
    %2306 = vmatpush1.msra.mxu0 0.0
    %2307 = vmatprep.subr.mxu0 0.0
    %2308 = vmatpush1.msra.mxu0 0.0
    %2309 = vmatprep.subr.mxu0 0.0
    %2310 = vmatpush1.msra.mxu0 0.0
    %2311 = vmatprep.subr.mxu0 0.0
    %2312 = vmatpush1.msra.mxu0 0.0
    %2313 = vmatprep.subr.mxu0 0.0
    %2314 = vmatpush1.msra.mxu0 0.0
    %2315 = vmatprep.subr.mxu0 0.0
    %2316 = vmatpush1.msra.mxu0 0.0
    %2317 = vmatprep.subr.mxu0 0.0
    %2318 = vmatpush1.msra.mxu0 0.0
    %2319 = vmatprep.subr.mxu0 0.0
    %2320 = vmatpush1.msra.mxu0 0.0
    %2321 = vmatprep.subr.mxu0 0.0
    %2322 = vmatpush1.msra.mxu0 0.0
    %2323 = vmatprep.subr.mxu0 0.0
    %2324 = vmatpush1.msra.mxu0 0.0
    %2325 = vmatprep.subr.mxu0 0.0
    %2326 = vmatpush1.msra.mxu0 0.0
    %2327 = vmatprep.mubr.f32.mxu0 0.0
    %2328 = vmatmul.mubr.f32.gmra.mrb[0].mxu0 %v2186
    %v2329 = vpop.f32.mrb[0].mxu0
    %v2330 = vadd.f32 0.0, %v2329
    %v2331 = vpop.f32.mrb[0].mxu0
    %2332 = vdwg.mxu0
    %s2333 = scalar_lea.vmem %s6, 128
    %v2334 = vld [vmem:[%s2333] sm:$0xff]
    %v2335 = vld [vmem:[%s2333 + $0x8] sm:$0xff]
    %v2336 = vld [vmem:[%s2333 + $0x10] sm:$0xff]
    %v2337 = vld [vmem:[%s2333 + $0x18] sm:$0xff]
    %2338 = vmatprep.subr.mxu0 0.0
    %2339 = vmatpush1.msra.mxu0 %v2334
    %2340 = vmatprep.subr.mxu0 0.0
    %2341 = vmatpush1.msra.mxu0 %v2335
    %2342 = vmatprep.subr.mxu0 0.0
    %2343 = vmatpush1.msra.mxu0 %v2336
    %2344 = vmatprep.subr.mxu0 0.0
    %2345 = vmatpush1.msra.mxu0 %v2337
    %2346 = vmatprep.subr.mxu0 0.0
    %2347 = vmatpush1.msra.mxu0 0.0
    %2348 = vmatprep.subr.mxu0 0.0
    %2349 = vmatpush1.msra.mxu0 0.0
    %2350 = vmatprep.subr.mxu0 0.0
    %2351 = vmatpush1.msra.mxu0 0.0
    %2352 = vmatprep.subr.mxu0 0.0
    %2353 = vmatpush1.msra.mxu0 0.0
    %2354 = vmatprep.subr.mxu0 0.0
    %2355 = vmatpush1.msra.mxu0 0.0
    %2356 = vmatprep.subr.mxu0 0.0
    %2357 = vmatpush1.msra.mxu0 0.0
    %2358 = vmatprep.subr.mxu0 0.0
    %2359 = vmatpush1.msra.mxu0 0.0
    %2360 = vmatprep.subr.mxu0 0.0
    %2361 = vmatpush1.msra.mxu0 0.0
    %2362 = vmatprep.subr.mxu0 0.0
    %2363 = vmatpush1.msra.mxu0 0.0
    %2364 = vmatprep.subr.mxu0 0.0
    %2365 = vmatpush1.msra.mxu0 0.0
    %2366 = vmatprep.subr.mxu0 0.0
    %2367 = vmatpush1.msra.mxu0 0.0
    %2368 = vmatprep.subr.mxu0 0.0
    %2369 = vmatpush1.msra.mxu0 0.0
    %2370 = vmatprep.subr.mxu0 0.0
    %2371 = vmatpush1.msra.mxu0 0.0
    %2372 = vmatprep.subr.mxu0 0.0
    %2373 = vmatpush1.msra.mxu0 0.0
    %2374 = vmatprep.subr.mxu0 0.0
    %2375 = vmatpush1.msra.mxu0 0.0
    %2376 = vmatprep.subr.mxu0 0.0
    %2377 = vmatpush1.msra.mxu0 0.0
    %2378 = vmatprep.subr.mxu0 0.0
    %2379 = vmatpush1.msra.mxu0 0.0
    %2380 = vmatprep.subr.mxu0 0.0
    %2381 = vmatpush1.msra.mxu0 0.0
    %2382 = vmatprep.subr.mxu0 0.0
    %2383 = vmatpush1.msra.mxu0 0.0
    %2384 = vmatprep.subr.mxu0 0.0
    %2385 = vmatpush1.msra.mxu0 0.0
    %2386 = vmatprep.subr.mxu0 0.0
    %2387 = vmatpush1.msra.mxu0 0.0
    %2388 = vmatprep.subr.mxu0 0.0
    %2389 = vmatpush1.msra.mxu0 0.0
    %2390 = vmatprep.subr.mxu0 0.0
    %2391 = vmatpush1.msra.mxu0 0.0
    %2392 = vmatprep.subr.mxu0 0.0
    %2393 = vmatpush1.msra.mxu0 0.0
    %2394 = vmatprep.subr.mxu0 0.0
    %2395 = vmatpush1.msra.mxu0 0.0
    %2396 = vmatprep.subr.mxu0 0.0
    %2397 = vmatpush1.msra.mxu0 0.0
    %2398 = vmatprep.subr.mxu0 0.0
    %2399 = vmatpush1.msra.mxu0 0.0
    %2400 = vmatprep.subr.mxu0 0.0
    %2401 = vmatpush1.msra.mxu0 0.0
    %2402 = vmatprep.mubr.f32.mxu0 0.0
    %2403 = vmatmul.mubr.f32.gmra.mrb[0].mxu0 %v2186
    %v2404 = vpop.f32.mrb[0].mxu0
    %v2405 = vadd.f32 0.0, %v2404
    %v2406 = vpop.f32.mrb[0].mxu0
    %2407 = vdwg.mxu0
    %v2409 = vsel %vm319, %v2255, 0
    %v2412 = vsel %vm319, %v2330, 0
    %2414 = vmatprep.subr.mxu0 0.0
    %2415 = vmatpush1.xpose.msra.mxu0 %v2412
    %2416 = vmatprep.subr.mxu0 0.0
    %2417 = vmatpush1.xpose.msra.mxu0 0.0
    %2418 = vmatprep.subr.mxu0 0.0
    %2419 = vmatpush1.xpose.msra.mxu0 0.0
    %2420 = vmatprep.subr.mxu0 0.0
    %2421 = vmatpush1.xpose.msra.mxu0 0.0
    %2422 = vmatprep.subr.mxu0 0.0
    %2423 = vmatpush1.xpose.msra.mxu0 0.0
    %2424 = vmatprep.subr.mxu0 0.0
    %2425 = vmatpush1.xpose.msra.mxu0 0.0
    %2426 = vmatprep.subr.mxu0 0.0
    %2427 = vmatpush1.xpose.msra.mxu0 0.0
    %2428 = vmatprep.subr.mxu0 0.0
    %2429 = vmatpush1.xpose.msra.mxu0 0.0
    %2430 = vmatprep.subr.mxu0 0.0
    %2431 = vmatpush1.xpose.msra.mxu0 0.0
    %2432 = vmatprep.subr.mxu0 0.0
    %2433 = vmatpush1.xpose.msra.mxu0 0.0
    %2434 = vmatprep.subr.mxu0 0.0
    %2435 = vmatpush1.xpose.msra.mxu0 0.0
    %2436 = vmatprep.subr.mxu0 0.0
    %2437 = vmatpush1.xpose.msra.mxu0 0.0
    %2438 = vmatprep.subr.mxu0 0.0
    %2439 = vmatpush1.xpose.msra.mxu0 0.0
    %2440 = vmatprep.subr.mxu0 0.0
    %2441 = vmatpush1.xpose.msra.mxu0 0.0
    %2442 = vmatprep.subr.mxu0 0.0
    %2443 = vmatpush1.xpose.msra.mxu0 0.0
    %2444 = vmatprep.subr.mxu0 0.0
    %2445 = vmatpush1.xpose.msra.mxu0 0.0
    %2446 = vmatprep.subr.mxu0 0.0
    %2447 = vmatpush1.xpose.msra.mxu0 0.0
    %2448 = vmatprep.subr.mxu0 0.0
    %2449 = vmatpush1.xpose.msra.mxu0 0.0
    %2450 = vmatprep.subr.mxu0 0.0
    %2451 = vmatpush1.xpose.msra.mxu0 0.0
    %2452 = vmatprep.subr.mxu0 0.0
    %2453 = vmatpush1.xpose.msra.mxu0 0.0
    %2454 = vmatprep.subr.mxu0 0.0
    %2455 = vmatpush1.xpose.msra.mxu0 0.0
    %2456 = vmatprep.subr.mxu0 0.0
    %2457 = vmatpush1.xpose.msra.mxu0 0.0
    %2458 = vmatprep.subr.mxu0 0.0
    %2459 = vmatpush1.xpose.msra.mxu0 0.0
    %2460 = vmatprep.subr.mxu0 0.0
    %2461 = vmatpush1.xpose.msra.mxu0 0.0
    %2462 = vmatprep.subr.mxu0 0.0
    %2463 = vmatpush1.xpose.msra.mxu0 0.0
    %2464 = vmatprep.subr.mxu0 0.0
    %2465 = vmatpush1.xpose.msra.mxu0 0.0
    %2466 = vmatprep.subr.mxu0 0.0
    %2467 = vmatpush1.xpose.msra.mxu0 0.0
    %2468 = vmatprep.subr.mxu0 0.0
    %2469 = vmatpush1.xpose.msra.mxu0 0.0
    %2470 = vmatprep.subr.mxu0 0.0
    %2471 = vmatpush1.xpose.msra.mxu0 0.0
    %2472 = vmatprep.subr.mxu0 0.0
    %2473 = vmatpush1.xpose.msra.mxu0 0.0
    %2474 = vmatprep.subr.mxu0 0.0
    %2475 = vmatpush1.xpose.msra.mxu0 0.0
    %2476 = vmatprep.subr.mxu0 0.0
    %2477 = vmatpush1.xpose.msra.mxu0 0.0
    %2478 = vmatprep.mubr.f32.mxu0 0.0
    %2479 = vmatmul.mubr.f32.gmra.mrb[0].mxu0 %v2409
    %v2480 = vpop.f32.mrb[0].mxu0
    %v2481 = vadd.f32 0.0, %v2480
    %v2482 = vpop.f32.mrb[0].mxu0
    %2483 = vdwg.mxu0
    %v2484 = vsel %vm319, %v2481, -inf
    %2485 = vmax.xlane.f32.xlu0 %v2484
    %v2486 = vpop.xlane.xlu0 %2485
    %v2487 = vsub.f32 %v2481, %v2486
    %v2488 = vmul.f32 %v2487, 1.442695
    %v2489 = vpow.pop %v2488
    %v2490 = vsel %vm319, %v2489, 0.0
    %2491 = vadd.xlane.f32.xlu0 %v2490
    %v2492 = vpop.xlane.xlu0 %2491
    %v2493 = vrcp.pop %v2492
    %v2494 = vmul.f32 %v2489, %v2493
    %v2496 = vsel %vm319, %v2494, 0
    %2498 = vmatprep.subr.mxu0 0.0
    %2499 = vmatpush1.msra.mxu0 %v2405
    %2500 = vmatprep.subr.mxu0 0.0
    %2501 = vmatpush1.msra.mxu0 0.0
    %2502 = vmatprep.subr.mxu0 0.0
    %2503 = vmatpush1.msra.mxu0 0.0
    %2504 = vmatprep.subr.mxu0 0.0
    %2505 = vmatpush1.msra.mxu0 0.0
    %2506 = vmatprep.subr.mxu0 0.0
    %2507 = vmatpush1.msra.mxu0 0.0
    %2508 = vmatprep.subr.mxu0 0.0
    %2509 = vmatpush1.msra.mxu0 0.0
    %2510 = vmatprep.subr.mxu0 0.0
    %2511 = vmatpush1.msra.mxu0 0.0
    %2512 = vmatprep.subr.mxu0 0.0
    %2513 = vmatpush1.msra.mxu0 0.0
    %2514 = vmatprep.subr.mxu0 0.0
    %2515 = vmatpush1.msra.mxu0 0.0
    %2516 = vmatprep.subr.mxu0 0.0
    %2517 = vmatpush1.msra.mxu0 0.0
    %2518 = vmatprep.subr.mxu0 0.0
    %2519 = vmatpush1.msra.mxu0 0.0
    %2520 = vmatprep.subr.mxu0 0.0
    %2521 = vmatpush1.msra.mxu0 0.0
    %2522 = vmatprep.subr.mxu0 0.0
    %2523 = vmatpush1.msra.mxu0 0.0
    %2524 = vmatprep.subr.mxu0 0.0
    %2525 = vmatpush1.msra.mxu0 0.0
    %2526 = vmatprep.subr.mxu0 0.0
    %2527 = vmatpush1.msra.mxu0 0.0
    %2528 = vmatprep.subr.mxu0 0.0
    %2529 = vmatpush1.msra.mxu0 0.0
    %2530 = vmatprep.subr.mxu0 0.0
    %2531 = vmatpush1.msra.mxu0 0.0
    %2532 = vmatprep.subr.mxu0 0.0
    %2533 = vmatpush1.msra.mxu0 0.0
    %2534 = vmatprep.subr.mxu0 0.0
    %2535 = vmatpush1.msra.mxu0 0.0
    %2536 = vmatprep.subr.mxu0 0.0
    %2537 = vmatpush1.msra.mxu0 0.0
    %2538 = vmatprep.subr.mxu0 0.0
    %2539 = vmatpush1.msra.mxu0 0.0
    %2540 = vmatprep.subr.mxu0 0.0
    %2541 = vmatpush1.msra.mxu0 0.0
    %2542 = vmatprep.subr.mxu0 0.0
    %2543 = vmatpush1.msra.mxu0 0.0
    %2544 = vmatprep.subr.mxu0 0.0
    %2545 = vmatpush1.msra.mxu0 0.0
    %2546 = vmatprep.subr.mxu0 0.0
    %2547 = vmatpush1.msra.mxu0 0.0
    %2548 = vmatprep.subr.mxu0 0.0
    %2549 = vmatpush1.msra.mxu0 0.0
    %2550 = vmatprep.subr.mxu0 0.0
    %2551 = vmatpush1.msra.mxu0 0.0
    %2552 = vmatprep.subr.mxu0 0.0
    %2553 = vmatpush1.msra.mxu0 0.0
    %2554 = vmatprep.subr.mxu0 0.0
    %2555 = vmatpush1.msra.mxu0 0.0
    %2556 = vmatprep.subr.mxu0 0.0
    %2557 = vmatpush1.msra.mxu0 0.0
    %2558 = vmatprep.subr.mxu0 0.0
    %2559 = vmatpush1.msra.mxu0 0.0
    %2560 = vmatprep.subr.mxu0 0.0
    %2561 = vmatpush1.msra.mxu0 0.0
    %2562 = vmatprep.mubr.f32.mxu0 0.0
    %2563 = vmatmul.mubr.f32.gmra.mrb[0].mxu0 %v2496
    %v2564 = vpop.f32.mrb[0].mxu0
    %v2565 = vadd.f32 0.0, %v2564
    %v2566 = vpop.f32.mrb[0].mxu0
    %2567 = vdwg.mxu0
    %s2568 = scalar_lea.vmem %s7, 32
    %v2569 = vld [vmem:[%s2568] sm:$0xff]
    %s2570 = scalar_lea.vmem %s4, 160
    %v2571 = vld [vmem:[%s2570] sm:$0xff]
    %v2572 = vld [vmem:[%s2570 + $0x8] sm:$0xff]
    %v2573 = vld [vmem:[%s2570 + $0x10] sm:$0xff]
    %v2574 = vld [vmem:[%s2570 + $0x18] sm:$0xff]
    %2575 = vmatprep.subr.mxu0 0.0
    %2576 = vmatpush1.msra.mxu0 %v2571
    %2577 = vmatprep.subr.mxu0 0.0
    %2578 = vmatpush1.msra.mxu0 %v2572
    %2579 = vmatprep.subr.mxu0 0.0
    %2580 = vmatpush1.msra.mxu0 %v2573
    %2581 = vmatprep.subr.mxu0 0.0
    %2582 = vmatpush1.msra.mxu0 %v2574
    %2583 = vmatprep.subr.mxu0 0.0
    %2584 = vmatpush1.msra.mxu0 0.0
    %2585 = vmatprep.subr.mxu0 0.0
    %2586 = vmatpush1.msra.mxu0 0.0
    %2587 = vmatprep.subr.mxu0 0.0
    %2588 = vmatpush1.msra.mxu0 0.0
    %2589 = vmatprep.subr.mxu0 0.0
    %2590 = vmatpush1.msra.mxu0 0.0
    %2591 = vmatprep.subr.mxu0 0.0
    %2592 = vmatpush1.msra.mxu0 0.0
    %2593 = vmatprep.subr.mxu0 0.0
    %2594 = vmatpush1.msra.mxu0 0.0
    %2595 = vmatprep.subr.mxu0 0.0
    %2596 = vmatpush1.msra.mxu0 0.0
    %2597 = vmatprep.subr.mxu0 0.0
    %2598 = vmatpush1.msra.mxu0 0.0
    %2599 = vmatprep.subr.mxu0 0.0
    %2600 = vmatpush1.msra.mxu0 0.0
    %2601 = vmatprep.subr.mxu0 0.0
    %2602 = vmatpush1.msra.mxu0 0.0
    %2603 = vmatprep.subr.mxu0 0.0
    %2604 = vmatpush1.msra.mxu0 0.0
    %2605 = vmatprep.subr.mxu0 0.0
    %2606 = vmatpush1.msra.mxu0 0.0
    %2607 = vmatprep.subr.mxu0 0.0
    %2608 = vmatpush1.msra.mxu0 0.0
    %2609 = vmatprep.subr.mxu0 0.0
    %2610 = vmatpush1.msra.mxu0 0.0
    %2611 = vmatprep.subr.mxu0 0.0
    %2612 = vmatpush1.msra.mxu0 0.0
    %2613 = vmatprep.subr.mxu0 0.0
    %2614 = vmatpush1.msra.mxu0 0.0
    %2615 = vmatprep.subr.mxu0 0.0
    %2616 = vmatpush1.msra.mxu0 0.0
    %2617 = vmatprep.subr.mxu0 0.0
    %2618 = vmatpush1.msra.mxu0 0.0
    %2619 = vmatprep.subr.mxu0 0.0
    %2620 = vmatpush1.msra.mxu0 0.0
    %2621 = vmatprep.subr.mxu0 0.0
    %2622 = vmatpush1.msra.mxu0 0.0
    %2623 = vmatprep.subr.mxu0 0.0
    %2624 = vmatpush1.msra.mxu0 0.0
    %2625 = vmatprep.subr.mxu0 0.0
    %2626 = vmatpush1.msra.mxu0 0.0
    %2627 = vmatprep.subr.mxu0 0.0
    %2628 = vmatpush1.msra.mxu0 0.0
    %2629 = vmatprep.subr.mxu0 0.0
    %2630 = vmatpush1.msra.mxu0 0.0
    %2631 = vmatprep.subr.mxu0 0.0
    %2632 = vmatpush1.msra.mxu0 0.0
    %2633 = vmatprep.subr.mxu0 0.0
    %2634 = vmatpush1.msra.mxu0 0.0
    %2635 = vmatprep.subr.mxu0 0.0
    %2636 = vmatpush1.msra.mxu0 0.0
    %2637 = vmatprep.subr.mxu0 0.0
    %2638 = vmatpush1.msra.mxu0 0.0
    %2639 = vmatprep.mubr.f32.mxu0 0.0
    %2640 = vmatmul.mubr.f32.gmra.mrb[0].mxu0 %v2186
    %v2641 = vpop.f32.mrb[0].mxu0
    %v2642 = vadd.f32 0.0, %v2641
    %v2643 = vpop.f32.mrb[0].mxu0
    %2644 = vdwg.mxu0
    %s2645 = scalar_lea.vmem %s5, 160
    %v2646 = vld [vmem:[%s2645] sm:$0xff]
    %v2647 = vld [vmem:[%s2645 + $0x8] sm:$0xff]
    %v2648 = vld [vmem:[%s2645 + $0x10] sm:$0xff]
    %v2649 = vld [vmem:[%s2645 + $0x18] sm:$0xff]
    %2650 = vmatprep.subr.mxu0 0.0
    %2651 = vmatpush1.msra.mxu0 %v2646
    %2652 = vmatprep.subr.mxu0 0.0
    %2653 = vmatpush1.msra.mxu0 %v2647
    %2654 = vmatprep.subr.mxu0 0.0
    %2655 = vmatpush1.msra.mxu0 %v2648
    %2656 = vmatprep.subr.mxu0 0.0
    %2657 = vmatpush1.msra.mxu0 %v2649
    %2658 = vmatprep.subr.mxu0 0.0
    %2659 = vmatpush1.msra.mxu0 0.0
    %2660 = vmatprep.subr.mxu0 0.0
    %2661 = vmatpush1.msra.mxu0 0.0
    %2662 = vmatprep.subr.mxu0 0.0
    %2663 = vmatpush1.msra.mxu0 0.0
    %2664 = vmatprep.subr.mxu0 0.0
    %2665 = vmatpush1.msra.mxu0 0.0
    %2666 = vmatprep.subr.mxu0 0.0
    %2667 = vmatpush1.msra.mxu0 0.0
    %2668 = vmatprep.subr.mxu0 0.0
    %2669 = vmatpush1.msra.mxu0 0.0
    %2670 = vmatprep.subr.mxu0 0.0
    %2671 = vmatpush1.msra.mxu0 0.0
    %2672 = vmatprep.subr.mxu0 0.0
    %2673 = vmatpush1.msra.mxu0 0.0
    %2674 = vmatprep.subr.mxu0 0.0
    %2675 = vmatpush1.msra.mxu0 0.0
    %2676 = vmatprep.subr.mxu0 0.0
    %2677 = vmatpush1.msra.mxu0 0.0
    %2678 = vmatprep.subr.mxu0 0.0
    %2679 = vmatpush1.msra.mxu0 0.0
    %2680 = vmatprep.subr.mxu0 0.0
    %2681 = vmatpush1.msra.mxu0 0.0
    %2682 = vmatprep.subr.mxu0 0.0
    %2683 = vmatpush1.msra.mxu0 0.0
    %2684 = vmatprep.subr.mxu0 0.0
    %2685 = vmatpush1.msra.mxu0 0.0
    %2686 = vmatprep.subr.mxu0 0.0
    %2687 = vmatpush1.msra.mxu0 0.0
    %2688 = vmatprep.subr.mxu0 0.0
    %2689 = vmatpush1.msra.mxu0 0.0
    %2690 = vmatprep.subr.mxu0 0.0
    %2691 = vmatpush1.msra.mxu0 0.0
    %2692 = vmatprep.subr.mxu0 0.0
    %2693 = vmatpush1.msra.mxu0 0.0
    %2694 = vmatprep.subr.mxu0 0.0
    %2695 = vmatpush1.msra.mxu0 0.0
    %2696 = vmatprep.subr.mxu0 0.0
    %2697 = vmatpush1.msra.mxu0 0.0
    %2698 = vmatprep.subr.mxu0 0.0
    %2699 = vmatpush1.msra.mxu0 0.0
    %2700 = vmatprep.subr.mxu0 0.0
    %2701 = vmatpush1.msra.mxu0 0.0
    %2702 = vmatprep.subr.mxu0 0.0
    %2703 = vmatpush1.msra.mxu0 0.0
    %2704 = vmatprep.subr.mxu0 0.0
    %2705 = vmatpush1.msra.mxu0 0.0
    %2706 = vmatprep.subr.mxu0 0.0
    %2707 = vmatpush1.msra.mxu0 0.0
    %2708 = vmatprep.subr.mxu0 0.0
    %2709 = vmatpush1.msra.mxu0 0.0
    %2710 = vmatprep.subr.mxu0 0.0
    %2711 = vmatpush1.msra.mxu0 0.0
    %2712 = vmatprep.subr.mxu0 0.0
    %2713 = vmatpush1.msra.mxu0 0.0
    %2714 = vmatprep.mubr.f32.mxu0 0.0
    %2715 = vmatmul.mubr.f32.gmra.mrb[0].mxu0 %v2186
    %v2716 = vpop.f32.mrb[0].mxu0
    %v2717 = vadd.f32 0.0, %v2716
    %v2718 = vpop.f32.mrb[0].mxu0
    %2719 = vdwg.mxu0
    %s2720 = scalar_lea.vmem %s6, 160
    %v2721 = vld [vmem:[%s2720] sm:$0xff]
    %v2722 = vld [vmem:[%s2720 + $0x8] sm:$0xff]
    %v2723 = vld [vmem:[%s2720 + $0x10] sm:$0xff]
    %v2724 = vld [vmem:[%s2720 + $0x18] sm:$0xff]
    %2725 = vmatprep.subr.mxu0 0.0
    %2726 = vmatpush1.msra.mxu0 %v2721
    %2727 = vmatprep.subr.mxu0 0.0
    %2728 = vmatpush1.msra.mxu0 %v2722
    %2729 = vmatprep.subr.mxu0 0.0
    %2730 = vmatpush1.msra.mxu0 %v2723
    %2731 = vmatprep.subr.mxu0 0.0
    %2732 = vmatpush1.msra.mxu0 %v2724
    %2733 = vmatprep.subr.mxu0 0.0
    %2734 = vmatpush1.msra.mxu0 0.0
    %2735 = vmatprep.subr.mxu0 0.0
    %2736 = vmatpush1.msra.mxu0 0.0
    %2737 = vmatprep.subr.mxu0 0.0
    %2738 = vmatpush1.msra.mxu0 0.0
    %2739 = vmatprep.subr.mxu0 0.0
    %2740 = vmatpush1.msra.mxu0 0.0
    %2741 = vmatprep.subr.mxu0 0.0
    %2742 = vmatpush1.msra.mxu0 0.0
    %2743 = vmatprep.subr.mxu0 0.0
    %2744 = vmatpush1.msra.mxu0 0.0
    %2745 = vmatprep.subr.mxu0 0.0
    %2746 = vmatpush1.msra.mxu0 0.0
    %2747 = vmatprep.subr.mxu0 0.0
    %2748 = vmatpush1.msra.mxu0 0.0
    %2749 = vmatprep.subr.mxu0 0.0
    %2750 = vmatpush1.msra.mxu0 0.0
    %2751 = vmatprep.subr.mxu0 0.0
    %2752 = vmatpush1.msra.mxu0 0.0
    %2753 = vmatprep.subr.mxu0 0.0
    %2754 = vmatpush1.msra.mxu0 0.0
    %2755 = vmatprep.subr.mxu0 0.0
    %2756 = vmatpush1.msra.mxu0 0.0
    %2757 = vmatprep.subr.mxu0 0.0
    %2758 = vmatpush1.msra.mxu0 0.0
    %2759 = vmatprep.subr.mxu0 0.0
    %2760 = vmatpush1.msra.mxu0 0.0
    %2761 = vmatprep.subr.mxu0 0.0
    %2762 = vmatpush1.msra.mxu0 0.0
    %2763 = vmatprep.subr.mxu0 0.0
    %2764 = vmatpush1.msra.mxu0 0.0
    %2765 = vmatprep.subr.mxu0 0.0
    %2766 = vmatpush1.msra.mxu0 0.0
    %2767 = vmatprep.subr.mxu0 0.0
    %2768 = vmatpush1.msra.mxu0 0.0
    %2769 = vmatprep.subr.mxu0 0.0
    %2770 = vmatpush1.msra.mxu0 0.0
    %2771 = vmatprep.subr.mxu0 0.0
    %2772 = vmatpush1.msra.mxu0 0.0
    %2773 = vmatprep.subr.mxu0 0.0
    %2774 = vmatpush1.msra.mxu0 0.0
    %2775 = vmatprep.subr.mxu0 0.0
    %2776 = vmatpush1.msra.mxu0 0.0
    %2777 = vmatprep.subr.mxu0 0.0
    %2778 = vmatpush1.msra.mxu0 0.0
    %2779 = vmatprep.subr.mxu0 0.0
    %2780 = vmatpush1.msra.mxu0 0.0
    %2781 = vmatprep.subr.mxu0 0.0
    %2782 = vmatpush1.msra.mxu0 0.0
    %2783 = vmatprep.subr.mxu0 0.0
    %2784 = vmatpush1.msra.mxu0 0.0
    %2785 = vmatprep.subr.mxu0 0.0
    %2786 = vmatpush1.msra.mxu0 0.0
    %2787 = vmatprep.subr.mxu0 0.0
    %2788 = vmatpush1.msra.mxu0 0.0
    %2789 = vmatprep.mubr.f32.mxu0 0.0
    %2790 = vmatmul.mubr.f32.gmra.mrb[0].mxu0 %v2186
    %v2791 = vpop.f32.mrb[0].mxu0
    %v2792 = vadd.f32 0.0, %v2791
    %v2793 = vpop.f32.mrb[0].mxu0
    %2794 = vdwg.mxu0
    %v2796 = vsel %vm319, %v2642, 0
    %v2799 = vsel %vm319, %v2717, 0
    %2801 = vmatprep.subr.mxu0 0.0
    %2802 = vmatpush1.xpose.msra.mxu0 %v2799
    %2803 = vmatprep.subr.mxu0 0.0
    %2804 = vmatpush1.xpose.msra.mxu0 0.0
    %2805 = vmatprep.subr.mxu0 0.0
    %2806 = vmatpush1.xpose.msra.mxu0 0.0
    %2807 = vmatprep.subr.mxu0 0.0
    %2808 = vmatpush1.xpose.msra.mxu0 0.0
    %2809 = vmatprep.subr.mxu0 0.0
    %2810 = vmatpush1.xpose.msra.mxu0 0.0
    %2811 = vmatprep.subr.mxu0 0.0
    %2812 = vmatpush1.xpose.msra.mxu0 0.0
    %2813 = vmatprep.subr.mxu0 0.0
    %2814 = vmatpush1.xpose.msra.mxu0 0.0
    %2815 = vmatprep.subr.mxu0 0.0
    %2816 = vmatpush1.xpose.msra.mxu0 0.0
    %2817 = vmatprep.subr.mxu0 0.0
    %2818 = vmatpush1.xpose.msra.mxu0 0.0
    %2819 = vmatprep.subr.mxu0 0.0
    %2820 = vmatpush1.xpose.msra.mxu0 0.0
    %2821 = vmatprep.subr.mxu0 0.0
    %2822 = vmatpush1.xpose.msra.mxu0 0.0
    %2823 = vmatprep.subr.mxu0 0.0
    %2824 = vmatpush1.xpose.msra.mxu0 0.0
    %2825 = vmatprep.subr.mxu0 0.0
    %2826 = vmatpush1.xpose.msra.mxu0 0.0
    %2827 = vmatprep.subr.mxu0 0.0
    %2828 = vmatpush1.xpose.msra.mxu0 0.0
    %2829 = vmatprep.subr.mxu0 0.0
    %2830 = vmatpush1.xpose.msra.mxu0 0.0
    %2831 = vmatprep.subr.mxu0 0.0
    %2832 = vmatpush1.xpose.msra.mxu0 0.0
    %2833 = vmatprep.subr.mxu0 0.0
    %2834 = vmatpush1.xpose.msra.mxu0 0.0
    %2835 = vmatprep.subr.mxu0 0.0
    %2836 = vmatpush1.xpose.msra.mxu0 0.0
    %2837 = vmatprep.subr.mxu0 0.0
    %2838 = vmatpush1.xpose.msra.mxu0 0.0
    %2839 = vmatprep.subr.mxu0 0.0
    %2840 = vmatpush1.xpose.msra.mxu0 0.0
    %2841 = vmatprep.subr.mxu0 0.0
    %2842 = vmatpush1.xpose.msra.mxu0 0.0
    %2843 = vmatprep.subr.mxu0 0.0
    %2844 = vmatpush1.xpose.msra.mxu0 0.0
    %2845 = vmatprep.subr.mxu0 0.0
    %2846 = vmatpush1.xpose.msra.mxu0 0.0
    %2847 = vmatprep.subr.mxu0 0.0
    %2848 = vmatpush1.xpose.msra.mxu0 0.0
    %2849 = vmatprep.subr.mxu0 0.0
    %2850 = vmatpush1.xpose.msra.mxu0 0.0
    %2851 = vmatprep.subr.mxu0 0.0
    %2852 = vmatpush1.xpose.msra.mxu0 0.0
    %2853 = vmatprep.subr.mxu0 0.0
    %2854 = vmatpush1.xpose.msra.mxu0 0.0
    %2855 = vmatprep.subr.mxu0 0.0
    %2856 = vmatpush1.xpose.msra.mxu0 0.0
    %2857 = vmatprep.subr.mxu0 0.0
    %2858 = vmatpush1.xpose.msra.mxu0 0.0
    %2859 = vmatprep.subr.mxu0 0.0
    %2860 = vmatpush1.xpose.msra.mxu0 0.0
    %2861 = vmatprep.subr.mxu0 0.0
    %2862 = vmatpush1.xpose.msra.mxu0 0.0
    %2863 = vmatprep.subr.mxu0 0.0
    %2864 = vmatpush1.xpose.msra.mxu0 0.0
    %2865 = vmatprep.mubr.f32.mxu0 0.0
    %2866 = vmatmul.mubr.f32.gmra.mrb[0].mxu0 %v2796
    %v2867 = vpop.f32.mrb[0].mxu0
    %v2868 = vadd.f32 0.0, %v2867
    %v2869 = vpop.f32.mrb[0].mxu0
    %2870 = vdwg.mxu0
    %v2871 = vadd.f32 %v2481, %v2868
    %v2872 = vsel %vm319, %v2868, -inf
    %2873 = vmax.xlane.f32.xlu0 %v2872
    %v2874 = vpop.xlane.xlu0 %2873
    %v2875 = vsub.f32 %v2868, %v2874
    %v2876 = vmul.f32 %v2875, 1.442695
    %v2877 = vpow.pop %v2876
    %v2878 = vsel %vm319, %v2877, 0.0
    %2879 = vadd.xlane.f32.xlu0 %v2878
    %v2880 = vpop.xlane.xlu0 %2879
    %v2881 = vrcp.pop %v2880
    %v2882 = vmul.f32 %v2877, %v2881
    %v2884 = vsel %vm319, %v2882, 0
    %2886 = vmatprep.subr.mxu0 0.0
    %2887 = vmatpush1.msra.mxu0 %v2792
    %2888 = vmatprep.subr.mxu0 0.0
    %2889 = vmatpush1.msra.mxu0 0.0
    %2890 = vmatprep.subr.mxu0 0.0
    %2891 = vmatpush1.msra.mxu0 0.0
    %2892 = vmatprep.subr.mxu0 0.0
    %2893 = vmatpush1.msra.mxu0 0.0
    %2894 = vmatprep.subr.mxu0 0.0
    %2895 = vmatpush1.msra.mxu0 0.0
    %2896 = vmatprep.subr.mxu0 0.0
    %2897 = vmatpush1.msra.mxu0 0.0
    %2898 = vmatprep.subr.mxu0 0.0
    %2899 = vmatpush1.msra.mxu0 0.0
    %2900 = vmatprep.subr.mxu0 0.0
    %2901 = vmatpush1.msra.mxu0 0.0
    %2902 = vmatprep.subr.mxu0 0.0
    %2903 = vmatpush1.msra.mxu0 0.0
    %2904 = vmatprep.subr.mxu0 0.0
    %2905 = vmatpush1.msra.mxu0 0.0
    %2906 = vmatprep.subr.mxu0 0.0
    %2907 = vmatpush1.msra.mxu0 0.0
    %2908 = vmatprep.subr.mxu0 0.0
    %2909 = vmatpush1.msra.mxu0 0.0
    %2910 = vmatprep.subr.mxu0 0.0
    %2911 = vmatpush1.msra.mxu0 0.0
    %2912 = vmatprep.subr.mxu0 0.0
    %2913 = vmatpush1.msra.mxu0 0.0
    %2914 = vmatprep.subr.mxu0 0.0
    %2915 = vmatpush1.msra.mxu0 0.0
    %2916 = vmatprep.subr.mxu0 0.0
    %2917 = vmatpush1.msra.mxu0 0.0
    %2918 = vmatprep.subr.mxu0 0.0
    %2919 = vmatpush1.msra.mxu0 0.0
    %2920 = vmatprep.subr.mxu0 0.0
    %2921 = vmatpush1.msra.mxu0 0.0
    %2922 = vmatprep.subr.mxu0 0.0
    %2923 = vmatpush1.msra.mxu0 0.0
    %2924 = vmatprep.subr.mxu0 0.0
    %2925 = vmatpush1.msra.mxu0 0.0
    %2926 = vmatprep.subr.mxu0 0.0
    %2927 = vmatpush1.msra.mxu0 0.0
    %2928 = vmatprep.subr.mxu0 0.0
    %2929 = vmatpush1.msra.mxu0 0.0
    %2930 = vmatprep.subr.mxu0 0.0
    %2931 = vmatpush1.msra.mxu0 0.0
    %2932 = vmatprep.subr.mxu0 0.0
    %2933 = vmatpush1.msra.mxu0 0.0
    %2934 = vmatprep.subr.mxu0 0.0
    %2935 = vmatpush1.msra.mxu0 0.0
    %2936 = vmatprep.subr.mxu0 0.0
    %2937 = vmatpush1.msra.mxu0 0.0
    %2938 = vmatprep.subr.mxu0 0.0
    %2939 = vmatpush1.msra.mxu0 0.0
    %2940 = vmatprep.subr.mxu0 0.0
    %2941 = vmatpush1.msra.mxu0 0.0
    %2942 = vmatprep.subr.mxu0 0.0
    %2943 = vmatpush1.msra.mxu0 0.0
    %2944 = vmatprep.subr.mxu0 0.0
    %2945 = vmatpush1.msra.mxu0 0.0
    %2946 = vmatprep.subr.mxu0 0.0
    %2947 = vmatpush1.msra.mxu0 0.0
    %2948 = vmatprep.subr.mxu0 0.0
    %2949 = vmatpush1.msra.mxu0 0.0
    %2950 = vmatprep.mubr.f32.mxu0 0.0
    %2951 = vmatmul.mubr.f32.gmra.mrb[0].mxu0 %v2884
    %v2952 = vpop.f32.mrb[0].mxu0
    %v2953 = vadd.f32 0.0, %v2952
    %v2954 = vpop.f32.mrb[0].mxu0
    %2955 = vdwg.mxu0
    %s2956 = scalar_lea.vmem %s7, 40
    %v2957 = vld [vmem:[%s2956] sm:$0xff]
    %v2959 = vsel %vm319, %v2953, 0
    %2961 = vmatprep.subr.mxu0 0.0
    %2962 = vmatpush1.msra.mxu0 %v2957
    %2963 = vmatprep.subr.mxu0 0.0
    %2964 = vmatpush1.msra.mxu0 0.0
    %2965 = vmatprep.subr.mxu0 0.0
    %2966 = vmatpush1.msra.mxu0 0.0
    %2967 = vmatprep.subr.mxu0 0.0
    %2968 = vmatpush1.msra.mxu0 0.0
    %2969 = vmatprep.subr.mxu0 0.0
    %2970 = vmatpush1.msra.mxu0 0.0
    %2971 = vmatprep.subr.mxu0 0.0
    %2972 = vmatpush1.msra.mxu0 0.0
    %2973 = vmatprep.subr.mxu0 0.0
    %2974 = vmatpush1.msra.mxu0 0.0
    %2975 = vmatprep.subr.mxu0 0.0
    %2976 = vmatpush1.msra.mxu0 0.0
    %2977 = vmatprep.subr.mxu0 0.0
    %2978 = vmatpush1.msra.mxu0 0.0
    %2979 = vmatprep.subr.mxu0 0.0
    %2980 = vmatpush1.msra.mxu0 0.0
    %2981 = vmatprep.subr.mxu0 0.0
    %2982 = vmatpush1.msra.mxu0 0.0
    %2983 = vmatprep.subr.mxu0 0.0
    %2984 = vmatpush1.msra.mxu0 0.0
    %2985 = vmatprep.subr.mxu0 0.0
    %2986 = vmatpush1.msra.mxu0 0.0
    %2987 = vmatprep.subr.mxu0 0.0
    %2988 = vmatpush1.msra.mxu0 0.0
    %2989 = vmatprep.subr.mxu0 0.0
    %2990 = vmatpush1.msra.mxu0 0.0
    %2991 = vmatprep.subr.mxu0 0.0
    %2992 = vmatpush1.msra.mxu0 0.0
    %2993 = vmatprep.subr.mxu0 0.0
    %2994 = vmatpush1.msra.mxu0 0.0
    %2995 = vmatprep.subr.mxu0 0.0
    %2996 = vmatpush1.msra.mxu0 0.0
    %2997 = vmatprep.subr.mxu0 0.0
    %2998 = vmatpush1.msra.mxu0 0.0
    %2999 = vmatprep.subr.mxu0 0.0
    %3000 = vmatpush1.msra.mxu0 0.0
    %3001 = vmatprep.subr.mxu0 0.0
    %3002 = vmatpush1.msra.mxu0 0.0
    %3003 = vmatprep.subr.mxu0 0.0
    %3004 = vmatpush1.msra.mxu0 0.0
    %3005 = vmatprep.subr.mxu0 0.0
    %3006 = vmatpush1.msra.mxu0 0.0
    %3007 = vmatprep.subr.mxu0 0.0
    %3008 = vmatpush1.msra.mxu0 0.0
    %3009 = vmatprep.subr.mxu0 0.0
    %3010 = vmatpush1.msra.mxu0 0.0
    %3011 = vmatprep.subr.mxu0 0.0
    %3012 = vmatpush1.msra.mxu0 0.0
    %3013 = vmatprep.subr.mxu0 0.0
    %3014 = vmatpush1.msra.mxu0 0.0
    %3015 = vmatprep.subr.mxu0 0.0
    %3016 = vmatpush1.msra.mxu0 0.0
    %3017 = vmatprep.subr.mxu0 0.0
    %3018 = vmatpush1.msra.mxu0 0.0
    %3019 = vmatprep.subr.mxu0 0.0
    %3020 = vmatpush1.msra.mxu0 0.0
    %3021 = vmatprep.subr.mxu0 0.0
    %3022 = vmatpush1.msra.mxu0 0.0
    %3023 = vmatprep.subr.mxu0 0.0
    %3024 = vmatpush1.msra.mxu0 0.0
    %3025 = vmatprep.mubr.f32.mxu0 0.0
    %3026 = vmatmul.mubr.f32.gmra.mrb[0].mxu0 %v2959
    %v3027 = vpop.f32.mrb[0].mxu0
    %v3028 = vadd.f32 0.0, %v3027
    %v3029 = vpop.f32.mrb[0].mxu0
    %3030 = vdwg.mxu0
    %v3032 = vsel %vm319, %v2565, 0
    %3034 = vmatprep.subr.mxu0 0.0
    %3035 = vmatpush1.msra.mxu0 %v2569
    %3036 = vmatprep.subr.mxu0 0.0
    %3037 = vmatpush1.msra.mxu0 0.0
    %3038 = vmatprep.subr.mxu0 0.0
    %3039 = vmatpush1.msra.mxu0 0.0
    %3040 = vmatprep.subr.mxu0 0.0
    %3041 = vmatpush1.msra.mxu0 0.0
    %3042 = vmatprep.subr.mxu0 0.0
    %3043 = vmatpush1.msra.mxu0 0.0
    %3044 = vmatprep.subr.mxu0 0.0
    %3045 = vmatpush1.msra.mxu0 0.0
    %3046 = vmatprep.subr.mxu0 0.0
    %3047 = vmatpush1.msra.mxu0 0.0
    %3048 = vmatprep.subr.mxu0 0.0
    %3049 = vmatpush1.msra.mxu0 0.0
    %3050 = vmatprep.subr.mxu0 0.0
    %3051 = vmatpush1.msra.mxu0 0.0
    %3052 = vmatprep.subr.mxu0 0.0
    %3053 = vmatpush1.msra.mxu0 0.0
    %3054 = vmatprep.subr.mxu0 0.0
    %3055 = vmatpush1.msra.mxu0 0.0
    %3056 = vmatprep.subr.mxu0 0.0
    %3057 = vmatpush1.msra.mxu0 0.0
    %3058 = vmatprep.subr.mxu0 0.0
    %3059 = vmatpush1.msra.mxu0 0.0
    %3060 = vmatprep.subr.mxu0 0.0
    %3061 = vmatpush1.msra.mxu0 0.0
    %3062 = vmatprep.subr.mxu0 0.0
    %3063 = vmatpush1.msra.mxu0 0.0
    %3064 = vmatprep.subr.mxu0 0.0
    %3065 = vmatpush1.msra.mxu0 0.0
    %3066 = vmatprep.subr.mxu0 0.0
    %3067 = vmatpush1.msra.mxu0 0.0
    %3068 = vmatprep.subr.mxu0 0.0
    %3069 = vmatpush1.msra.mxu0 0.0
    %3070 = vmatprep.subr.mxu0 0.0
    %3071 = vmatpush1.msra.mxu0 0.0
    %3072 = vmatprep.subr.mxu0 0.0
    %3073 = vmatpush1.msra.mxu0 0.0
    %3074 = vmatprep.subr.mxu0 0.0
    %3075 = vmatpush1.msra.mxu0 0.0
    %3076 = vmatprep.subr.mxu0 0.0
    %3077 = vmatpush1.msra.mxu0 0.0
    %3078 = vmatprep.subr.mxu0 0.0
    %3079 = vmatpush1.msra.mxu0 0.0
    %3080 = vmatprep.subr.mxu0 0.0
    %3081 = vmatpush1.msra.mxu0 0.0
    %3082 = vmatprep.subr.mxu0 0.0
    %3083 = vmatpush1.msra.mxu0 0.0
    %3084 = vmatprep.subr.mxu0 0.0
    %3085 = vmatpush1.msra.mxu0 0.0
    %3086 = vmatprep.subr.mxu0 0.0
    %3087 = vmatpush1.msra.mxu0 0.0
    %3088 = vmatprep.subr.mxu0 0.0
    %3089 = vmatpush1.msra.mxu0 0.0
    %3090 = vmatprep.subr.mxu0 0.0
    %3091 = vmatpush1.msra.mxu0 0.0
    %3092 = vmatprep.subr.mxu0 0.0
    %3093 = vmatpush1.msra.mxu0 0.0
    %3094 = vmatprep.subr.mxu0 0.0
    %3095 = vmatpush1.msra.mxu0 0.0
    %3096 = vmatprep.subr.mxu0 0.0
    %3097 = vmatpush1.msra.mxu0 0.0
    %3098 = vmatprep.mubr.f32.mxu0 0.0
    %3099 = vmatmul.mubr.f32.gmra.mrb[0].mxu0 %v3032
    %v3100 = vpop.f32.mrb[0].mxu0
    %v3101 = vadd.f32 %v3028, %v3100
    %v3102 = vpop.f32.mrb[0].mxu0
    %3103 = vdwg.mxu0
    %s3104 = scalar_lea.vmem %s4, 192
    %v3105 = vld [vmem:[%s3104] sm:$0xff]
    %v3106 = vld [vmem:[%s3104 + $0x8] sm:$0xff]
    %v3107 = vld [vmem:[%s3104 + $0x10] sm:$0xff]
    %v3108 = vld [vmem:[%s3104 + $0x18] sm:$0xff]
    %3109 = vmatprep.subr.mxu0 0.0
    %3110 = vmatpush1.msra.mxu0 %v3105
    %3111 = vmatprep.subr.mxu0 0.0
    %3112 = vmatpush1.msra.mxu0 %v3106
    %3113 = vmatprep.subr.mxu0 0.0
    %3114 = vmatpush1.msra.mxu0 %v3107
    %3115 = vmatprep.subr.mxu0 0.0
    %3116 = vmatpush1.msra.mxu0 %v3108
    %3117 = vmatprep.subr.mxu0 0.0
    %3118 = vmatpush1.msra.mxu0 0.0
    %3119 = vmatprep.subr.mxu0 0.0
    %3120 = vmatpush1.msra.mxu0 0.0
    %3121 = vmatprep.subr.mxu0 0.0
    %3122 = vmatpush1.msra.mxu0 0.0
    %3123 = vmatprep.subr.mxu0 0.0
    %3124 = vmatpush1.msra.mxu0 0.0
    %3125 = vmatprep.subr.mxu0 0.0
    %3126 = vmatpush1.msra.mxu0 0.0
    %3127 = vmatprep.subr.mxu0 0.0
    %3128 = vmatpush1.msra.mxu0 0.0
    %3129 = vmatprep.subr.mxu0 0.0
    %3130 = vmatpush1.msra.mxu0 0.0
    %3131 = vmatprep.subr.mxu0 0.0
    %3132 = vmatpush1.msra.mxu0 0.0
    %3133 = vmatprep.subr.mxu0 0.0
    %3134 = vmatpush1.msra.mxu0 0.0
    %3135 = vmatprep.subr.mxu0 0.0
    %3136 = vmatpush1.msra.mxu0 0.0
    %3137 = vmatprep.subr.mxu0 0.0
    %3138 = vmatpush1.msra.mxu0 0.0
    %3139 = vmatprep.subr.mxu0 0.0
    %3140 = vmatpush1.msra.mxu0 0.0
    %3141 = vmatprep.subr.mxu0 0.0
    %3142 = vmatpush1.msra.mxu0 0.0
    %3143 = vmatprep.subr.mxu0 0.0
    %3144 = vmatpush1.msra.mxu0 0.0
    %3145 = vmatprep.subr.mxu0 0.0
    %3146 = vmatpush1.msra.mxu0 0.0
    %3147 = vmatprep.subr.mxu0 0.0
    %3148 = vmatpush1.msra.mxu0 0.0
    %3149 = vmatprep.subr.mxu0 0.0
    %3150 = vmatpush1.msra.mxu0 0.0
    %3151 = vmatprep.subr.mxu0 0.0
    %3152 = vmatpush1.msra.mxu0 0.0
    %3153 = vmatprep.subr.mxu0 0.0
    %3154 = vmatpush1.msra.mxu0 0.0
    %3155 = vmatprep.subr.mxu0 0.0
    %3156 = vmatpush1.msra.mxu0 0.0
    %3157 = vmatprep.subr.mxu0 0.0
    %3158 = vmatpush1.msra.mxu0 0.0
    %3159 = vmatprep.subr.mxu0 0.0
    %3160 = vmatpush1.msra.mxu0 0.0
    %3161 = vmatprep.subr.mxu0 0.0
    %3162 = vmatpush1.msra.mxu0 0.0
    %3163 = vmatprep.subr.mxu0 0.0
    %3164 = vmatpush1.msra.mxu0 0.0
    %3165 = vmatprep.subr.mxu0 0.0
    %3166 = vmatpush1.msra.mxu0 0.0
    %3167 = vmatprep.subr.mxu0 0.0
    %3168 = vmatpush1.msra.mxu0 0.0
    %3169 = vmatprep.subr.mxu0 0.0
    %3170 = vmatpush1.msra.mxu0 0.0
    %3171 = vmatprep.subr.mxu0 0.0
    %3172 = vmatpush1.msra.mxu0 0.0
    %3173 = vmatprep.mubr.f32.mxu0 0.0
    %3174 = vmatmul.mubr.f32.gmra.mrb[0].mxu0 %v2186
    %v3175 = vpop.f32.mrb[0].mxu0
    %v3176 = vadd.f32 0.0, %v3175
    %v3177 = vpop.f32.mrb[0].mxu0
    %3178 = vdwg.mxu0
    %s3179 = scalar_lea.vmem %s5, 192
    %v3180 = vld [vmem:[%s3179] sm:$0xff]
    %v3181 = vld [vmem:[%s3179 + $0x8] sm:$0xff]
    %v3182 = vld [vmem:[%s3179 + $0x10] sm:$0xff]
    %v3183 = vld [vmem:[%s3179 + $0x18] sm:$0xff]
    %3184 = vmatprep.subr.mxu0 0.0
    %3185 = vmatpush1.msra.mxu0 %v3180
    %3186 = vmatprep.subr.mxu0 0.0
    %3187 = vmatpush1.msra.mxu0 %v3181
    %3188 = vmatprep.subr.mxu0 0.0
    %3189 = vmatpush1.msra.mxu0 %v3182
    %3190 = vmatprep.subr.mxu0 0.0
    %3191 = vmatpush1.msra.mxu0 %v3183
    %3192 = vmatprep.subr.mxu0 0.0
    %3193 = vmatpush1.msra.mxu0 0.0
    %3194 = vmatprep.subr.mxu0 0.0
    %3195 = vmatpush1.msra.mxu0 0.0
    %3196 = vmatprep.subr.mxu0 0.0
    %3197 = vmatpush1.msra.mxu0 0.0
    %3198 = vmatprep.subr.mxu0 0.0
    %3199 = vmatpush1.msra.mxu0 0.0
    %3200 = vmatprep.subr.mxu0 0.0
    %3201 = vmatpush1.msra.mxu0 0.0
    %3202 = vmatprep.subr.mxu0 0.0
    %3203 = vmatpush1.msra.mxu0 0.0
    %3204 = vmatprep.subr.mxu0 0.0
    %3205 = vmatpush1.msra.mxu0 0.0
    %3206 = vmatprep.subr.mxu0 0.0
    %3207 = vmatpush1.msra.mxu0 0.0
    %3208 = vmatprep.subr.mxu0 0.0
    %3209 = vmatpush1.msra.mxu0 0.0
    %3210 = vmatprep.subr.mxu0 0.0
    %3211 = vmatpush1.msra.mxu0 0.0
    %3212 = vmatprep.subr.mxu0 0.0
    %3213 = vmatpush1.msra.mxu0 0.0
    %3214 = vmatprep.subr.mxu0 0.0
    %3215 = vmatpush1.msra.mxu0 0.0
    %3216 = vmatprep.subr.mxu0 0.0
    %3217 = vmatpush1.msra.mxu0 0.0
    %3218 = vmatprep.subr.mxu0 0.0
    %3219 = vmatpush1.msra.mxu0 0.0
    %3220 = vmatprep.subr.mxu0 0.0
    %3221 = vmatpush1.msra.mxu0 0.0
    %3222 = vmatprep.subr.mxu0 0.0
    %3223 = vmatpush1.msra.mxu0 0.0
    %3224 = vmatprep.subr.mxu0 0.0
    %3225 = vmatpush1.msra.mxu0 0.0
    %3226 = vmatprep.subr.mxu0 0.0
    %3227 = vmatpush1.msra.mxu0 0.0
    %3228 = vmatprep.subr.mxu0 0.0
    %3229 = vmatpush1.msra.mxu0 0.0
    %3230 = vmatprep.subr.mxu0 0.0
    %3231 = vmatpush1.msra.mxu0 0.0
    %3232 = vmatprep.subr.mxu0 0.0
    %3233 = vmatpush1.msra.mxu0 0.0
    %3234 = vmatprep.subr.mxu0 0.0
    %3235 = vmatpush1.msra.mxu0 0.0
    %3236 = vmatprep.subr.mxu0 0.0
    %3237 = vmatpush1.msra.mxu0 0.0
    %3238 = vmatprep.subr.mxu0 0.0
    %3239 = vmatpush1.msra.mxu0 0.0
    %3240 = vmatprep.subr.mxu0 0.0
    %3241 = vmatpush1.msra.mxu0 0.0
    %3242 = vmatprep.subr.mxu0 0.0
    %3243 = vmatpush1.msra.mxu0 0.0
    %3244 = vmatprep.subr.mxu0 0.0
    %3245 = vmatpush1.msra.mxu0 0.0
    %3246 = vmatprep.subr.mxu0 0.0
    %3247 = vmatpush1.msra.mxu0 0.0
    %3248 = vmatprep.mubr.f32.mxu0 0.0
    %3249 = vmatmul.mubr.f32.gmra.mrb[0].mxu0 %v2186
    %v3250 = vpop.f32.mrb[0].mxu0
    %v3251 = vadd.f32 0.0, %v3250
    %v3252 = vpop.f32.mrb[0].mxu0
    %3253 = vdwg.mxu0
    %s3254 = scalar_lea.vmem %s6, 192
    %v3255 = vld [vmem:[%s3254] sm:$0xff]
    %v3256 = vld [vmem:[%s3254 + $0x8] sm:$0xff]
    %v3257 = vld [vmem:[%s3254 + $0x10] sm:$0xff]
    %v3258 = vld [vmem:[%s3254 + $0x18] sm:$0xff]
    %3259 = vmatprep.subr.mxu0 0.0
    %3260 = vmatpush1.msra.mxu0 %v3255
    %3261 = vmatprep.subr.mxu0 0.0
    %3262 = vmatpush1.msra.mxu0 %v3256
    %3263 = vmatprep.subr.mxu0 0.0
    %3264 = vmatpush1.msra.mxu0 %v3257
    %3265 = vmatprep.subr.mxu0 0.0
    %3266 = vmatpush1.msra.mxu0 %v3258
    %3267 = vmatprep.subr.mxu0 0.0
    %3268 = vmatpush1.msra.mxu0 0.0
    %3269 = vmatprep.subr.mxu0 0.0
    %3270 = vmatpush1.msra.mxu0 0.0
    %3271 = vmatprep.subr.mxu0 0.0
    %3272 = vmatpush1.msra.mxu0 0.0
    %3273 = vmatprep.subr.mxu0 0.0
    %3274 = vmatpush1.msra.mxu0 0.0
    %3275 = vmatprep.subr.mxu0 0.0
    %3276 = vmatpush1.msra.mxu0 0.0
    %3277 = vmatprep.subr.mxu0 0.0
    %3278 = vmatpush1.msra.mxu0 0.0
    %3279 = vmatprep.subr.mxu0 0.0
    %3280 = vmatpush1.msra.mxu0 0.0
    %3281 = vmatprep.subr.mxu0 0.0
    %3282 = vmatpush1.msra.mxu0 0.0
    %3283 = vmatprep.subr.mxu0 0.0
    %3284 = vmatpush1.msra.mxu0 0.0
    %3285 = vmatprep.subr.mxu0 0.0
    %3286 = vmatpush1.msra.mxu0 0.0
    %3287 = vmatprep.subr.mxu0 0.0
    %3288 = vmatpush1.msra.mxu0 0.0
    %3289 = vmatprep.subr.mxu0 0.0
    %3290 = vmatpush1.msra.mxu0 0.0
    %3291 = vmatprep.subr.mxu0 0.0
    %3292 = vmatpush1.msra.mxu0 0.0
    %3293 = vmatprep.subr.mxu0 0.0
    %3294 = vmatpush1.msra.mxu0 0.0
    %3295 = vmatprep.subr.mxu0 0.0
    %3296 = vmatpush1.msra.mxu0 0.0
    %3297 = vmatprep.subr.mxu0 0.0
    %3298 = vmatpush1.msra.mxu0 0.0
    %3299 = vmatprep.subr.mxu0 0.0
    %3300 = vmatpush1.msra.mxu0 0.0
    %3301 = vmatprep.subr.mxu0 0.0
    %3302 = vmatpush1.msra.mxu0 0.0
    %3303 = vmatprep.subr.mxu0 0.0
    %3304 = vmatpush1.msra.mxu0 0.0
    %3305 = vmatprep.subr.mxu0 0.0
    %3306 = vmatpush1.msra.mxu0 0.0
    %3307 = vmatprep.subr.mxu0 0.0
    %3308 = vmatpush1.msra.mxu0 0.0
    %3309 = vmatprep.subr.mxu0 0.0
    %3310 = vmatpush1.msra.mxu0 0.0
    %3311 = vmatprep.subr.mxu0 0.0
    %3312 = vmatpush1.msra.mxu0 0.0
    %3313 = vmatprep.subr.mxu0 0.0
    %3314 = vmatpush1.msra.mxu0 0.0
    %3315 = vmatprep.subr.mxu0 0.0
    %3316 = vmatpush1.msra.mxu0 0.0
    %3317 = vmatprep.subr.mxu0 0.0
    %3318 = vmatpush1.msra.mxu0 0.0
    %3319 = vmatprep.subr.mxu0 0.0
    %3320 = vmatpush1.msra.mxu0 0.0
    %3321 = vmatprep.subr.mxu0 0.0
    %3322 = vmatpush1.msra.mxu0 0.0
    %3323 = vmatprep.mubr.f32.mxu0 0.0
    %3324 = vmatmul.mubr.f32.gmra.mrb[0].mxu0 %v2186
    %v3325 = vpop.f32.mrb[0].mxu0
    %v3326 = vadd.f32 0.0, %v3325
    %v3327 = vpop.f32.mrb[0].mxu0
    %3328 = vdwg.mxu0
    %v3330 = vsel %vm319, %v3176, 0
    %v3333 = vsel %vm319, %v3251, 0
    %3335 = vmatprep.subr.mxu0 0.0
    %3336 = vmatpush1.xpose.msra.mxu0 %v3333
    %3337 = vmatprep.subr.mxu0 0.0
    %3338 = vmatpush1.xpose.msra.mxu0 0.0
    %3339 = vmatprep.subr.mxu0 0.0
    %3340 = vmatpush1.xpose.msra.mxu0 0.0
    %3341 = vmatprep.subr.mxu0 0.0
    %3342 = vmatpush1.xpose.msra.mxu0 0.0
    %3343 = vmatprep.subr.mxu0 0.0
    %3344 = vmatpush1.xpose.msra.mxu0 0.0
    %3345 = vmatprep.subr.mxu0 0.0
    %3346 = vmatpush1.xpose.msra.mxu0 0.0
    %3347 = vmatprep.subr.mxu0 0.0
    %3348 = vmatpush1.xpose.msra.mxu0 0.0
    %3349 = vmatprep.subr.mxu0 0.0
    %3350 = vmatpush1.xpose.msra.mxu0 0.0
    %3351 = vmatprep.subr.mxu0 0.0
    %3352 = vmatpush1.xpose.msra.mxu0 0.0
    %3353 = vmatprep.subr.mxu0 0.0
    %3354 = vmatpush1.xpose.msra.mxu0 0.0
    %3355 = vmatprep.subr.mxu0 0.0
    %3356 = vmatpush1.xpose.msra.mxu0 0.0
    %3357 = vmatprep.subr.mxu0 0.0
    %3358 = vmatpush1.xpose.msra.mxu0 0.0
    %3359 = vmatprep.subr.mxu0 0.0
    %3360 = vmatpush1.xpose.msra.mxu0 0.0
    %3361 = vmatprep.subr.mxu0 0.0
    %3362 = vmatpush1.xpose.msra.mxu0 0.0
    %3363 = vmatprep.subr.mxu0 0.0
    %3364 = vmatpush1.xpose.msra.mxu0 0.0
    %3365 = vmatprep.subr.mxu0 0.0
    %3366 = vmatpush1.xpose.msra.mxu0 0.0
    %3367 = vmatprep.subr.mxu0 0.0
    %3368 = vmatpush1.xpose.msra.mxu0 0.0
    %3369 = vmatprep.subr.mxu0 0.0
    %3370 = vmatpush1.xpose.msra.mxu0 0.0
    %3371 = vmatprep.subr.mxu0 0.0
    %3372 = vmatpush1.xpose.msra.mxu0 0.0
    %3373 = vmatprep.subr.mxu0 0.0
    %3374 = vmatpush1.xpose.msra.mxu0 0.0
    %3375 = vmatprep.subr.mxu0 0.0
    %3376 = vmatpush1.xpose.msra.mxu0 0.0
    %3377 = vmatprep.subr.mxu0 0.0
    %3378 = vmatpush1.xpose.msra.mxu0 0.0
    %3379 = vmatprep.subr.mxu0 0.0
    %3380 = vmatpush1.xpose.msra.mxu0 0.0
    %3381 = vmatprep.subr.mxu0 0.0
    %3382 = vmatpush1.xpose.msra.mxu0 0.0
    %3383 = vmatprep.subr.mxu0 0.0
    %3384 = vmatpush1.xpose.msra.mxu0 0.0
    %3385 = vmatprep.subr.mxu0 0.0
    %3386 = vmatpush1.xpose.msra.mxu0 0.0
    %3387 = vmatprep.subr.mxu0 0.0
    %3388 = vmatpush1.xpose.msra.mxu0 0.0
    %3389 = vmatprep.subr.mxu0 0.0
    %3390 = vmatpush1.xpose.msra.mxu0 0.0
    %3391 = vmatprep.subr.mxu0 0.0
    %3392 = vmatpush1.xpose.msra.mxu0 0.0
    %3393 = vmatprep.subr.mxu0 0.0
    %3394 = vmatpush1.xpose.msra.mxu0 0.0
    %3395 = vmatprep.subr.mxu0 0.0
    %3396 = vmatpush1.xpose.msra.mxu0 0.0
    %3397 = vmatprep.subr.mxu0 0.0
    %3398 = vmatpush1.xpose.msra.mxu0 0.0
    %3399 = vmatprep.mubr.f32.mxu0 0.0
    %3400 = vmatmul.mubr.f32.gmra.mrb[0].mxu0 %v3330
    %v3401 = vpop.f32.mrb[0].mxu0
    %v3402 = vadd.f32 0.0, %v3401
    %v3403 = vpop.f32.mrb[0].mxu0
    %3404 = vdwg.mxu0
    %v3405 = vadd.f32 %v2871, %v3402
    %v3406 = vsel %vm319, %v3402, -inf
    %3407 = vmax.xlane.f32.xlu0 %v3406
    %v3408 = vpop.xlane.xlu0 %3407
    %v3409 = vsub.f32 %v3402, %v3408
    %v3410 = vmul.f32 %v3409, 1.442695
    %v3411 = vpow.pop %v3410
    %v3412 = vsel %vm319, %v3411, 0.0
    %3413 = vadd.xlane.f32.xlu0 %v3412
    %v3414 = vpop.xlane.xlu0 %3413
    %v3415 = vrcp.pop %v3414
    %v3416 = vmul.f32 %v3411, %v3415
    %v3418 = vsel %vm319, %v3416, 0
    %3420 = vmatprep.subr.mxu0 0.0
    %3421 = vmatpush1.msra.mxu0 %v3326
    %3422 = vmatprep.subr.mxu0 0.0
    %3423 = vmatpush1.msra.mxu0 0.0
    %3424 = vmatprep.subr.mxu0 0.0
    %3425 = vmatpush1.msra.mxu0 0.0
    %3426 = vmatprep.subr.mxu0 0.0
    %3427 = vmatpush1.msra.mxu0 0.0
    %3428 = vmatprep.subr.mxu0 0.0
    %3429 = vmatpush1.msra.mxu0 0.0
    %3430 = vmatprep.subr.mxu0 0.0
    %3431 = vmatpush1.msra.mxu0 0.0
    %3432 = vmatprep.subr.mxu0 0.0
    %3433 = vmatpush1.msra.mxu0 0.0
    %3434 = vmatprep.subr.mxu0 0.0
    %3435 = vmatpush1.msra.mxu0 0.0
    %3436 = vmatprep.subr.mxu0 0.0
    %3437 = vmatpush1.msra.mxu0 0.0
    %3438 = vmatprep.subr.mxu0 0.0
    %3439 = vmatpush1.msra.mxu0 0.0
    %3440 = vmatprep.subr.mxu0 0.0
    %3441 = vmatpush1.msra.mxu0 0.0
    %3442 = vmatprep.subr.mxu0 0.0
    %3443 = vmatpush1.msra.mxu0 0.0
    %3444 = vmatprep.subr.mxu0 0.0
    %3445 = vmatpush1.msra.mxu0 0.0
    %3446 = vmatprep.subr.mxu0 0.0
    %3447 = vmatpush1.msra.mxu0 0.0
    %3448 = vmatprep.subr.mxu0 0.0
    %3449 = vmatpush1.msra.mxu0 0.0
    %3450 = vmatprep.subr.mxu0 0.0
    %3451 = vmatpush1.msra.mxu0 0.0
    %3452 = vmatprep.subr.mxu0 0.0
    %3453 = vmatpush1.msra.mxu0 0.0
    %3454 = vmatprep.subr.mxu0 0.0
    %3455 = vmatpush1.msra.mxu0 0.0
    %3456 = vmatprep.subr.mxu0 0.0
    %3457 = vmatpush1.msra.mxu0 0.0
    %3458 = vmatprep.subr.mxu0 0.0
    %3459 = vmatpush1.msra.mxu0 0.0
    %3460 = vmatprep.subr.mxu0 0.0
    %3461 = vmatpush1.msra.mxu0 0.0
    %3462 = vmatprep.subr.mxu0 0.0
    %3463 = vmatpush1.msra.mxu0 0.0
    %3464 = vmatprep.subr.mxu0 0.0
    %3465 = vmatpush1.msra.mxu0 0.0
    %3466 = vmatprep.subr.mxu0 0.0
    %3467 = vmatpush1.msra.mxu0 0.0
    %3468 = vmatprep.subr.mxu0 0.0
    %3469 = vmatpush1.msra.mxu0 0.0
    %3470 = vmatprep.subr.mxu0 0.0
    %3471 = vmatpush1.msra.mxu0 0.0
    %3472 = vmatprep.subr.mxu0 0.0
    %3473 = vmatpush1.msra.mxu0 0.0
    %3474 = vmatprep.subr.mxu0 0.0
    %3475 = vmatpush1.msra.mxu0 0.0
    %3476 = vmatprep.subr.mxu0 0.0
    %3477 = vmatpush1.msra.mxu0 0.0
    %3478 = vmatprep.subr.mxu0 0.0
    %3479 = vmatpush1.msra.mxu0 0.0
    %3480 = vmatprep.subr.mxu0 0.0
    %3481 = vmatpush1.msra.mxu0 0.0
    %3482 = vmatprep.subr.mxu0 0.0
    %3483 = vmatpush1.msra.mxu0 0.0
    %3484 = vmatprep.mubr.f32.mxu0 0.0
    %3485 = vmatmul.mubr.f32.gmra.mrb[0].mxu0 %v3418
    %v3486 = vpop.f32.mrb[0].mxu0
    %v3487 = vadd.f32 0.0, %v3486
    %v3488 = vpop.f32.mrb[0].mxu0
    %3489 = vdwg.mxu0
    %s3490 = scalar_lea.vmem %s7, 48
    %v3491 = vld [vmem:[%s3490] sm:$0xff]
    %v3493 = vsel %vm319, %v3487, 0
    %3495 = vmatprep.subr.mxu0 0.0
    %3496 = vmatpush1.msra.mxu0 %v3491
    %3497 = vmatprep.subr.mxu0 0.0
    %3498 = vmatpush1.msra.mxu0 0.0
    %3499 = vmatprep.subr.mxu0 0.0
    %3500 = vmatpush1.msra.mxu0 0.0
    %3501 = vmatprep.subr.mxu0 0.0
    %3502 = vmatpush1.msra.mxu0 0.0
    %3503 = vmatprep.subr.mxu0 0.0
    %3504 = vmatpush1.msra.mxu0 0.0
    %3505 = vmatprep.subr.mxu0 0.0
    %3506 = vmatpush1.msra.mxu0 0.0
    %3507 = vmatprep.subr.mxu0 0.0
    %3508 = vmatpush1.msra.mxu0 0.0
    %3509 = vmatprep.subr.mxu0 0.0
    %3510 = vmatpush1.msra.mxu0 0.0
    %3511 = vmatprep.subr.mxu0 0.0
    %3512 = vmatpush1.msra.mxu0 0.0
    %3513 = vmatprep.subr.mxu0 0.0
    %3514 = vmatpush1.msra.mxu0 0.0
    %3515 = vmatprep.subr.mxu0 0.0
    %3516 = vmatpush1.msra.mxu0 0.0
    %3517 = vmatprep.subr.mxu0 0.0
    %3518 = vmatpush1.msra.mxu0 0.0
    %3519 = vmatprep.subr.mxu0 0.0
    %3520 = vmatpush1.msra.mxu0 0.0
    %3521 = vmatprep.subr.mxu0 0.0
    %3522 = vmatpush1.msra.mxu0 0.0
    %3523 = vmatprep.subr.mxu0 0.0
    %3524 = vmatpush1.msra.mxu0 0.0
    %3525 = vmatprep.subr.mxu0 0.0
    %3526 = vmatpush1.msra.mxu0 0.0
    %3527 = vmatprep.subr.mxu0 0.0
    %3528 = vmatpush1.msra.mxu0 0.0
    %3529 = vmatprep.subr.mxu0 0.0
    %3530 = vmatpush1.msra.mxu0 0.0
    %3531 = vmatprep.subr.mxu0 0.0
    %3532 = vmatpush1.msra.mxu0 0.0
    %3533 = vmatprep.subr.mxu0 0.0
    %3534 = vmatpush1.msra.mxu0 0.0
    %3535 = vmatprep.subr.mxu0 0.0
    %3536 = vmatpush1.msra.mxu0 0.0
    %3537 = vmatprep.subr.mxu0 0.0
    %3538 = vmatpush1.msra.mxu0 0.0
    %3539 = vmatprep.subr.mxu0 0.0
    %3540 = vmatpush1.msra.mxu0 0.0
    %3541 = vmatprep.subr.mxu0 0.0
    %3542 = vmatpush1.msra.mxu0 0.0
    %3543 = vmatprep.subr.mxu0 0.0
    %3544 = vmatpush1.msra.mxu0 0.0
    %3545 = vmatprep.subr.mxu0 0.0
    %3546 = vmatpush1.msra.mxu0 0.0
    %3547 = vmatprep.subr.mxu0 0.0
    %3548 = vmatpush1.msra.mxu0 0.0
    %3549 = vmatprep.subr.mxu0 0.0
    %3550 = vmatpush1.msra.mxu0 0.0
    %3551 = vmatprep.subr.mxu0 0.0
    %3552 = vmatpush1.msra.mxu0 0.0
    %3553 = vmatprep.subr.mxu0 0.0
    %3554 = vmatpush1.msra.mxu0 0.0
    %3555 = vmatprep.subr.mxu0 0.0
    %3556 = vmatpush1.msra.mxu0 0.0
    %3557 = vmatprep.subr.mxu0 0.0
    %3558 = vmatpush1.msra.mxu0 0.0
    %3559 = vmatprep.mubr.f32.mxu0 0.0
    %3560 = vmatmul.mubr.f32.gmra.mrb[0].mxu0 %v3493
    %v3561 = vpop.f32.mrb[0].mxu0
    %v3562 = vadd.f32 0.0, %v3561
    %v3563 = vpop.f32.mrb[0].mxu0
    %3564 = vdwg.mxu0
    %v3565 = vadd.f32 %v3101, %v3562
    %s3566 = scalar_lea.vmem %s4, 224
    %v3567 = vld [vmem:[%s3566] sm:$0xff]
    %v3568 = vld [vmem:[%s3566 + $0x8] sm:$0xff]
    %v3569 = vld [vmem:[%s3566 + $0x10] sm:$0xff]
    %v3570 = vld [vmem:[%s3566 + $0x18] sm:$0xff]
    %3571 = vmatprep.subr.mxu0 0.0
    %3572 = vmatpush1.msra.mxu0 %v3567
    %3573 = vmatprep.subr.mxu0 0.0
    %3574 = vmatpush1.msra.mxu0 %v3568
    %3575 = vmatprep.subr.mxu0 0.0
    %3576 = vmatpush1.msra.mxu0 %v3569
    %3577 = vmatprep.subr.mxu0 0.0
    %3578 = vmatpush1.msra.mxu0 %v3570
    %3579 = vmatprep.subr.mxu0 0.0
    %3580 = vmatpush1.msra.mxu0 0.0
    %3581 = vmatprep.subr.mxu0 0.0
    %3582 = vmatpush1.msra.mxu0 0.0
    %3583 = vmatprep.subr.mxu0 0.0
    %3584 = vmatpush1.msra.mxu0 0.0
    %3585 = vmatprep.subr.mxu0 0.0
    %3586 = vmatpush1.msra.mxu0 0.0
    %3587 = vmatprep.subr.mxu0 0.0
    %3588 = vmatpush1.msra.mxu0 0.0
    %3589 = vmatprep.subr.mxu0 0.0
    %3590 = vmatpush1.msra.mxu0 0.0
    %3591 = vmatprep.subr.mxu0 0.0
    %3592 = vmatpush1.msra.mxu0 0.0
    %3593 = vmatprep.subr.mxu0 0.0
    %3594 = vmatpush1.msra.mxu0 0.0
    %3595 = vmatprep.subr.mxu0 0.0
    %3596 = vmatpush1.msra.mxu0 0.0
    %3597 = vmatprep.subr.mxu0 0.0
    %3598 = vmatpush1.msra.mxu0 0.0
    %3599 = vmatprep.subr.mxu0 0.0
    %3600 = vmatpush1.msra.mxu0 0.0
    %3601 = vmatprep.subr.mxu0 0.0
    %3602 = vmatpush1.msra.mxu0 0.0
    %3603 = vmatprep.subr.mxu0 0.0
    %3604 = vmatpush1.msra.mxu0 0.0
    %3605 = vmatprep.subr.mxu0 0.0
    %3606 = vmatpush1.msra.mxu0 0.0
    %3607 = vmatprep.subr.mxu0 0.0
    %3608 = vmatpush1.msra.mxu0 0.0
    %3609 = vmatprep.subr.mxu0 0.0
    %3610 = vmatpush1.msra.mxu0 0.0
    %3611 = vmatprep.subr.mxu0 0.0
    %3612 = vmatpush1.msra.mxu0 0.0
    %3613 = vmatprep.subr.mxu0 0.0
    %3614 = vmatpush1.msra.mxu0 0.0
    %3615 = vmatprep.subr.mxu0 0.0
    %3616 = vmatpush1.msra.mxu0 0.0
    %3617 = vmatprep.subr.mxu0 0.0
    %3618 = vmatpush1.msra.mxu0 0.0
    %3619 = vmatprep.subr.mxu0 0.0
    %3620 = vmatpush1.msra.mxu0 0.0
    %3621 = vmatprep.subr.mxu0 0.0
    %3622 = vmatpush1.msra.mxu0 0.0
    %3623 = vmatprep.subr.mxu0 0.0
    %3624 = vmatpush1.msra.mxu0 0.0
    %3625 = vmatprep.subr.mxu0 0.0
    %3626 = vmatpush1.msra.mxu0 0.0
    %3627 = vmatprep.subr.mxu0 0.0
    %3628 = vmatpush1.msra.mxu0 0.0
    %3629 = vmatprep.subr.mxu0 0.0
    %3630 = vmatpush1.msra.mxu0 0.0
    %3631 = vmatprep.subr.mxu0 0.0
    %3632 = vmatpush1.msra.mxu0 0.0
    %3633 = vmatprep.subr.mxu0 0.0
    %3634 = vmatpush1.msra.mxu0 0.0
    %3635 = vmatprep.mubr.f32.mxu0 0.0
    %3636 = vmatmul.mubr.f32.gmra.mrb[0].mxu0 %v2186
    %v3637 = vpop.f32.mrb[0].mxu0
    %v3638 = vadd.f32 0.0, %v3637
    %v3639 = vpop.f32.mrb[0].mxu0
    %3640 = vdwg.mxu0
    %s3641 = scalar_lea.vmem %s5, 224
    %v3642 = vld [vmem:[%s3641] sm:$0xff]
    %v3643 = vld [vmem:[%s3641 + $0x8] sm:$0xff]
    %v3644 = vld [vmem:[%s3641 + $0x10] sm:$0xff]
    %v3645 = vld [vmem:[%s3641 + $0x18] sm:$0xff]
    %3646 = vmatprep.subr.mxu0 0.0
    %3647 = vmatpush1.msra.mxu0 %v3642
    %3648 = vmatprep.subr.mxu0 0.0
    %3649 = vmatpush1.msra.mxu0 %v3643
    %3650 = vmatprep.subr.mxu0 0.0
    %3651 = vmatpush1.msra.mxu0 %v3644
    %3652 = vmatprep.subr.mxu0 0.0
    %3653 = vmatpush1.msra.mxu0 %v3645
    %3654 = vmatprep.subr.mxu0 0.0
    %3655 = vmatpush1.msra.mxu0 0.0
    %3656 = vmatprep.subr.mxu0 0.0
    %3657 = vmatpush1.msra.mxu0 0.0
    %3658 = vmatprep.subr.mxu0 0.0
    %3659 = vmatpush1.msra.mxu0 0.0
    %3660 = vmatprep.subr.mxu0 0.0
    %3661 = vmatpush1.msra.mxu0 0.0
    %3662 = vmatprep.subr.mxu0 0.0
    %3663 = vmatpush1.msra.mxu0 0.0
    %3664 = vmatprep.subr.mxu0 0.0
    %3665 = vmatpush1.msra.mxu0 0.0
    %3666 = vmatprep.subr.mxu0 0.0
    %3667 = vmatpush1.msra.mxu0 0.0
    %3668 = vmatprep.subr.mxu0 0.0
    %3669 = vmatpush1.msra.mxu0 0.0
    %3670 = vmatprep.subr.mxu0 0.0
    %3671 = vmatpush1.msra.mxu0 0.0
    %3672 = vmatprep.subr.mxu0 0.0
    %3673 = vmatpush1.msra.mxu0 0.0
    %3674 = vmatprep.subr.mxu0 0.0
    %3675 = vmatpush1.msra.mxu0 0.0
    %3676 = vmatprep.subr.mxu0 0.0
    %3677 = vmatpush1.msra.mxu0 0.0
    %3678 = vmatprep.subr.mxu0 0.0
    %3679 = vmatpush1.msra.mxu0 0.0
    %3680 = vmatprep.subr.mxu0 0.0
    %3681 = vmatpush1.msra.mxu0 0.0
    %3682 = vmatprep.subr.mxu0 0.0
    %3683 = vmatpush1.msra.mxu0 0.0
    %3684 = vmatprep.subr.mxu0 0.0
    %3685 = vmatpush1.msra.mxu0 0.0
    %3686 = vmatprep.subr.mxu0 0.0
    %3687 = vmatpush1.msra.mxu0 0.0
    %3688 = vmatprep.subr.mxu0 0.0
    %3689 = vmatpush1.msra.mxu0 0.0
    %3690 = vmatprep.subr.mxu0 0.0
    %3691 = vmatpush1.msra.mxu0 0.0
    %3692 = vmatprep.subr.mxu0 0.0
    %3693 = vmatpush1.msra.mxu0 0.0
    %3694 = vmatprep.subr.mxu0 0.0
    %3695 = vmatpush1.msra.mxu0 0.0
    %3696 = vmatprep.subr.mxu0 0.0
    %3697 = vmatpush1.msra.mxu0 0.0
    %3698 = vmatprep.subr.mxu0 0.0
    %3699 = vmatpush1.msra.mxu0 0.0
    %3700 = vmatprep.subr.mxu0 0.0
    %3701 = vmatpush1.msra.mxu0 0.0
    %3702 = vmatprep.subr.mxu0 0.0
    %3703 = vmatpush1.msra.mxu0 0.0
    %3704 = vmatprep.subr.mxu0 0.0
    %3705 = vmatpush1.msra.mxu0 0.0
    %3706 = vmatprep.subr.mxu0 0.0
    %3707 = vmatpush1.msra.mxu0 0.0
    %3708 = vmatprep.subr.mxu0 0.0
    %3709 = vmatpush1.msra.mxu0 0.0
    %3710 = vmatprep.mubr.f32.mxu0 0.0
    %3711 = vmatmul.mubr.f32.gmra.mrb[0].mxu0 %v2186
    %v3712 = vpop.f32.mrb[0].mxu0
    %v3713 = vadd.f32 0.0, %v3712
    %v3714 = vpop.f32.mrb[0].mxu0
    %3715 = vdwg.mxu0
    %s3716 = scalar_lea.vmem %s6, 224
    %v3717 = vld [vmem:[%s3716] sm:$0xff]
    %v3718 = vld [vmem:[%s3716 + $0x8] sm:$0xff]
    %v3719 = vld [vmem:[%s3716 + $0x10] sm:$0xff]
    %v3720 = vld [vmem:[%s3716 + $0x18] sm:$0xff]
    %3721 = vmatprep.subr.mxu0 0.0
    %3722 = vmatpush1.msra.mxu0 %v3717
    %3723 = vmatprep.subr.mxu0 0.0
    %3724 = vmatpush1.msra.mxu0 %v3718
    %3725 = vmatprep.subr.mxu0 0.0
    %3726 = vmatpush1.msra.mxu0 %v3719
    %3727 = vmatprep.subr.mxu0 0.0
    %3728 = vmatpush1.msra.mxu0 %v3720
    %3729 = vmatprep.subr.mxu0 0.0
    %3730 = vmatpush1.msra.mxu0 0.0
    %3731 = vmatprep.subr.mxu0 0.0
    %3732 = vmatpush1.msra.mxu0 0.0
    %3733 = vmatprep.subr.mxu0 0.0
    %3734 = vmatpush1.msra.mxu0 0.0
    %3735 = vmatprep.subr.mxu0 0.0
    %3736 = vmatpush1.msra.mxu0 0.0
    %3737 = vmatprep.subr.mxu0 0.0
    %3738 = vmatpush1.msra.mxu0 0.0
    %3739 = vmatprep.subr.mxu0 0.0
    %3740 = vmatpush1.msra.mxu0 0.0
    %3741 = vmatprep.subr.mxu0 0.0
    %3742 = vmatpush1.msra.mxu0 0.0
    %3743 = vmatprep.subr.mxu0 0.0
    %3744 = vmatpush1.msra.mxu0 0.0
    %3745 = vmatprep.subr.mxu0 0.0
    %3746 = vmatpush1.msra.mxu0 0.0
    %3747 = vmatprep.subr.mxu0 0.0
    %3748 = vmatpush1.msra.mxu0 0.0
    %3749 = vmatprep.subr.mxu0 0.0
    %3750 = vmatpush1.msra.mxu0 0.0
    %3751 = vmatprep.subr.mxu0 0.0
    %3752 = vmatpush1.msra.mxu0 0.0
    %3753 = vmatprep.subr.mxu0 0.0
    %3754 = vmatpush1.msra.mxu0 0.0
    %3755 = vmatprep.subr.mxu0 0.0
    %3756 = vmatpush1.msra.mxu0 0.0
    %3757 = vmatprep.subr.mxu0 0.0
    %3758 = vmatpush1.msra.mxu0 0.0
    %3759 = vmatprep.subr.mxu0 0.0
    %3760 = vmatpush1.msra.mxu0 0.0
    %3761 = vmatprep.subr.mxu0 0.0
    %3762 = vmatpush1.msra.mxu0 0.0
    %3763 = vmatprep.subr.mxu0 0.0
    %3764 = vmatpush1.msra.mxu0 0.0
    %3765 = vmatprep.subr.mxu0 0.0
    %3766 = vmatpush1.msra.mxu0 0.0
    %3767 = vmatprep.subr.mxu0 0.0
    %3768 = vmatpush1.msra.mxu0 0.0
    %3769 = vmatprep.subr.mxu0 0.0
    %3770 = vmatpush1.msra.mxu0 0.0
    %3771 = vmatprep.subr.mxu0 0.0
    %3772 = vmatpush1.msra.mxu0 0.0
    %3773 = vmatprep.subr.mxu0 0.0
    %3774 = vmatpush1.msra.mxu0 0.0
    %3775 = vmatprep.subr.mxu0 0.0
    %3776 = vmatpush1.msra.mxu0 0.0
    %3777 = vmatprep.subr.mxu0 0.0
    %3778 = vmatpush1.msra.mxu0 0.0
    %3779 = vmatprep.subr.mxu0 0.0
    %3780 = vmatpush1.msra.mxu0 0.0
    %3781 = vmatprep.subr.mxu0 0.0
    %3782 = vmatpush1.msra.mxu0 0.0
    %3783 = vmatprep.subr.mxu0 0.0
    %3784 = vmatpush1.msra.mxu0 0.0
    %3785 = vmatprep.mubr.f32.mxu0 0.0
    %3786 = vmatmul.mubr.f32.gmra.mrb[0].mxu0 %v2186
    %v3787 = vpop.f32.mrb[0].mxu0
    %v3788 = vadd.f32 0.0, %v3787
    %v3789 = vpop.f32.mrb[0].mxu0
    %3790 = vdwg.mxu0
    %v3792 = vsel %vm319, %v3638, 0
    %v3795 = vsel %vm319, %v3713, 0
    %3797 = vmatprep.subr.mxu0 0.0
    %3798 = vmatpush1.xpose.msra.mxu0 %v3795
    %3799 = vmatprep.subr.mxu0 0.0
    %3800 = vmatpush1.xpose.msra.mxu0 0.0
    %3801 = vmatprep.subr.mxu0 0.0
    %3802 = vmatpush1.xpose.msra.mxu0 0.0
    %3803 = vmatprep.subr.mxu0 0.0
    %3804 = vmatpush1.xpose.msra.mxu0 0.0
    %3805 = vmatprep.subr.mxu0 0.0
    %3806 = vmatpush1.xpose.msra.mxu0 0.0
    %3807 = vmatprep.subr.mxu0 0.0
    %3808 = vmatpush1.xpose.msra.mxu0 0.0
    %3809 = vmatprep.subr.mxu0 0.0
    %3810 = vmatpush1.xpose.msra.mxu0 0.0
    %3811 = vmatprep.subr.mxu0 0.0
    %3812 = vmatpush1.xpose.msra.mxu0 0.0
    %3813 = vmatprep.subr.mxu0 0.0
    %3814 = vmatpush1.xpose.msra.mxu0 0.0
    %3815 = vmatprep.subr.mxu0 0.0
    %3816 = vmatpush1.xpose.msra.mxu0 0.0
    %3817 = vmatprep.subr.mxu0 0.0
    %3818 = vmatpush1.xpose.msra.mxu0 0.0
    %3819 = vmatprep.subr.mxu0 0.0
    %3820 = vmatpush1.xpose.msra.mxu0 0.0
    %3821 = vmatprep.subr.mxu0 0.0
    %3822 = vmatpush1.xpose.msra.mxu0 0.0
    %3823 = vmatprep.subr.mxu0 0.0
    %3824 = vmatpush1.xpose.msra.mxu0 0.0
    %3825 = vmatprep.subr.mxu0 0.0
    %3826 = vmatpush1.xpose.msra.mxu0 0.0
    %3827 = vmatprep.subr.mxu0 0.0
    %3828 = vmatpush1.xpose.msra.mxu0 0.0
    %3829 = vmatprep.subr.mxu0 0.0
    %3830 = vmatpush1.xpose.msra.mxu0 0.0
    %3831 = vmatprep.subr.mxu0 0.0
    %3832 = vmatpush1.xpose.msra.mxu0 0.0
    %3833 = vmatprep.subr.mxu0 0.0
    %3834 = vmatpush1.xpose.msra.mxu0 0.0
    %3835 = vmatprep.subr.mxu0 0.0
    %3836 = vmatpush1.xpose.msra.mxu0 0.0
    %3837 = vmatprep.subr.mxu0 0.0
    %3838 = vmatpush1.xpose.msra.mxu0 0.0
    %3839 = vmatprep.subr.mxu0 0.0
    %3840 = vmatpush1.xpose.msra.mxu0 0.0
    %3841 = vmatprep.subr.mxu0 0.0
    %3842 = vmatpush1.xpose.msra.mxu0 0.0
    %3843 = vmatprep.subr.mxu0 0.0
    %3844 = vmatpush1.xpose.msra.mxu0 0.0
    %3845 = vmatprep.subr.mxu0 0.0
    %3846 = vmatpush1.xpose.msra.mxu0 0.0
    %3847 = vmatprep.subr.mxu0 0.0
    %3848 = vmatpush1.xpose.msra.mxu0 0.0
    %3849 = vmatprep.subr.mxu0 0.0
    %3850 = vmatpush1.xpose.msra.mxu0 0.0
    %3851 = vmatprep.subr.mxu0 0.0
    %3852 = vmatpush1.xpose.msra.mxu0 0.0
    %3853 = vmatprep.subr.mxu0 0.0
    %3854 = vmatpush1.xpose.msra.mxu0 0.0
    %3855 = vmatprep.subr.mxu0 0.0
    %3856 = vmatpush1.xpose.msra.mxu0 0.0
    %3857 = vmatprep.subr.mxu0 0.0
    %3858 = vmatpush1.xpose.msra.mxu0 0.0
    %3859 = vmatprep.subr.mxu0 0.0
    %3860 = vmatpush1.xpose.msra.mxu0 0.0
    %3861 = vmatprep.mubr.f32.mxu0 0.0
    %3862 = vmatmul.mubr.f32.gmra.mrb[0].mxu0 %v3792
    %v3863 = vpop.f32.mrb[0].mxu0
    %v3864 = vadd.f32 0.0, %v3863
    %v3865 = vpop.f32.mrb[0].mxu0
    %3866 = vdwg.mxu0
    %v3867 = vadd.f32 %v3405, %v3864
    %v3868 = vsel %vm319, %v3864, -inf
    %3869 = vmax.xlane.f32.xlu0 %v3868
    %v3870 = vpop.xlane.xlu0 %3869
    %v3871 = vsub.f32 %v3864, %v3870
    %v3872 = vmul.f32 %v3871, 1.442695
    %v3873 = vpow.pop %v3872
    %v3874 = vsel %vm319, %v3873, 0.0
    %3875 = vadd.xlane.f32.xlu0 %v3874
    %v3876 = vpop.xlane.xlu0 %3875
    %v3877 = vrcp.pop %v3876
    %v3878 = vmul.f32 %v3873, %v3877
    %v3880 = vsel %vm319, %v3878, 0
    %3882 = vmatprep.subr.mxu0 0.0
    %3883 = vmatpush1.msra.mxu0 %v3788
    %3884 = vmatprep.subr.mxu0 0.0
    %3885 = vmatpush1.msra.mxu0 0.0
    %3886 = vmatprep.subr.mxu0 0.0
    %3887 = vmatpush1.msra.mxu0 0.0
    %3888 = vmatprep.subr.mxu0 0.0
    %3889 = vmatpush1.msra.mxu0 0.0
    %3890 = vmatprep.subr.mxu0 0.0
    %3891 = vmatpush1.msra.mxu0 0.0
    %3892 = vmatprep.subr.mxu0 0.0
    %3893 = vmatpush1.msra.mxu0 0.0
    %3894 = vmatprep.subr.mxu0 0.0
    %3895 = vmatpush1.msra.mxu0 0.0
    %3896 = vmatprep.subr.mxu0 0.0
    %3897 = vmatpush1.msra.mxu0 0.0
    %3898 = vmatprep.subr.mxu0 0.0
    %3899 = vmatpush1.msra.mxu0 0.0
    %3900 = vmatprep.subr.mxu0 0.0
    %3901 = vmatpush1.msra.mxu0 0.0
    %3902 = vmatprep.subr.mxu0 0.0
    %3903 = vmatpush1.msra.mxu0 0.0
    %3904 = vmatprep.subr.mxu0 0.0
    %3905 = vmatpush1.msra.mxu0 0.0
    %3906 = vmatprep.subr.mxu0 0.0
    %3907 = vmatpush1.msra.mxu0 0.0
    %3908 = vmatprep.subr.mxu0 0.0
    %3909 = vmatpush1.msra.mxu0 0.0
    %3910 = vmatprep.subr.mxu0 0.0
    %3911 = vmatpush1.msra.mxu0 0.0
    %3912 = vmatprep.subr.mxu0 0.0
    %3913 = vmatpush1.msra.mxu0 0.0
    %3914 = vmatprep.subr.mxu0 0.0
    %3915 = vmatpush1.msra.mxu0 0.0
    %3916 = vmatprep.subr.mxu0 0.0
    %3917 = vmatpush1.msra.mxu0 0.0
    %3918 = vmatprep.subr.mxu0 0.0
    %3919 = vmatpush1.msra.mxu0 0.0
    %3920 = vmatprep.subr.mxu0 0.0
    %3921 = vmatpush1.msra.mxu0 0.0
    %3922 = vmatprep.subr.mxu0 0.0
    %3923 = vmatpush1.msra.mxu0 0.0
    %3924 = vmatprep.subr.mxu0 0.0
    %3925 = vmatpush1.msra.mxu0 0.0
    %3926 = vmatprep.subr.mxu0 0.0
    %3927 = vmatpush1.msra.mxu0 0.0
    %3928 = vmatprep.subr.mxu0 0.0
    %3929 = vmatpush1.msra.mxu0 0.0
    %3930 = vmatprep.subr.mxu0 0.0
    %3931 = vmatpush1.msra.mxu0 0.0
    %3932 = vmatprep.subr.mxu0 0.0
    %3933 = vmatpush1.msra.mxu0 0.0
    %3934 = vmatprep.subr.mxu0 0.0
    %3935 = vmatpush1.msra.mxu0 0.0
    %3936 = vmatprep.subr.mxu0 0.0
    %3937 = vmatpush1.msra.mxu0 0.0
    %3938 = vmatprep.subr.mxu0 0.0
    %3939 = vmatpush1.msra.mxu0 0.0
    %3940 = vmatprep.subr.mxu0 0.0
    %3941 = vmatpush1.msra.mxu0 0.0
    %3942 = vmatprep.subr.mxu0 0.0
    %3943 = vmatpush1.msra.mxu0 0.0
    %3944 = vmatprep.subr.mxu0 0.0
    %3945 = vmatpush1.msra.mxu0 0.0
    %3946 = vmatprep.mubr.f32.mxu0 0.0
    %3947 = vmatmul.mubr.f32.gmra.mrb[0].mxu0 %v3880
    %v3948 = vpop.f32.mrb[0].mxu0
    %v3949 = vadd.f32 0.0, %v3948
    %v3950 = vpop.f32.mrb[0].mxu0
    %3951 = vdwg.mxu0
    %s3952 = scalar_lea.vmem %s7, 56
    %v3953 = vld [vmem:[%s3952] sm:$0xff]
    %v3955 = vsel %vm319, %v3949, 0
    %3957 = vmatprep.subr.mxu0 0.0
    %3958 = vmatpush1.msra.mxu0 %v3953
    %3959 = vmatprep.subr.mxu0 0.0
    %3960 = vmatpush1.msra.mxu0 0.0
    %3961 = vmatprep.subr.mxu0 0.0
    %3962 = vmatpush1.msra.mxu0 0.0
    %3963 = vmatprep.subr.mxu0 0.0
    %3964 = vmatpush1.msra.mxu0 0.0
    %3965 = vmatprep.subr.mxu0 0.0
    %3966 = vmatpush1.msra.mxu0 0.0
    %3967 = vmatprep.subr.mxu0 0.0
    %3968 = vmatpush1.msra.mxu0 0.0
    %3969 = vmatprep.subr.mxu0 0.0
    %3970 = vmatpush1.msra.mxu0 0.0
    %3971 = vmatprep.subr.mxu0 0.0
    %3972 = vmatpush1.msra.mxu0 0.0
    %3973 = vmatprep.subr.mxu0 0.0
    %3974 = vmatpush1.msra.mxu0 0.0
    %3975 = vmatprep.subr.mxu0 0.0
    %3976 = vmatpush1.msra.mxu0 0.0
    %3977 = vmatprep.subr.mxu0 0.0
    %3978 = vmatpush1.msra.mxu0 0.0
    %3979 = vmatprep.subr.mxu0 0.0
    %3980 = vmatpush1.msra.mxu0 0.0
    %3981 = vmatprep.subr.mxu0 0.0
    %3982 = vmatpush1.msra.mxu0 0.0
    %3983 = vmatprep.subr.mxu0 0.0
    %3984 = vmatpush1.msra.mxu0 0.0
    %3985 = vmatprep.subr.mxu0 0.0
    %3986 = vmatpush1.msra.mxu0 0.0
    %3987 = vmatprep.subr.mxu0 0.0
    %3988 = vmatpush1.msra.mxu0 0.0
    %3989 = vmatprep.subr.mxu0 0.0
    %3990 = vmatpush1.msra.mxu0 0.0
    %3991 = vmatprep.subr.mxu0 0.0
    %3992 = vmatpush1.msra.mxu0 0.0
    %3993 = vmatprep.subr.mxu0 0.0
    %3994 = vmatpush1.msra.mxu0 0.0
    %3995 = vmatprep.subr.mxu0 0.0
    %3996 = vmatpush1.msra.mxu0 0.0
    %3997 = vmatprep.subr.mxu0 0.0
    %3998 = vmatpush1.msra.mxu0 0.0
    %3999 = vmatprep.subr.mxu0 0.0
    %4000 = vmatpush1.msra.mxu0 0.0
    %4001 = vmatprep.subr.mxu0 0.0
    %4002 = vmatpush1.msra.mxu0 0.0
    %4003 = vmatprep.subr.mxu0 0.0
    %4004 = vmatpush1.msra.mxu0 0.0
    %4005 = vmatprep.subr.mxu0 0.0
    %4006 = vmatpush1.msra.mxu0 0.0
    %4007 = vmatprep.subr.mxu0 0.0
    %4008 = vmatpush1.msra.mxu0 0.0
    %4009 = vmatprep.subr.mxu0 0.0
    %4010 = vmatpush1.msra.mxu0 0.0
    %4011 = vmatprep.subr.mxu0 0.0
    %4012 = vmatpush1.msra.mxu0 0.0
    %4013 = vmatprep.subr.mxu0 0.0
    %4014 = vmatpush1.msra.mxu0 0.0
    %4015 = vmatprep.subr.mxu0 0.0
    %4016 = vmatpush1.msra.mxu0 0.0
    %4017 = vmatprep.subr.mxu0 0.0
    %4018 = vmatpush1.msra.mxu0 0.0
    %4019 = vmatprep.subr.mxu0 0.0
    %4020 = vmatpush1.msra.mxu0 0.0
    %4021 = vmatprep.mubr.f32.mxu0 0.0
    %4022 = vmatmul.mubr.f32.gmra.mrb[0].mxu0 %v3955
    %v4023 = vpop.f32.mrb[0].mxu0
    %v4024 = vadd.f32 0.0, %v4023
    %v4025 = vpop.f32.mrb[0].mxu0
    %4026 = vdwg.mxu0
    %v4027 = vadd.f32 %v3565, %v4024
    %v4028 = vadd.f32 %v2148, %v4027
    %s4029 = scalar_lea.vmem %s8, 1
    %v4030 = vld [vmem:[%s4029] sm:$0x1]
    %v4032 = vlaneseq
    %v4033 = vshrl.u32 %v4032, 7
    %v4034 = vsub.s32 0, %v4033
    %v4035 = vrot.slane %v4030, %v4034
    %v4037 = vadd.f32 %v4028, %v4035
    %s4038 = scalar_lea.vmem %s9, 1
    %v4039 = vld [vmem:[%s4038] sm:$0x1]
    %s4040 = scalar_lea.vmem %s10, 1
    %v4041 = vld [vmem:[%s4040] sm:$0x1]
    %v4042 = vsel %vm65, %v4037, 0.0
    %4043 = vadd.xlane.f32.xlu0 %v4042
    %v4044 = vpop.xlane.xlu0 %4043
    %v4045 = vmul.f32 %v4044, %v69
    %v4046 = vsub.f32 %v4037, %v4045
    %v4047 = vmul.f32 %v4046, %v4046
    %v4048 = vsel %vm65, %v4047, 0.0
    %4049 = vadd.xlane.f32.xlu0 %v4048
    %v4050 = vpop.xlane.xlu0 %4049
    %v4051 = vmul.f32 %v4050, %v69
    %v4052 = vadd.f32 %v4051, 1e-05
    %v4053 = vrsqrt.pop %v4052
    %v4054 = vmul.f32 %v4046, %v4053
    %v4056 = vlaneseq
    %v4057 = vshrl.u32 %v4056, 7
    %v4058 = vsub.s32 0, %v4057
    %v4059 = vrot.slane %v4039, %v4058
    %v4061 = vmul.f32 %v4054, %v4059
    %v4063 = vlaneseq
    %v4064 = vshrl.u32 %v4063, 7
    %v4065 = vsub.s32 0, %v4064
    %v4066 = vrot.slane %v4041, %v4065
    %v4068 = vadd.f32 %v4061, %v4066
    %s4069 = scalar_lea.vmem %s11, 32
    %v4070 = vld [vmem:[%s4069] sm:$0xff]
    %v4071 = vld [vmem:[%s4069 + $0x8] sm:$0xff]
    %v4072 = vld [vmem:[%s4069 + $0x10] sm:$0xff]
    %v4073 = vld [vmem:[%s4069 + $0x18] sm:$0xff]
    %s4074 = scalar_lea.vmem %s12, 1
    %v4075 = vld [vmem:[%s4074] sm:$0x1]
    %v4077 = vlaneseq
    %v4078 = vshrl.u32 %v4077, 7
    %v4079 = vsub.s32 0, %v4078
    %v4080 = vrot.slane %v4075, %v4079
    %v4083 = vsel %vm65, %v4068, 0
    %4085 = vmatprep.subr.mxu0 0.0
    %4086 = vmatpush1.msra.mxu0 %v4070
    %4087 = vmatprep.subr.mxu0 0.0
    %4088 = vmatpush1.msra.mxu0 %v4071
    %4089 = vmatprep.subr.mxu0 0.0
    %4090 = vmatpush1.msra.mxu0 %v4072
    %4091 = vmatprep.subr.mxu0 0.0
    %4092 = vmatpush1.msra.mxu0 %v4073
    %4093 = vmatprep.subr.mxu0 0.0
    %4094 = vmatpush1.msra.mxu0 0.0
    %4095 = vmatprep.subr.mxu0 0.0
    %4096 = vmatpush1.msra.mxu0 0.0
    %4097 = vmatprep.subr.mxu0 0.0
    %4098 = vmatpush1.msra.mxu0 0.0
    %4099 = vmatprep.subr.mxu0 0.0
    %4100 = vmatpush1.msra.mxu0 0.0
    %4101 = vmatprep.subr.mxu0 0.0
    %4102 = vmatpush1.msra.mxu0 0.0
    %4103 = vmatprep.subr.mxu0 0.0
    %4104 = vmatpush1.msra.mxu0 0.0
    %4105 = vmatprep.subr.mxu0 0.0
    %4106 = vmatpush1.msra.mxu0 0.0
    %4107 = vmatprep.subr.mxu0 0.0
    %4108 = vmatpush1.msra.mxu0 0.0
    %4109 = vmatprep.subr.mxu0 0.0
    %4110 = vmatpush1.msra.mxu0 0.0
    %4111 = vmatprep.subr.mxu0 0.0
    %4112 = vmatpush1.msra.mxu0 0.0
    %4113 = vmatprep.subr.mxu0 0.0
    %4114 = vmatpush1.msra.mxu0 0.0
    %4115 = vmatprep.subr.mxu0 0.0
    %4116 = vmatpush1.msra.mxu0 0.0
    %4117 = vmatprep.subr.mxu0 0.0
    %4118 = vmatpush1.msra.mxu0 0.0
    %4119 = vmatprep.subr.mxu0 0.0
    %4120 = vmatpush1.msra.mxu0 0.0
    %4121 = vmatprep.subr.mxu0 0.0
    %4122 = vmatpush1.msra.mxu0 0.0
    %4123 = vmatprep.subr.mxu0 0.0
    %4124 = vmatpush1.msra.mxu0 0.0
    %4125 = vmatprep.subr.mxu0 0.0
    %4126 = vmatpush1.msra.mxu0 0.0
    %4127 = vmatprep.subr.mxu0 0.0
    %4128 = vmatpush1.msra.mxu0 0.0
    %4129 = vmatprep.subr.mxu0 0.0
    %4130 = vmatpush1.msra.mxu0 0.0
    %4131 = vmatprep.subr.mxu0 0.0
    %4132 = vmatpush1.msra.mxu0 0.0
    %4133 = vmatprep.subr.mxu0 0.0
    %4134 = vmatpush1.msra.mxu0 0.0
    %4135 = vmatprep.subr.mxu0 0.0
    %4136 = vmatpush1.msra.mxu0 0.0
    %4137 = vmatprep.subr.mxu0 0.0
    %4138 = vmatpush1.msra.mxu0 0.0
    %4139 = vmatprep.subr.mxu0 0.0
    %4140 = vmatpush1.msra.mxu0 0.0
    %4141 = vmatprep.subr.mxu0 0.0
    %4142 = vmatpush1.msra.mxu0 0.0
    %4143 = vmatprep.subr.mxu0 0.0
    %4144 = vmatpush1.msra.mxu0 0.0
    %4145 = vmatprep.subr.mxu0 0.0
    %4146 = vmatpush1.msra.mxu0 0.0
    %4147 = vmatprep.subr.mxu0 0.0
    %4148 = vmatpush1.msra.mxu0 0.0
    %4149 = vmatprep.mubr.f32.mxu0 0.0
    %4150 = vmatmul.mubr.f32.gmra.mrb[0].mxu0 %v4083
    %v4151 = vpop.f32.mrb[0].mxu0
    %v4152 = vadd.f32 %v4080, %v4151
    %v4153 = vpop.f32.mrb[0].mxu0
    %4154 = vdwg.mxu0
    %v4155 = vmax.f32 %v4152, 0.0
    %s4156 = scalar_lea.vmem %s13, 64
    %v4157 = vld [vmem:[%s4156] sm:$0xff]
    %v4158 = vld [vmem:[%s4156 + $0x8] sm:$0xff]
    %v4159 = vld [vmem:[%s4156 + $0x10] sm:$0xff]
    %v4160 = vld [vmem:[%s4156 + $0x18] sm:$0xff]
    %v4161 = vld [vmem:[%s4156 + $0x20] sm:$0xff]
    %v4162 = vld [vmem:[%s4156 + $0x28] sm:$0xff]
    %v4163 = vld [vmem:[%s4156 + $0x30] sm:$0xff]
    %v4164 = vld [vmem:[%s4156 + $0x38] sm:$0xff]
    %s4165 = scalar_lea.vmem %s14, 1
    %v4166 = vld [vmem:[%s4165] sm:$0x1]
    %v4168 = vlaneseq
    %v4169 = vshrl.u32 %v4168, 7
    %v4170 = vsub.s32 0, %v4169
    %v4171 = vrot.slane %v4166, %v4170
    %v4174 = vsel %vm2074, %v4155, 0
    %4176 = vmatprep.subr.mxu0 0.0
    %4177 = vmatpush1.msra.mxu0 %v4157
    %4178 = vmatprep.subr.mxu0 0.0
    %4179 = vmatpush1.msra.mxu0 %v4158
    %4180 = vmatprep.subr.mxu0 0.0
    %4181 = vmatpush1.msra.mxu0 %v4159
    %4182 = vmatprep.subr.mxu0 0.0
    %4183 = vmatpush1.msra.mxu0 %v4160
    %4184 = vmatprep.subr.mxu0 0.0
    %4185 = vmatpush1.msra.mxu0 %v4161
    %4186 = vmatprep.subr.mxu0 0.0
    %4187 = vmatpush1.msra.mxu0 %v4162
    %4188 = vmatprep.subr.mxu0 0.0
    %4189 = vmatpush1.msra.mxu0 %v4163
    %4190 = vmatprep.subr.mxu0 0.0
    %4191 = vmatpush1.msra.mxu0 %v4164
    %4192 = vmatprep.subr.mxu0 0.0
    %4193 = vmatpush1.msra.mxu0 0.0
    %4194 = vmatprep.subr.mxu0 0.0
    %4195 = vmatpush1.msra.mxu0 0.0
    %4196 = vmatprep.subr.mxu0 0.0
    %4197 = vmatpush1.msra.mxu0 0.0
    %4198 = vmatprep.subr.mxu0 0.0
    %4199 = vmatpush1.msra.mxu0 0.0
    %4200 = vmatprep.subr.mxu0 0.0
    %4201 = vmatpush1.msra.mxu0 0.0
    %4202 = vmatprep.subr.mxu0 0.0
    %4203 = vmatpush1.msra.mxu0 0.0
    %4204 = vmatprep.subr.mxu0 0.0
    %4205 = vmatpush1.msra.mxu0 0.0
    %4206 = vmatprep.subr.mxu0 0.0
    %4207 = vmatpush1.msra.mxu0 0.0
    %4208 = vmatprep.subr.mxu0 0.0
    %4209 = vmatpush1.msra.mxu0 0.0
    %4210 = vmatprep.subr.mxu0 0.0
    %4211 = vmatpush1.msra.mxu0 0.0
    %4212 = vmatprep.subr.mxu0 0.0
    %4213 = vmatpush1.msra.mxu0 0.0
    %4214 = vmatprep.subr.mxu0 0.0
    %4215 = vmatpush1.msra.mxu0 0.0
    %4216 = vmatprep.subr.mxu0 0.0
    %4217 = vmatpush1.msra.mxu0 0.0
    %4218 = vmatprep.subr.mxu0 0.0
    %4219 = vmatpush1.msra.mxu0 0.0
    %4220 = vmatprep.subr.mxu0 0.0
    %4221 = vmatpush1.msra.mxu0 0.0
    %4222 = vmatprep.subr.mxu0 0.0
    %4223 = vmatpush1.msra.mxu0 0.0
    %4224 = vmatprep.subr.mxu0 0.0
    %4225 = vmatpush1.msra.mxu0 0.0
    %4226 = vmatprep.subr.mxu0 0.0
    %4227 = vmatpush1.msra.mxu0 0.0
    %4228 = vmatprep.subr.mxu0 0.0
    %4229 = vmatpush1.msra.mxu0 0.0
    %4230 = vmatprep.subr.mxu0 0.0
    %4231 = vmatpush1.msra.mxu0 0.0
    %4232 = vmatprep.subr.mxu0 0.0
    %4233 = vmatpush1.msra.mxu0 0.0
    %4234 = vmatprep.subr.mxu0 0.0
    %4235 = vmatpush1.msra.mxu0 0.0
    %4236 = vmatprep.subr.mxu0 0.0
    %4237 = vmatpush1.msra.mxu0 0.0
    %4238 = vmatprep.subr.mxu0 0.0
    %4239 = vmatpush1.msra.mxu0 0.0
    %4240 = vmatprep.mubr.f32.mxu0 0.0
    %4241 = vmatmul.mubr.f32.gmra.mrb[0].mxu0 %v4174
    %v4242 = vpop.f32.mrb[0].mxu0
    %v4243 = vadd.f32 %v4171, %v4242
    %v4244 = vpop.f32.mrb[0].mxu0
    %4245 = vdwg.mxu0
    %v4246 = vadd.f32 %v4037, %v4243
    %v4247 = vld [vmem:[%s15] sm:$0x1]
    %v4248 = vld [vmem:[%s16] sm:$0x1]
    %v4249 = vsel %vm65, %v4246, 0.0
    %4250 = vadd.xlane.f32.xlu0 %v4249
    %v4251 = vpop.xlane.xlu0 %4250
    %v4252 = vmul.f32 %v4251, %v69
    %v4253 = vsub.f32 %v4246, %v4252
    %v4254 = vmul.f32 %v4253, %v4253
    %v4255 = vsel %vm65, %v4254, 0.0
    %4256 = vadd.xlane.f32.xlu0 %v4255
    %v4257 = vpop.xlane.xlu0 %4256
    %v4258 = vmul.f32 %v4257, %v69
    %v4259 = vadd.f32 %v4258, 1e-05
    %v4260 = vrsqrt.pop %v4259
    %v4261 = vmul.f32 %v4253, %v4260
    %v4263 = vlaneseq
    %v4264 = vshrl.u32 %v4263, 7
    %v4265 = vsub.s32 0, %v4264
    %v4266 = vrot.slane %v4247, %v4265
    %v4268 = vmul.f32 %v4261, %v4266
    %v4270 = vlaneseq
    %v4271 = vshrl.u32 %v4270, 7
    %v4272 = vsub.s32 0, %v4271
    %v4273 = vrot.slane %v4248, %v4272
    %v4275 = vadd.f32 %v4268, %v4273
    %v4276 = vld [vmem:[%s17] sm:$0xff]
    %v4277 = vld [vmem:[%s17 + $0x8] sm:$0xff]
    %v4278 = vld [vmem:[%s17 + $0x10] sm:$0xff]
    %v4279 = vld [vmem:[%s17 + $0x18] sm:$0xff]
    %v4281 = vsel %vm65, %v4275, 0
    %4283 = vmatprep.subr.mxu0 0.0
    %4284 = vmatpush1.msra.mxu0 %v4276
    %4285 = vmatprep.subr.mxu0 0.0
    %4286 = vmatpush1.msra.mxu0 %v4277
    %4287 = vmatprep.subr.mxu0 0.0
    %4288 = vmatpush1.msra.mxu0 %v4278
    %4289 = vmatprep.subr.mxu0 0.0
    %4290 = vmatpush1.msra.mxu0 %v4279
    %4291 = vmatprep.subr.mxu0 0.0
    %4292 = vmatpush1.msra.mxu0 0.0
    %4293 = vmatprep.subr.mxu0 0.0
    %4294 = vmatpush1.msra.mxu0 0.0
    %4295 = vmatprep.subr.mxu0 0.0
    %4296 = vmatpush1.msra.mxu0 0.0
    %4297 = vmatprep.subr.mxu0 0.0
    %4298 = vmatpush1.msra.mxu0 0.0
    %4299 = vmatprep.subr.mxu0 0.0
    %4300 = vmatpush1.msra.mxu0 0.0
    %4301 = vmatprep.subr.mxu0 0.0
    %4302 = vmatpush1.msra.mxu0 0.0
    %4303 = vmatprep.subr.mxu0 0.0
    %4304 = vmatpush1.msra.mxu0 0.0
    %4305 = vmatprep.subr.mxu0 0.0
    %4306 = vmatpush1.msra.mxu0 0.0
    %4307 = vmatprep.subr.mxu0 0.0
    %4308 = vmatpush1.msra.mxu0 0.0
    %4309 = vmatprep.subr.mxu0 0.0
    %4310 = vmatpush1.msra.mxu0 0.0
    %4311 = vmatprep.subr.mxu0 0.0
    %4312 = vmatpush1.msra.mxu0 0.0
    %4313 = vmatprep.subr.mxu0 0.0
    %4314 = vmatpush1.msra.mxu0 0.0
    %4315 = vmatprep.subr.mxu0 0.0
    %4316 = vmatpush1.msra.mxu0 0.0
    %4317 = vmatprep.subr.mxu0 0.0
    %4318 = vmatpush1.msra.mxu0 0.0
    %4319 = vmatprep.subr.mxu0 0.0
    %4320 = vmatpush1.msra.mxu0 0.0
    %4321 = vmatprep.subr.mxu0 0.0
    %4322 = vmatpush1.msra.mxu0 0.0
    %4323 = vmatprep.subr.mxu0 0.0
    %4324 = vmatpush1.msra.mxu0 0.0
    %4325 = vmatprep.subr.mxu0 0.0
    %4326 = vmatpush1.msra.mxu0 0.0
    %4327 = vmatprep.subr.mxu0 0.0
    %4328 = vmatpush1.msra.mxu0 0.0
    %4329 = vmatprep.subr.mxu0 0.0
    %4330 = vmatpush1.msra.mxu0 0.0
    %4331 = vmatprep.subr.mxu0 0.0
    %4332 = vmatpush1.msra.mxu0 0.0
    %4333 = vmatprep.subr.mxu0 0.0
    %4334 = vmatpush1.msra.mxu0 0.0
    %4335 = vmatprep.subr.mxu0 0.0
    %4336 = vmatpush1.msra.mxu0 0.0
    %4337 = vmatprep.subr.mxu0 0.0
    %4338 = vmatpush1.msra.mxu0 0.0
    %4339 = vmatprep.subr.mxu0 0.0
    %4340 = vmatpush1.msra.mxu0 0.0
    %4341 = vmatprep.subr.mxu0 0.0
    %4342 = vmatpush1.msra.mxu0 0.0
    %4343 = vmatprep.subr.mxu0 0.0
    %4344 = vmatpush1.msra.mxu0 0.0
    %4345 = vmatprep.subr.mxu0 0.0
    %4346 = vmatpush1.msra.mxu0 0.0
    %4347 = vmatprep.mubr.f32.mxu0 0.0
    %4348 = vmatmul.mubr.f32.gmra.mrb[0].mxu0 %v4281
    %v4349 = vpop.f32.mrb[0].mxu0
    %v4350 = vadd.f32 0.0, %v4349
    %v4351 = vpop.f32.mrb[0].mxu0
    %4352 = vdwg.mxu0
    %4353 = vst [vmem:[#allocation2] sm:$0xff] 0.0
    %4354 = vst [vmem:[#allocation2] sm:$0x1] %v4350
    %vm4355 = vcmask 58369
    %4356 = vst.msk [vmem:[#allocation2] sm:$0x2] %vm4355, %v3867
    // Predicated region
    $region74: #{tpu_custom_call.1} parent=1 // pred_check
      _
    $region75: #{tpu_custom_call.1} parent=1 // pred_check_branch
      %4358 = sbr.rel (0) target = $region77
    $region76: #{tpu_custom_call.1} parent=1 // pred_region
      %s4360 = ssub.s32 128, 128
      %4361 = vsyncadd [#allocation3], %s4360
      %s4363 = sshll.u32 [#allocation2], 4
      %s4364 = int_to_ptr.vmem [resolvable:$true] %s4363
      %4366 = dma.vmem_to_hbm [thread:$0]  %s4364, 128, %s18, [#allocation3]
    $region77: #{tpu_custom_call.1} parent=1 // pred_fallthru
      _
    // Predicated region
    $region78: #{tpu_custom_call.1} parent=1 // pred_check
      _
    $region79: #{tpu_custom_call.1} parent=1 // pred_check_branch
      %4368 = sbr.rel (0) target = $region81
    $region80: #{tpu_custom_call.1} parent=1 // pred_region
      %4369 = dma.done [#allocation3], 128
    $region81: #{tpu_custom_call.1} parent=1 // pred_fallthru
      _
    %4370 = vsyncpa [#allocation3], 1

</llo_original>
